<compile_context>
chip_gen: v7x
topology: tpu7x:2x2x1
jax: 0.10.0
libtpu: 0.0.40
codegen_flags: <defaults>
</compile_context>

<pallas_src>
import functools

import jax
import jax.numpy as jnp
from jax.experimental import pallas as pl
from jax.experimental.pallas import tpu as pltpu

LN_EPS = 1e-5  # torch.nn.LayerNorm default


def _layer_norm(x, gamma, beta):
    # x: (tm, F) f32; gamma/beta: (1, F) f32
    mean = jnp.mean(x, axis=-1, keepdims=True)
    xc = x - mean
    var = jnp.mean(xc * xc, axis=-1, keepdims=True)
    inv = jax.lax.rsqrt(var + LN_EPS)
    return xc * inv * gamma + beta


def _gelu_exact(x):
    # nn.GELU() default = exact erf formulation (kept to match PyTorch numerics).
    return 0.5 * x * (1.0 + jax.lax.erf(x * (1.0 / jnp.sqrt(2.0))))


def _make_glu_kernel(middle_dim):
    """Kernel over grid (row_tile i, H_panel p); panel axis is the reduction."""

    def kernel(z_ref, w01_ref, w2_ref, g0_ref, b0_ref, g1_ref, gw2_ref, bw2_ref,
               o_ref, zln_ref, acc_ref, sum_ref, ssq_ref):
        p = pl.program_id(1)
        n_p = pl.num_programs(1)

        # Per-row-tile init: LN0 once (stored in matmul dtype), zero accumulators.
        @pl.when(p == 0)
        def _():
            g0 = g0_ref[...].astype(jnp.float32)
            b0 = b0_ref[...].astype(jnp.float32)
            zn = _layer_norm(z_ref[...].astype(jnp.float32), g0, b0)
            zln_ref[...] = zn.astype(zln_ref.dtype)
            acc_ref[...] = jnp.zeros_like(acc_ref)
            sum_ref[...] = jnp.zeros_like(sum_ref)
            ssq_ref[...] = jnp.zeros_like(ssq_ref)

        hp = w01_ref.shape[1] // 2          # static panel width

        # Fused fc0/fc1: one MXU pass over the shared LHS per panel.
        z_lo = zln_ref[...]                                        # bf16 (tm, D)
        wv = jnp.dot(z_lo, w01_ref[...],
                     preferred_element_type=jnp.float32)           # (tm, 2*hp) f32
        w = wv[:, :hp]                                             # lane-aligned slice
        v = wv[:, hp:]
        h = _gelu_exact(w) * v                                     # f32 (tm, hp)

        # LN1 statistics, accumulated across panels.
        sum_ref[...] += jnp.sum(h, axis=-1, keepdims=True)
        ssq_ref[...] += jnp.sum(h * h, axis=-1, keepdims=True)

        # Panel-wise fc2 with gamma1 folded in; f32 accumulation.
        hg = (h * g1_ref[...].astype(jnp.float32)).astype(w2_ref.dtype)
        acc_ref[...] += jnp.dot(hg, w2_ref[...],
                                preferred_element_type=jnp.float32)

        # Finalize: apply the (mean, inv) part of LN1 as a post-matmul rescale.
        @pl.when(p == n_p - 1)
        def _():
            inv_h = jnp.float32(1.0 / middle_dim)
            mean = sum_ref[...] * inv_h
            var = jnp.maximum(ssq_ref[...] * inv_h - mean * mean, 0.0)
            inv = jax.lax.rsqrt(var + LN_EPS)
            out = inv * (acc_ref[...] - mean * gw2_ref[...]) + bw2_ref[...]
            o_ref[...] = out.astype(o_ref.dtype)

    return kernel


def _round_up(x, m):
    return (x + m - 1) // m * m


def _vmem_capacity_bytes():
    try:
        return int(pltpu.get_tpu_info().vmem_capacity_bytes)
    except Exception:
        return 64 * 2 ** 20  # conservative: v7x per-TC VMEM


def _vmem_estimate(D, hp, tm, w_isz, a_isz):
    """Honest estimate: everything pipelined by BlockSpec is counted 2x."""
    wpanel = 2 * (D * 2 * hp + hp * D + hp) * w_isz          # W0|W1 + W2 + gamma1 panels
    io = 2 * tm * D * a_isz * 2                              # z tile + out tile
    const = 2 * 4 * max(D, 128) * 4                          # g0/b0/gW2/bW2 vectors
    scratch = tm * D * w_isz + tm * D * 4 + 2 * tm * 128 * 4  # zln + acc + stats (lane-padded)
    mid = tm * 2 * hp * 4 + 2 * tm * hp * 4 + tm * hp * w_isz  # wv, h, h*h, hg live values
    return wpanel + io + const + scratch + mid


def _pick_hp(D, H, tm, w_isz, a_isz, cap):
    budget = int(cap * 0.55)
    cands = sorted({c for c in (H, 8192, 4096, 2048, 1024, 512, 256, 128)
                    if c <= H and H % c == 0 and c % 128 == 0}, reverse=True)
    for hp in cands:
        if _vmem_estimate(D, hp, tm, w_isz, a_isz) <= budget:
            return hp
    return cands[-1]


@functools.partial(jax.jit, static_argnames=("tm", "hp"))
def glu_forward(z, w0, w1, w2, g0, b0, g1, b1, *, tm=256, hp=None):
    """z: (B, S, D). Weights pre-transposed: w0/w1: (D, H), w2: (H, D) (bf16).

    tm: token-row tile (multiple of 8; 256 default, 512 is fine on v5e/v6e when
    the f32 (tm, hp) intermediates fit the budget).  hp: H panel width
    (multiple of 128 dividing H); auto-picked from VMEM capacity when None.
    """
    B, S, D = z.shape
    H = w0.shape[1]
    if H % 128 != 0:
        raise ValueError("middle_dim must be a multiple of 128")
    if D % 8 != 0:
        raise ValueError("input_dim must be a multiple of 8")

    M = B * S
    z2 = z.reshape(M, D)

    # Avoid a mostly-dead padded tile for short sequences.
    if M <= tm:
        tm = max(8, _round_up(M, 8))

    cap = _vmem_capacity_bytes()
    w_isz = w0.dtype.itemsize
    a_isz = z.dtype.itemsize
    if hp is None:
        hp = _pick_hp(D, H, tm, w_isz, a_isz, cap)
    if H % hp != 0 or hp % 128 != 0:
        raise ValueError("hp must divide middle_dim and be a multiple of 128")
    n_panels = H // hp

    n_tiles = pl.cdiv(M, tm)
    Mp = n_tiles * tm
    if Mp != M:
        z2 = jnp.pad(z2, ((0, Mp - M), (0, 0)))

    # Fused fc0/fc1 weight, panel-interleaved along the output axis so the
    # (D, 2*hp) block at panel p holds [W0[:, p*hp:(p+1)*hp] | W1[:, p*hp:(p+1)*hp]].
    w01 = jnp.concatenate(
        [w0.reshape(D, n_panels, hp), w1.reshape(D, n_panels, hp)], axis=2
    ).reshape(D, 2 * H)

    # LN1 folding constants (f32, (1, D)): gamma1 @ W2 and beta1 @ W2.
    w2f = w2.astype(jnp.float32)
    gw2 = (g1.astype(jnp.float32) @ w2f).reshape(1, D)
    bw2 = (b1.astype(jnp.float32) @ w2f).reshape(1, D)

    est = _vmem_estimate(D, hp, tm, w_isz, a_isz)
    vmem_limit = int(min(cap * 7 // 8, max(32 * 2 ** 20, int(1.5 * est))))

    kernel = _make_glu_kernel(H)

    out = pl.pallas_call(
        kernel,
        out_shape=jax.ShapeDtypeStruct((Mp, D), z.dtype),
        grid_spec=pltpu.PrefetchScalarGridSpec(
            num_scalar_prefetch=0,
            grid=(n_tiles, n_panels),
            in_specs=[
                pl.BlockSpec((tm, D), lambda i, p: (i, 0)),        # z row tile
                pl.BlockSpec((D, 2 * hp), lambda i, p: (0, p)),    # fused W0|W1 panel
                pl.BlockSpec((hp, D), lambda i, p: (p, 0)),        # W2 panel
                pl.BlockSpec((1, D), lambda i, p: (0, 0)),         # ln0 gamma
                pl.BlockSpec((1, D), lambda i, p: (0, 0)),         # ln0 beta
                pl.BlockSpec((1, hp), lambda i, p: (0, p)),        # ln1 gamma panel
                pl.BlockSpec((1, D), lambda i, p: (0, 0)),         # gamma1 @ W2
                pl.BlockSpec((1, D), lambda i, p: (0, 0)),         # beta1 @ W2
            ],
            out_specs=pl.BlockSpec((tm, D), lambda i, p: (i, 0)),
            scratch_shapes=[
                pltpu.VMEM((tm, D), w0.dtype),      # LN0(z) in matmul dtype
                pltpu.VMEM((tm, D), jnp.float32),   # fc2 accumulator
                pltpu.VMEM((tm, 1), jnp.float32),   # sum(h)
                pltpu.VMEM((tm, 1), jnp.float32),   # sum(h^2)
            ],
        ),
        compiler_params=pltpu.CompilerParams(
            dimension_semantics=("parallel", "arbitrary"),
            vmem_limit_bytes=vmem_limit),
    )(z2, w01, w2, g0, b0, g1, gw2, bw2)

    return out[:M].reshape(B, S, D)


def glu_reference(z, w0, w1, w2, g0, b0, g1, b1):
    """Pure-JAX f32 reference (weights given in f32)."""
    def ln(x, g, b):
        m = jnp.mean(x, axis=-1, keepdims=True)
        v = jnp.mean((x - m) ** 2, axis=-1, keepdims=True)
        return (x - m) / jnp.sqrt(v + LN_EPS) * g + b
    zf = z.astype(jnp.float32)
    zf = ln(zf, g0[0], b0[0])
    w = zf @ w0
    w = 0.5 * w * (1.0 + jax.lax.erf(w / jnp.sqrt(2.0)))
    v = zf @ w1
    h = ln(w * v, g1[0], b1[0])
    return (h @ w2).astype(z.dtype)


if __name__ == "__main__":
    # Small but lane-aligned shapes (D, H multiples of 128); 400 tokens so the
    # row grid has >1 step and exercises the padded remainder (400 % 256 != 0).
    B, S = 2, 200          # 400 tokens
    D, H = 128, 512        # input_dim, middle_dim

    key = jax.random.PRNGKey(0)
    k = jax.random.split(key, 8)
    z = jax.random.normal(k[0], (B, S, D), dtype=jnp.float32)

    # Weights stored pre-transposed (in, out) and in bf16 for the MXU.
    w0 = (jax.random.normal(k[1], (D, H), dtype=jnp.float32) * 0.05).astype(jnp.bfloat16)
    w1 = (jax.random.normal(k[2], (D, H), dtype=jnp.float32) * 0.05).astype(jnp.bfloat16)
    w2 = (jax.random.normal(k[3], (H, D), dtype=jnp.float32) * 0.05).astype(jnp.bfloat16)
    # LayerNorm affine params (perturbed from ones/zeros so the affine path is exercised).
    g0 = (1.0 + 0.1 * jax.random.normal(k[4], (1, D))).astype(jnp.float32)
    b0 = (0.1 * jax.random.normal(k[5], (1, D))).astype(jnp.float32)
    g1 = (1.0 + 0.1 * jax.random.normal(k[6], (1, H))).astype(jnp.float32)
    b1 = (0.1 * jax.random.normal(k[7], (1, H))).astype(jnp.float32)

    # Reference uses the same (bf16-quantized) weights upcast to f32.
    ref = glu_reference(z,
                        w0.astype(jnp.float32), w1.astype(jnp.float32),
                        w2.astype(jnp.float32), g0, b0, g1, b1)

    # 1) Forced multi-panel streaming (hp=256 -> 2 H panels, exercises the
    #    cross-panel LN1 accumulation + fc2 accumulator path).
    out_stream = jax.block_until_ready(
        glu_forward(z, w0, w1, w2, g0, b0, g1, b1, hp=256))
    assert out_stream.shape == z.shape
    err_s = float(jnp.max(jnp.abs(out_stream - ref)))
    assert jnp.allclose(out_stream, ref, atol=3e-2, rtol=3e-2), err_s

    # 2) Auto panel selection (single panel at these small shapes).
    out_auto = jax.block_until_ready(
        glu_forward(z, w0, w1, w2, g0, b0, g1, b1))
    err_a = float(jnp.max(jnp.abs(out_auto - ref)))
    assert jnp.allclose(out_auto, ref, atol=3e-2, rtol=3e-2), err_a

    print("KERNEL_OK")
</pallas_src>

<mosaic_0001>
module attributes {stable_mosaic.version = 11 : i64} {
  func.func @kernel(%arg0: i32, %arg1: i32, %arg2: memref<256x128xf32, #tpu.memory_space<vmem>>, %arg3: memref<128x512xbf16, #tpu.memory_space<vmem>>, %arg4: memref<256x128xbf16, #tpu.memory_space<vmem>>, %arg5: memref<1x128xf32, #tpu.memory_space<vmem>>, %arg6: memref<1x128xf32, #tpu.memory_space<vmem>>, %arg7: memref<1x256xf32, #tpu.memory_space<vmem>>, %arg8: memref<1x128xf32, #tpu.memory_space<vmem>>, %arg9: memref<1x128xf32, #tpu.memory_space<vmem>>, %arg10: memref<256x128xf32, #tpu.memory_space<vmem>>, %arg11: memref<256x128xbf16, #tpu.memory_space<vmem>>, %arg12: memref<256x128xf32, #tpu.memory_space<vmem>>, %arg13: memref<256x1xf32, #tpu.memory_space<vmem>>, %arg14: memref<256x1xf32, #tpu.memory_space<vmem>>) attributes {dimension_semantics = [#tpu.dimension_semantics<parallel>, #tpu.dimension_semantics<arbitrary>], iteration_bounds = array<i64: 2, 2>, scalar_prefetch = 0 : i64, scratch_operands = 4 : i64, tpu.core_type = #tpu.core_type<tc>, window_params = [{transform_indices = @transform_0, window_bounds = array<i64: 256, 128>}, {transform_indices = @transform_1, window_bounds = array<i64: 128, 512>}, {transform_indices = @transform_2, window_bounds = array<i64: 256, 128>}, {pipeline_mode = #tpu.pipeline_mode<synchronous>, transform_indices = @transform_3, window_bounds = array<i64: 1, 128>}, {pipeline_mode = #tpu.pipeline_mode<synchronous>, transform_indices = @transform_4, window_bounds = array<i64: 1, 128>}, {transform_indices = @transform_5, window_bounds = array<i64: 1, 256>}, {pipeline_mode = #tpu.pipeline_mode<synchronous>, transform_indices = @transform_6, window_bounds = array<i64: 1, 128>}, {pipeline_mode = #tpu.pipeline_mode<synchronous>, transform_indices = @transform_7, window_bounds = array<i64: 1, 128>}, {transform_indices = @transform_8, window_bounds = array<i64: 256, 128>}]} {
    %c0_i32 = arith.constant 0 : i32
    %0 = arith.cmpi eq, %arg1, %c0_i32 : i32
    %1 = arith.extui %0 : i1 to i32
    %c0_i32_0 = arith.constant 0 : i32
    %2 = arith.cmpi ne, %1, %c0_i32_0 : i32
    scf.if %2 {
      %c0_28 = arith.constant 0 : index
      %c0_29 = arith.constant 0 : index
      %42 = vector.load %arg5[%c0_28, %c0_29] : memref<1x128xf32, #tpu.memory_space<vmem>>, vector<1x128xf32>
      %c0_30 = arith.constant 0 : index
      %c0_31 = arith.constant 0 : index
      %43 = vector.load %arg6[%c0_30, %c0_31] : memref<1x128xf32, #tpu.memory_space<vmem>>, vector<1x128xf32>
      %c0_32 = arith.constant 0 : index
      %c0_33 = arith.constant 0 : index
      %44 = vector.load %arg2[%c0_32, %c0_33] : memref<256x128xf32, #tpu.memory_space<vmem>>, vector<256x128xf32>
      %cst_34 = arith.constant dense<0.000000e+00> : vector<256xf32>
      %45 = vector.multi_reduction <add>, %44, %cst_34 [1] : vector<256x128xf32> to vector<256xf32>
      %46 = vector.shape_cast %45 : vector<256xf32> to vector<256x1xf32>
      %cst_35 = arith.constant 1.280000e+02 : f32
      %47 = vector.broadcast %cst_35 : f32 to vector<256x1xf32>
      %48 = arith.divf %46, %47 : vector<256x1xf32>
      %49 = vector.broadcast %48 : vector<256x1xf32> to vector<256x128xf32>
      %50 = arith.subf %44, %49 : vector<256x128xf32>
      %51 = arith.mulf %50, %50 : vector<256x128xf32>
      %cst_36 = arith.constant dense<0.000000e+00> : vector<256xf32>
      %52 = vector.multi_reduction <add>, %51, %cst_36 [1] : vector<256x128xf32> to vector<256xf32>
      %53 = vector.shape_cast %52 : vector<256xf32> to vector<256x1xf32>
      %cst_37 = arith.constant 1.280000e+02 : f32
      %54 = vector.broadcast %cst_37 : f32 to vector<256x1xf32>
      %55 = arith.divf %53, %54 : vector<256x1xf32>
      %cst_38 = arith.constant 9.99999974E-6 : f32
      %56 = vector.broadcast %cst_38 : f32 to vector<256x1xf32>
      %57 = arith.addf %55, %56 : vector<256x1xf32>
      %58 = math.rsqrt %57 : vector<256x1xf32>
      %59 = vector.broadcast %58 : vector<256x1xf32> to vector<256x128xf32>
      %60 = arith.mulf %50, %59 : vector<256x128xf32>
      %61 = vector.broadcast %42 : vector<1x128xf32> to vector<256x128xf32>
      %62 = arith.mulf %60, %61 : vector<256x128xf32>
      %63 = vector.broadcast %43 : vector<1x128xf32> to vector<256x128xf32>
      %64 = arith.addf %62, %63 : vector<256x128xf32>
      %65 = arith.truncf %64 : vector<256x128xf32> to vector<256x128xbf16>
      %c0_39 = arith.constant 0 : index
      %c0_40 = arith.constant 0 : index
      %66 = vector.load %arg11[%c0_39, %c0_40] : memref<256x128xbf16, #tpu.memory_space<vmem>>, vector<256x128xbf16>
      tpu.vector_store %arg11[%c0_39, %c0_40], %65 {strides = array<i32>} : memref<256x128xbf16, #tpu.memory_space<vmem>>, vector<256x128xbf16>,
      %cst_41 = arith.constant 0.000000e+00 : f32
      %67 = vector.broadcast %cst_41 : f32 to vector<256x128xf32>
      %c0_42 = arith.constant 0 : index
      %c0_43 = arith.constant 0 : index
      %68 = vector.load %arg12[%c0_42, %c0_43] : memref<256x128xf32, #tpu.memory_space<vmem>>, vector<256x128xf32>
      tpu.vector_store %arg12[%c0_42, %c0_43], %67 {strides = array<i32>} : memref<256x128xf32, #tpu.memory_space<vmem>>, vector<256x128xf32>,
      %cst_44 = arith.constant 0.000000e+00 : f32
      %69 = vector.broadcast %cst_44 : f32 to vector<256x1xf32>
      %c0_45 = arith.constant 0 : index
      %c0_46 = arith.constant 0 : index
      %70 = vector.load %arg13[%c0_45, %c0_46] : memref<256x1xf32, #tpu.memory_space<vmem>>, vector<256x1xf32>
      tpu.vector_store %arg13[%c0_45, %c0_46], %69 {strides = array<i32>} : memref<256x1xf32, #tpu.memory_space<vmem>>, vector<256x1xf32>,
      %cst_47 = arith.constant 0.000000e+00 : f32
      %71 = vector.broadcast %cst_47 : f32 to vector<256x1xf32>
      %c0_48 = arith.constant 0 : index
      %c0_49 = arith.constant 0 : index
      %72 = vector.load %arg14[%c0_48, %c0_49] : memref<256x1xf32, #tpu.memory_space<vmem>>, vector<256x1xf32>
      tpu.vector_store %arg14[%c0_48, %c0_49], %71 {strides = array<i32>} : memref<256x1xf32, #tpu.memory_space<vmem>>, vector<256x1xf32>,
    } else {
    }
    %c0 = arith.constant 0 : index
    %c0_1 = arith.constant 0 : index
    %3 = vector.load %arg11[%c0, %c0_1] : memref<256x128xbf16, #tpu.memory_space<vmem>>, vector<256x128xbf16>
    %c0_2 = arith.constant 0 : index
    %c0_3 = arith.constant 0 : index
    %4 = vector.load %arg3[%c0_2, %c0_3] : memref<128x512xbf16, #tpu.memory_space<vmem>>, vector<128x512xbf16>
    %cst = arith.constant dense<0.000000e+00> : vector<256x512xf32>
    %5 = tpu.matmul %3, %4, %cst {dimension_numbers = #tpu.dot_dimension_numbers<[1], [0], [0], [1], [0, 0, 1, 1], [], []>} : vector<256x128xbf16>, vector<128x512xbf16>, vector<256x512xf32> -> vector<256x512xf32>
    %6 = vector.extract_strided_slice %5 {offsets = [0, 0], sizes = [256, 256], strides = [1, 1]} : vector<256x512xf32> to vector<256x256xf32>
    %7 = vector.extract_strided_slice %5 {offsets = [0, 256], sizes = [256, 256], strides = [1, 1]} : vector<256x512xf32> to vector<256x256xf32>
    %cst_4 = arith.constant 5.000000e-01 : f32
    %8 = vector.broadcast %cst_4 : f32 to vector<256x256xf32>
    %9 = arith.mulf %8, %6 : vector<256x256xf32>
    %cst_5 = arith.constant 2.000000e+00 : f32
    %10 = math.sqrt %cst_5 : f32
    %cst_6 = arith.constant 1.000000e+00 : f32
    %11 = arith.divf %cst_6, %10 : f32
    %12 = vector.broadcast %11 : f32 to vector<256x256xf32>
    %13 = arith.mulf %6, %12 : vector<256x256xf32>
    %14 = math.erf %13 : vector<256x256xf32>
    %cst_7 = arith.constant 1.000000e+00 : f32
    %15 = vector.broadcast %cst_7 : f32 to vector<256x256xf32>
    %16 = arith.addf %15, %14 : vector<256x256xf32>
    %17 = arith.mulf %9, %16 : vector<256x256xf32>
    %18 = arith.mulf %17, %7 : vector<256x256xf32>
    %c0_8 = arith.constant 0 : index
    %c0_9 = arith.constant 0 : index
    %19 = vector.load %arg13[%c0_8, %c0_9] : memref<256x1xf32, #tpu.memory_space<vmem>>, vector<256x1xf32>
    %cst_10 = arith.constant dense<0.000000e+00> : vector<256xf32>
    %20 = vector.multi_reduction <add>, %18, %cst_10 [1] : vector<256x256xf32> to vector<256xf32>
    %21 = vector.shape_cast %20 : vector<256xf32> to vector<256x1xf32>
    %22 = arith.addf %19, %21 : vector<256x1xf32>
    %c0_11 = arith.constant 0 : index
    %c0_12 = arith.constant 0 : index
    %23 = vector.load %arg13[%c0_11, %c0_12] : memref<256x1xf32, #tpu.memory_space<vmem>>, vector<256x1xf32>
    tpu.vector_store %arg13[%c0_11, %c0_12], %22 {strides = array<i32>} : memref<256x1xf32, #tpu.memory_space<vmem>>, vector<256x1xf32>,
    %c0_13 = arith.constant 0 : index
    %c0_14 = arith.constant 0 : index
    %24 = vector.load %arg14[%c0_13, %c0_14] : memref<256x1xf32, #tpu.memory_space<vmem>>, vector<256x1xf32>
    %25 = arith.mulf %18, %18 : vector<256x256xf32>
    %cst_15 = arith.constant dense<0.000000e+00> : vector<256xf32>
    %26 = vector.multi_reduction <add>, %25, %cst_15 [1] : vector<256x256xf32> to vector<256xf32>
    %27 = vector.shape_cast %26 : vector<256xf32> to vector<256x1xf32>
    %28 = arith.addf %24, %27 : vector<256x1xf32>
    %c0_16 = arith.constant 0 : index
    %c0_17 = arith.constant 0 : index
    %29 = vector.load %arg14[%c0_16, %c0_17] : memref<256x1xf32, #tpu.memory_space<vmem>>, vector<256x1xf32>
    tpu.vector_store %arg14[%c0_16, %c0_17], %28 {strides = array<i32>} : memref<256x1xf32, #tpu.memory_space<vmem>>, vector<256x1xf32>,
    %c0_18 = arith.constant 0 : index
    %c0_19 = arith.constant 0 : index
    %30 = vector.load %arg7[%c0_18, %c0_19] : memref<1x256xf32, #tpu.memory_space<vmem>>, vector<1x256xf32>
    %31 = vector.broadcast %30 : vector<1x256xf32> to vector<256x256xf32>
    %32 = arith.mulf %18, %31 : vector<256x256xf32>
    %33 = arith.truncf %32 : vector<256x256xf32> to vector<256x256xbf16>
    %c0_20 = arith.constant 0 : index
    %c0_21 = arith.constant 0 : index
    %34 = vector.load %arg12[%c0_20, %c0_21] : memref<256x128xf32, #tpu.memory_space<vmem>>, vector<256x128xf32>
    %c0_22 = arith.constant 0 : index
    %c0_23 = arith.constant 0 : index
    %35 = vector.load %arg4[%c0_22, %c0_23] : memref<256x128xbf16, #tpu.memory_space<vmem>>, vector<256x128xbf16>
    %cst_24 = arith.constant dense<0.000000e+00> : vector<256x128xf32>
    %36 = tpu.matmul %33, %35, %cst_24 {dimension_numbers = #tpu.dot_dimension_numbers<[1], [0], [0], [1], [0, 0, 1, 1], [], []>} : vector<256x256xbf16>, vector<256x128xbf16>, vector<256x128xf32> -> vector<256x128xf32>
    %37 = arith.addf %34, %36 : vector<256x128xf32>
    %c0_25 = arith.constant 0 : index
    %c0_26 = arith.constant 0 : index
    %38 = vector.load %arg12[%c0_25, %c0_26] : memref<256x128xf32, #tpu.memory_space<vmem>>, vector<256x128xf32>
    tpu.vector_store %arg12[%c0_25, %c0_26], %37 {strides = array<i32>} : memref<256x128xf32, #tpu.memory_space<vmem>>, vector<256x128xf32>,
    %c1_i32 = arith.constant 1 : i32
    %39 = arith.cmpi eq, %arg1, %c1_i32 : i32
    %40 = arith.extui %39 : i1 to i32
    %c0_i32_27 = arith.constant 0 : i32
    %41 = arith.cmpi ne, %40, %c0_i32_27 : i32
    scf.if %41 {
      %c0_28 = arith.constant 0 : index
      %c0_29 = arith.constant 0 : index
      %42 = vector.load %arg13[%c0_28, %c0_29] : memref<256x1xf32, #tpu.memory_space<vmem>>, vector<256x1xf32>
      %cst_30 = arith.constant 0.001953125 : f32
      %43 = vector.broadcast %cst_30 : f32 to vector<256x1xf32>
      %44 = arith.mulf %42, %43 : vector<256x1xf32>
      %c0_31 = arith.constant 0 : index
      %c0_32 = arith.constant 0 : index
      %45 = vector.load %arg14[%c0_31, %c0_32] : memref<256x1xf32, #tpu.memory_space<vmem>>, vector<256x1xf32>
      %cst_33 = arith.constant 0.001953125 : f32
      %46 = vector.broadcast %cst_33 : f32 to vector<256x1xf32>
      %47 = arith.mulf %45, %46 : vector<256x1xf32>
      %48 = arith.mulf %44, %44 : vector<256x1xf32>
      %49 = arith.subf %47, %48 : vector<256x1xf32>
      %cst_34 = arith.constant 0.000000e+00 : f32
      %50 = vector.broadcast %cst_34 : f32 to vector<256x1xf32>
      %51 = arith.maximumf %49, %50 : vector<256x1xf32>
      %cst_35 = arith.constant 9.99999974E-6 : f32
      %52 = vector.broadcast %cst_35 : f32 to vector<256x1xf32>
      %53 = arith.addf %51, %52 : vector<256x1xf32>
      %54 = math.rsqrt %53 : vector<256x1xf32>
      %c0_36 = arith.constant 0 : index
      %c0_37 = arith.constant 0 : index
      %55 = vector.load %arg12[%c0_36, %c0_37] : memref<256x128xf32, #tpu.memory_space<vmem>>, vector<256x128xf32>
      %c0_38 = arith.constant 0 : index
      %c0_39 = arith.constant 0 : index
      %56 = vector.load %arg8[%c0_38, %c0_39] : memref<1x128xf32, #tpu.memory_space<vmem>>, vector<1x128xf32>
      %57 = vector.broadcast %44 : vector<256x1xf32> to vector<256x128xf32>
      %58 = vector.broadcast %56 : vector<1x128xf32> to vector<256x128xf32>
      %59 = arith.mulf %57, %58 : vector<256x128xf32>
      %60 = arith.subf %55, %59 : vector<256x128xf32>
      %61 = vector.broadcast %54 : vector<256x1xf32> to vector<256x128xf32>
      %62 = arith.mulf %61, %60 : vector<256x128xf32>
      %c0_40 = arith.constant 0 : index
      %c0_41 = arith.constant 0 : index
      %63 = vector.load %arg9[%c0_40, %c0_41] : memref<1x128xf32, #tpu.memory_space<vmem>>, vector<1x128xf32>
      %64 = vector.broadcast %63 : vector<1x128xf32> to vector<256x128xf32>
      %65 = arith.addf %62, %64 : vector<256x128xf32>
      %c0_42 = arith.constant 0 : index
      %c0_43 = arith.constant 0 : index
      %66 = vector.load %arg10[%c0_42, %c0_43] : memref<256x128xf32, #tpu.memory_space<vmem>>, vector<256x128xf32>
      tpu.vector_store %arg10[%c0_42, %c0_43], %65 {strides = array<i32>} : memref<256x128xf32, #tpu.memory_space<vmem>>, vector<256x128xf32>,
    } else {
    }
    return
  }
  func.func @transform_0(%arg0: i32, %arg1: i32) -> (i32, i32) {
    %c0_i32 = arith.constant 0 : i32
    %c0_i32_0 = arith.constant 0 : i32
    return %arg0, %c0_i32 : i32, i32
  }
  func.func @transform_1(%arg0: i32, %arg1: i32) -> (i32, i32) {
    %c0_i32 = arith.constant 0 : i32
    %c0_i32_0 = arith.constant 0 : i32
    return %c0_i32, %arg1 : i32, i32
  }
  func.func @transform_2(%arg0: i32, %arg1: i32) -> (i32, i32) {
    %c0_i32 = arith.constant 0 : i32
    %c0_i32_0 = arith.constant 0 : i32
    return %arg1, %c0_i32 : i32, i32
  }
  func.func @transform_3(%arg0: i32, %arg1: i32) -> (i32, i32) {
    %c0_i32 = arith.constant 0 : i32
    %c0_i32_0 = arith.constant 0 : i32
    %c0_i32_1 = arith.constant 0 : i32
    return %c0_i32, %c0_i32_0 : i32, i32
  }
  func.func @transform_4(%arg0: i32, %arg1: i32) -> (i32, i32) {
    %c0_i32 = arith.constant 0 : i32
    %c0_i32_0 = arith.constant 0 : i32
    %c0_i32_1 = arith.constant 0 : i32
    return %c0_i32, %c0_i32_0 : i32, i32
  }
  func.func @transform_5(%arg0: i32, %arg1: i32) -> (i32, i32) {
    %c0_i32 = arith.constant 0 : i32
    %c0_i32_0 = arith.constant 0 : i32
    return %c0_i32, %arg1 : i32, i32
  }
  func.func @transform_6(%arg0: i32, %arg1: i32) -> (i32, i32) {
    %c0_i32 = arith.constant 0 : i32
    %c0_i32_0 = arith.constant 0 : i32
    %c0_i32_1 = arith.constant 0 : i32
    return %c0_i32, %c0_i32_0 : i32, i32
  }
  func.func @transform_7(%arg0: i32, %arg1: i32) -> (i32, i32) {
    %c0_i32 = arith.constant 0 : i32
    %c0_i32_0 = arith.constant 0 : i32
    %c0_i32_1 = arith.constant 0 : i32
    return %c0_i32, %c0_i32_0 : i32, i32
  }
  func.func @transform_8(%arg0: i32, %arg1: i32) -> (i32, i32) {
    %c0_i32 = arith.constant 0 : i32
    %c0_i32_0 = arith.constant 0 : i32
    return %arg0, %c0_i32 : i32, i32
  }
}

</mosaic_0001>

<llo_original>
// kernel: glu_forward.1
$region0: #{glu_forward.1}
  #allocation0 [shape = 'u32[]', space=smem, size = 0x4, offset = 0x4, fixed_abs, tag = 'smem constant byte address 0x4 - core index']
  #allocation1 [shape = 'u32[144,128]{1,0:T(1,128)}', space=vmem, size = 0x12000, scoped, tag = 'internal scratch']
  #allocation2 [shape = 'bf16[256,128]{1,0:T(16,128)(2,1)}', space=vmem, size = 0x10000, scoped, tag = 'scratch operand']
  #allocation3 [shape = 'f32[256,128]{1,0:T(8,128)}', space=vmem, size = 0x20000, scoped, tag = 'scratch operand']
  #allocation4 [shape = 'f32[256,1]{1,0:T(8,128)}', space=vmem, size = 0x20000, scoped, tag = 'scratch operand']
  #allocation5 [shape = 'f32[256,1]{1,0:T(8,128)}', space=vmem, size = 0x20000, scoped, tag = 'scratch operand']
  %s0 = inlined_call_operand.vmem [shape: f32[512,128], index: 0, kind: input, shape index: {}]
  %s1 = inlined_call_operand.vmem [shape: bf16[128,1024], index: 1, kind: input, shape index: {}]
  %s2 = inlined_call_operand.vmem [shape: bf16[512,128], index: 2, kind: input, shape index: {}]
  %s3 = inlined_call_operand.vmem [shape: f32[1,128], index: 3, kind: input, shape index: {}]
  %s4 = inlined_call_operand.vmem [shape: f32[1,128], index: 4, kind: input, shape index: {}]
  %s5 = inlined_call_operand.vmem [shape: f32[1,512], index: 5, kind: input, shape index: {}]
  %s6 = inlined_call_operand.vmem [shape: f32[1,128], index: 6, kind: input, shape index: {}]
  %s7 = inlined_call_operand.vmem [shape: f32[1,128], index: 7, kind: input, shape index: {}]
  %s8 = inlined_call_operand.vmem [shape: f32[512,128], index: 8, kind: output, shape index: {}]
  %s9 = sld [smem:[#allocation0]]
  $region96: #{glu_forward.1} parent=0
    _
  %s11 = ssub.s32 1, %s9
  %s12 = scalar_select 0, %s11, %s9
  $region1: #{glu_forward.1} parent=0
    #allocation6 [shape = 'u8[262144]{0}', space=vmem, size = 0x40000, scoped, tag = 'input window, operand 1']
    loop: start=0, step=1, limit=6
    $region2: #{glu_forward.1} parent=1 // loop_pre_header
      _
    $region3: #{glu_forward.1} parent=1 // loop_header
      %s14 = sphi 0, %s18
      %p15 = scmp.ge.s32.totalorder %s14, 6
      %s21 = sphi 0, %s33
      %s22 = sphi 0, %s29
      %s23 = sphi 0, %s21
      %s24 = sphi 0, %s22
      %s25 = sphi 0, %s23
      %s26 = sphi 0, %s24
      %s36 = sphi 0, %s38
      %s39 = sphi 0, %s36
      %s40 = sphi 0, %s39
      %s56 = sphi 0, %s40
      %s62 = sphi 0, %s64
      %s65 = sphi 0, %s62
      %s66 = sphi 0, %s65
      %s82 = sphi 0, %s66
      %s88 = sphi 0, %s90
      %s91 = sphi 0, %s88
      %s92 = sphi 0, %s91
      %s108 = sphi 0, %s92
      %s112 = sphi 0, %s112
      %s114 = sphi 0, %s112
      %s115 = sphi 0, %s114
      %s129 = sphi 0, %s115
      %s133 = sphi 0, %s133
      %s135 = sphi 0, %s133
      %s136 = sphi 0, %s135
      %s150 = sphi 0, %s136
      %s156 = sphi 0, %s158
      %s159 = sphi 0, %s156
      %s160 = sphi 0, %s159
      %s176 = sphi 0, %s160
      %s180 = sphi 0, %s180
      %s182 = sphi 0, %s180
      %s183 = sphi 0, %s182
      %s197 = sphi 0, %s183
      %s201 = sphi 0, %s201
      %s203 = sphi 0, %s201
      %s204 = sphi 0, %s203
      %s218 = sphi 0, %s204
      %s224 = sphi 0, %s226
      %s227 = sphi 0, %s224
      %s228 = sphi 0, %s227
      %s244 = sphi 0, %s228
    $region4: #{glu_forward.1} parent=1 // loop_header_branch
      %17 = sbr.rel (%p15) target = $region8
    $region5: #{glu_forward.1} parent=1 // loop_body
      %s19 = ssub.s32 %s14, 1
      %s20 = ssub.s32 %s14, 2
      %s27 = sadd.s32 1, %s22
      %p28 = scmp.ge.s32.totalorder %s27, 2
      %s29 = scalar_select %p28, 0, %s27
      %s30 = sadd.s32 1, %s21
      %s31 = scalar_select %p28, %s30, %s21
      %p32 = scmp.ge.s32.totalorder %s31, 2
      %s33 = scalar_select %p32, 0, %s31
      %s34 = ssub.s32 %s21, %s33
      %p35 = scmp.eq.s32.totalorder %s34, 0
      %s37 = sadd.s32 %s36, 1
      %s38 = scalar_select %p35, %s36, %s37
      %p41 = pneg %p35
      %p42 = scmp.eq.s32.totalorder %s14, 3
      %p43 = por %p41, %p42
      %p44 = scmp.ne.s32.totalorder %s36, %s39
      %p45 = scmp.eq.s32.totalorder %s14, 0
      %p46 = por %p44, %p45
      %p47 = scmp.ne.s32.totalorder %s36, %s39
      %p48 = scmp.eq.s32.totalorder %s19, 3
      %p49 = por %p47, %p48
      %p50 = scmp.ne.s32.totalorder %s39, %s40
      %p51 = scmp.eq.s32.totalorder %s19, 0
      %p52 = por %p50, %p51
      %p53 = scmp.ne.s32.totalorder %s39, %s40
      %p54 = scmp.eq.s32.totalorder %s20, 3
      %p55 = por %p53, %p54
      %p57 = scmp.ne.s32.totalorder %s40, %s56
      %p58 = scmp.eq.s32.totalorder %s20, 0
      %p59 = por %p57, %p58
      %s60 = ssub.s32 %s22, %s29
      %p61 = scmp.eq.s32.totalorder %s60, 0
      %s63 = sadd.s32 %s62, 1
      %s64 = scalar_select %p61, %s62, %s63
      %p67 = pneg %p61
      %p68 = scmp.eq.s32.totalorder %s14, 3
      %p69 = por %p67, %p68
      %p70 = scmp.ne.s32.totalorder %s62, %s65
      %p71 = scmp.eq.s32.totalorder %s14, 0
      %p72 = por %p70, %p71
      %p73 = scmp.ne.s32.totalorder %s62, %s65
      %p74 = scmp.eq.s32.totalorder %s19, 3
      %p75 = por %p73, %p74
      %p76 = scmp.ne.s32.totalorder %s65, %s66
      %p77 = scmp.eq.s32.totalorder %s19, 0
      %p78 = por %p76, %p77
      %p79 = scmp.ne.s32.totalorder %s65, %s66
      %p80 = scmp.eq.s32.totalorder %s20, 3
      %p81 = por %p79, %p80
      %p83 = scmp.ne.s32.totalorder %s66, %s82
      %p84 = scmp.eq.s32.totalorder %s20, 0
      %p85 = por %p83, %p84
      %s86 = ssub.s32 %s22, %s29
      %p87 = scmp.eq.s32.totalorder %s86, 0
      %s89 = sadd.s32 %s88, 1
      %s90 = scalar_select %p87, %s88, %s89
      %p93 = pneg %p87
      %p94 = scmp.eq.s32.totalorder %s14, 3
      %p95 = por %p93, %p94
      %p96 = scmp.ne.s32.totalorder %s88, %s91
      %p97 = scmp.eq.s32.totalorder %s14, 0
      %p98 = por %p96, %p97
      %p99 = scmp.ne.s32.totalorder %s88, %s91
      %p100 = scmp.eq.s32.totalorder %s19, 3
      %p101 = por %p99, %p100
      %p102 = scmp.ne.s32.totalorder %s91, %s92
      %p103 = scmp.eq.s32.totalorder %s19, 0
      %p104 = por %p102, %p103
      %p105 = scmp.ne.s32.totalorder %s91, %s92
      %p106 = scmp.eq.s32.totalorder %s20, 3
      %p107 = por %p105, %p106
      %p109 = scmp.ne.s32.totalorder %s92, %s108
      %p110 = scmp.eq.s32.totalorder %s20, 0
      %p111 = por %p109, %p110
      %s113 = sadd.s32 %s112, 1
      %p116 = scmp.eq.s32.totalorder %s14, 3
      %p117 = scmp.ne.s32.totalorder %s112, %s114
      %p118 = scmp.eq.s32.totalorder %s14, 0
      %p119 = por %p117, %p118
      %p120 = scmp.ne.s32.totalorder %s112, %s114
      %p121 = scmp.eq.s32.totalorder %s19, 3
      %p122 = por %p120, %p121
      %p123 = scmp.ne.s32.totalorder %s114, %s115
      %p124 = scmp.eq.s32.totalorder %s19, 0
      %p125 = por %p123, %p124
      %p126 = scmp.ne.s32.totalorder %s114, %s115
      %p127 = scmp.eq.s32.totalorder %s20, 3
      %p128 = por %p126, %p127
      %p130 = scmp.ne.s32.totalorder %s115, %s129
      %p131 = scmp.eq.s32.totalorder %s20, 0
      %p132 = por %p130, %p131
      %s134 = sadd.s32 %s133, 1
      %p137 = scmp.eq.s32.totalorder %s14, 3
      %p138 = scmp.ne.s32.totalorder %s133, %s135
      %p139 = scmp.eq.s32.totalorder %s14, 0
      %p140 = por %p138, %p139
      %p141 = scmp.ne.s32.totalorder %s133, %s135
      %p142 = scmp.eq.s32.totalorder %s19, 3
      %p143 = por %p141, %p142
      %p144 = scmp.ne.s32.totalorder %s135, %s136
      %p145 = scmp.eq.s32.totalorder %s19, 0
      %p146 = por %p144, %p145
      %p147 = scmp.ne.s32.totalorder %s135, %s136
      %p148 = scmp.eq.s32.totalorder %s20, 3
      %p149 = por %p147, %p148
      %p151 = scmp.ne.s32.totalorder %s136, %s150
      %p152 = scmp.eq.s32.totalorder %s20, 0
      %p153 = por %p151, %p152
      %s154 = ssub.s32 %s22, %s29
      %p155 = scmp.eq.s32.totalorder %s154, 0
      %s157 = sadd.s32 %s156, 1
      %s158 = scalar_select %p155, %s156, %s157
      %p161 = pneg %p155
      %p162 = scmp.eq.s32.totalorder %s14, 3
      %p163 = por %p161, %p162
      %p164 = scmp.ne.s32.totalorder %s156, %s159
      %p165 = scmp.eq.s32.totalorder %s14, 0
      %p166 = por %p164, %p165
      %p167 = scmp.ne.s32.totalorder %s156, %s159
      %p168 = scmp.eq.s32.totalorder %s19, 3
      %p169 = por %p167, %p168
      %p170 = scmp.ne.s32.totalorder %s159, %s160
      %p171 = scmp.eq.s32.totalorder %s19, 0
      %p172 = por %p170, %p171
      %p173 = scmp.ne.s32.totalorder %s159, %s160
      %p174 = scmp.eq.s32.totalorder %s20, 3
      %p175 = por %p173, %p174
      %p177 = scmp.ne.s32.totalorder %s160, %s176
      %p178 = scmp.eq.s32.totalorder %s20, 0
      %p179 = por %p177, %p178
      %s181 = sadd.s32 %s180, 1
      %p184 = scmp.eq.s32.totalorder %s14, 3
      %p185 = scmp.ne.s32.totalorder %s180, %s182
      %p186 = scmp.eq.s32.totalorder %s14, 0
      %p187 = por %p185, %p186
      %p188 = scmp.ne.s32.totalorder %s180, %s182
      %p189 = scmp.eq.s32.totalorder %s19, 3
      %p190 = por %p188, %p189
      %p191 = scmp.ne.s32.totalorder %s182, %s183
      %p192 = scmp.eq.s32.totalorder %s19, 0
      %p193 = por %p191, %p192
      %p194 = scmp.ne.s32.totalorder %s182, %s183
      %p195 = scmp.eq.s32.totalorder %s20, 3
      %p196 = por %p194, %p195
      %p198 = scmp.ne.s32.totalorder %s183, %s197
      %p199 = scmp.eq.s32.totalorder %s20, 0
      %p200 = por %p198, %p199
      %s202 = sadd.s32 %s201, 1
      %p205 = scmp.eq.s32.totalorder %s14, 3
      %p206 = scmp.ne.s32.totalorder %s201, %s203
      %p207 = scmp.eq.s32.totalorder %s14, 0
      %p208 = por %p206, %p207
      %p209 = scmp.ne.s32.totalorder %s201, %s203
      %p210 = scmp.eq.s32.totalorder %s19, 3
      %p211 = por %p209, %p210
      %p212 = scmp.ne.s32.totalorder %s203, %s204
      %p213 = scmp.eq.s32.totalorder %s19, 0
      %p214 = por %p212, %p213
      %p215 = scmp.ne.s32.totalorder %s203, %s204
      %p216 = scmp.eq.s32.totalorder %s20, 3
      %p217 = por %p215, %p216
      %p219 = scmp.ne.s32.totalorder %s204, %s218
      %p220 = scmp.eq.s32.totalorder %s20, 0
      %p221 = por %p219, %p220
      %s222 = ssub.s32 %s21, %s33
      %p223 = scmp.eq.s32.totalorder %s222, 0
      %s225 = sadd.s32 %s224, 1
      %s226 = scalar_select %p223, %s224, %s225
      %p229 = pneg %p223
      %p230 = scmp.eq.s32.totalorder %s14, 3
      %p231 = por %p229, %p230
      %p232 = scmp.ne.s32.totalorder %s224, %s227
      %p233 = scmp.eq.s32.totalorder %s14, 0
      %p234 = por %p232, %p233
      %p235 = scmp.ne.s32.totalorder %s224, %s227
      %p236 = scmp.eq.s32.totalorder %s19, 3
      %p237 = por %p235, %p236
      %p238 = scmp.ne.s32.totalorder %s227, %s228
      %p239 = scmp.eq.s32.totalorder %s19, 0
      %p240 = por %p238, %p239
      %p241 = scmp.ne.s32.totalorder %s227, %s228
      %p242 = scmp.eq.s32.totalorder %s20, 3
      %p243 = por %p241, %p242
      %p245 = scmp.ne.s32.totalorder %s228, %s244
      %p246 = scmp.eq.s32.totalorder %s20, 0
      %p247 = por %p245, %p246
      %p248 = scmp.le.s32.totalorder 1, %s14
      %p249 = scmp.lt.s32.totalorder %s14, 5
      %p250 = pnand %p248, %p249
      %p251 = pneg %p250
      // Predicated region
      $region9: #{glu_forward.1} parent=5 // pred_check
        _
      $region10: #{glu_forward.1} parent=5 // pred_check_branch
        %253 = sbr.rel (%p250) target = $region12
      $region11: #{glu_forward.1} parent=5 // pred_region
        %s254 = ssub.s32 %s14, 1
        // Predicated region
        $region13: #{glu_forward.1} parent=11 // pred_check
          %p255 = pneg %p125
        $region14: #{glu_forward.1} parent=11 // pred_check_branch
          %257 = sbr.rel (%p255) target = $region16
        $region15: #{glu_forward.1} parent=11 // pred_region
          _
        $region16: #{glu_forward.1} parent=11 // pred_fallthru
          _
        // Predicated region
        $region17: #{glu_forward.1} parent=11 // pred_check
          %p258 = pneg %p146
        $region18: #{glu_forward.1} parent=11 // pred_check_branch
          %260 = sbr.rel (%p258) target = $region20
        $region19: #{glu_forward.1} parent=11 // pred_region
          _
        $region20: #{glu_forward.1} parent=11 // pred_fallthru
          _
        // Predicated region
        $region21: #{glu_forward.1} parent=11 // pred_check
          %p261 = pneg %p193
        $region22: #{glu_forward.1} parent=11 // pred_check_branch
          %263 = sbr.rel (%p261) target = $region24
        $region23: #{glu_forward.1} parent=11 // pred_region
          _
        $region24: #{glu_forward.1} parent=11 // pred_fallthru
          _
        // Predicated region
        $region25: #{glu_forward.1} parent=11 // pred_check
          %p264 = pneg %p214
        $region26: #{glu_forward.1} parent=11 // pred_check_branch
          %266 = sbr.rel (%p264) target = $region28
        $region27: #{glu_forward.1} parent=11 // pred_region
          _
        $region28: #{glu_forward.1} parent=11 // pred_fallthru
          _
      $region12: #{glu_forward.1} parent=5 // pred_fallthru
        _
      %p267 = scmp.lt.s32.totalorder %s14, 4
      // Predicated region
      $region29: #{glu_forward.1} parent=5 // pred_check
        %p268 = pneg %p267
      $region30: #{glu_forward.1} parent=5 // pred_check_branch
        %270 = sbr.rel (%p268) target = $region32
      $region31: #{glu_forward.1} parent=5 // pred_region
        // Predicated region
        $region33: #{glu_forward.1} parent=31 // pred_check
          %p271 = pneg %p46
        $region34: #{glu_forward.1} parent=31 // pred_check_branch
          %273 = sbr.rel (%p271) target = $region36
        $region35: #{glu_forward.1} parent=31 // pred_region
          %s274 = smul.u32 32, %s21
          %p275 = scmp.lt.s32.totalorder %s274, 63
          %s276 = scalar_select %p275, %s274, 63
          %s277 = smul.addr %s276, 8
          %s278 = scalar_lea.vmem %s0, %s277
          %s279 = smul.u32 32, %s21
        $region36: #{glu_forward.1} parent=31 // pred_fallthru
          _
        // Predicated region
        $region37: #{glu_forward.1} parent=31 // pred_check
          %p280 = pneg %p72
        $region38: #{glu_forward.1} parent=31 // pred_check_branch
          %282 = sbr.rel (%p280) target = $region40
        $region39: #{glu_forward.1} parent=31 // pred_region
          %s283 = sand.u32 %s62, 1
          %s284 = sand.u32 %s62, 1
          %s285 = smul.addr %s284, 256
          %s286 = scalar_lea.vmem [#allocation6], %s285
          %s287 = smul.u32 4, %s22
          %s288 = smul.addr %s287, 4
          %s289 = scalar_lea.vmem %s1, %s288
          // Predicated region
          $region41: #{glu_forward.1} parent=39 // pred_check
            _
          $region42: #{glu_forward.1} parent=39 // pred_check_branch
            %291 = sbr.rel (0) target = $region44
          $region43: #{glu_forward.1} parent=39 // pred_region
            // Predicated region
            $region45: #{glu_forward.1} parent=43 // pred_check
              _
            $region46: #{glu_forward.1} parent=43 // pred_check_branch
              %293 = sbr.rel (0) target = $region48
            $region47: #{glu_forward.1} parent=43 // pred_region
              loop: start=0, step=1, limit=1
              $region49: #{glu_forward.1} parent=47 // loop_pre_header
                _
              $region50: #{glu_forward.1} parent=47 // loop_header
                %s295 = sphi 0, %s299
                %p296 = scmp.ge.s32.totalorder %s295, 1
                %s300 = sphi %s289, %s289
                %s301 = sphi %s286, %s286
              $region51: #{glu_forward.1} parent=47 // loop_header_branch
                %298 = sbr.rel (%p296) target = $region55
              $region52: #{glu_forward.1} parent=47 // loop_body
                %v302 = vld [vmem:[%s300] sm:$0xff]
                %303 = vst [vmem:[%s301] sm:$0xff] %v302
                %v304 = vld [vmem:[%s300 + $0x8] sm:$0xff]
                %305 = vst [vmem:[%s301 + $0x8] sm:$0xff] %v304
                %v306 = vld [vmem:[%s300 + $0x20] sm:$0xff]
                %307 = vst [vmem:[%s301 + $0x10] sm:$0xff] %v306
                %v308 = vld [vmem:[%s300 + $0x28] sm:$0xff]
                %309 = vst [vmem:[%s301 + $0x18] sm:$0xff] %v308
                %v310 = vld [vmem:[%s300 + $0x40] sm:$0xff]
                %311 = vst [vmem:[%s301 + $0x20] sm:$0xff] %v310
                %v312 = vld [vmem:[%s300 + $0x48] sm:$0xff]
                %313 = vst [vmem:[%s301 + $0x28] sm:$0xff] %v312
                %v314 = vld [vmem:[%s300 + $0x60] sm:$0xff]
                %315 = vst [vmem:[%s301 + $0x30] sm:$0xff] %v314
                %v316 = vld [vmem:[%s300 + $0x68] sm:$0xff]
                %317 = vst [vmem:[%s301 + $0x38] sm:$0xff] %v316
                %v318 = vld [vmem:[%s300 + $0x80] sm:$0xff]
                %319 = vst [vmem:[%s301 + $0x40] sm:$0xff] %v318
                %v320 = vld [vmem:[%s300 + $0x88] sm:$0xff]
                %321 = vst [vmem:[%s301 + $0x48] sm:$0xff] %v320
                %v322 = vld [vmem:[%s300 + $0xa0] sm:$0xff]
                %323 = vst [vmem:[%s301 + $0x50] sm:$0xff] %v322
                %v324 = vld [vmem:[%s300 + $0xa8] sm:$0xff]
                %325 = vst [vmem:[%s301 + $0x58] sm:$0xff] %v324
                %v326 = vld [vmem:[%s300 + $0xc0] sm:$0xff]
                %327 = vst [vmem:[%s301 + $0x60] sm:$0xff] %v326
                %v328 = vld [vmem:[%s300 + $0xc8] sm:$0xff]
                %329 = vst [vmem:[%s301 + $0x68] sm:$0xff] %v328
                %v330 = vld [vmem:[%s300 + $0xe0] sm:$0xff]
                %331 = vst [vmem:[%s301 + $0x70] sm:$0xff] %v330
                %v332 = vld [vmem:[%s300 + $0xe8] sm:$0xff]
                %333 = vst [vmem:[%s301 + $0x78] sm:$0xff] %v332
                %v334 = vld [vmem:[%s300 + $0x100] sm:$0xff]
                %335 = vst [vmem:[%s301 + $0x80] sm:$0xff] %v334
                %v336 = vld [vmem:[%s300 + $0x108] sm:$0xff]
                %337 = vst [vmem:[%s301 + $0x88] sm:$0xff] %v336
                %v338 = vld [vmem:[%s300 + $0x120] sm:$0xff]
                %339 = vst [vmem:[%s301 + $0x90] sm:$0xff] %v338
                %v340 = vld [vmem:[%s300 + $0x128] sm:$0xff]
                %341 = vst [vmem:[%s301 + $0x98] sm:$0xff] %v340
                %v342 = vld [vmem:[%s300 + $0x140] sm:$0xff]
                %343 = vst [vmem:[%s301 + $0xa0] sm:$0xff] %v342
                %v344 = vld [vmem:[%s300 + $0x148] sm:$0xff]
                %345 = vst [vmem:[%s301 + $0xa8] sm:$0xff] %v344
                %v346 = vld [vmem:[%s300 + $0x160] sm:$0xff]
                %347 = vst [vmem:[%s301 + $0xb0] sm:$0xff] %v346
                %v348 = vld [vmem:[%s300 + $0x168] sm:$0xff]
                %349 = vst [vmem:[%s301 + $0xb8] sm:$0xff] %v348
                %v350 = vld [vmem:[%s300 + $0x180] sm:$0xff]
                %351 = vst [vmem:[%s301 + $0xc0] sm:$0xff] %v350
                %v352 = vld [vmem:[%s300 + $0x188] sm:$0xff]
                %353 = vst [vmem:[%s301 + $0xc8] sm:$0xff] %v352
                %v354 = vld [vmem:[%s300 + $0x1a0] sm:$0xff]
                %355 = vst [vmem:[%s301 + $0xd0] sm:$0xff] %v354
                %v356 = vld [vmem:[%s300 + $0x1a8] sm:$0xff]
                %357 = vst [vmem:[%s301 + $0xd8] sm:$0xff] %v356
                %v358 = vld [vmem:[%s300 + $0x1c0] sm:$0xff]
                %359 = vst [vmem:[%s301 + $0xe0] sm:$0xff] %v358
                %v360 = vld [vmem:[%s300 + $0x1c8] sm:$0xff]
                %361 = vst [vmem:[%s301 + $0xe8] sm:$0xff] %v360
                %v362 = vld [vmem:[%s300 + $0x1e0] sm:$0xff]
                %363 = vst [vmem:[%s301 + $0xf0] sm:$0xff] %v362
                %v364 = vld [vmem:[%s300 + $0x1e8] sm:$0xff]
                %365 = vst [vmem:[%s301 + $0xf8] sm:$0xff] %v364
              $region53: #{glu_forward.1} parent=47 // loop_footer
                %s299 = sadd.s32 1, %s295
              $region54: #{glu_forward.1} parent=47 // loop_footer_branch
                %294 = sbr.rel target = $region50
              $region55: #{glu_forward.1} parent=47 // loop_exit
                _
            $region48: #{glu_forward.1} parent=43 // pred_fallthru
              _
            // Predicated region
            $region56: #{glu_forward.1} parent=43 // pred_check
              _
            $region57: #{glu_forward.1} parent=43 // pred_check_branch
              %367 = sbr.rel target = $region59
            $region58: #{glu_forward.1} parent=43 // pred_region
              _
            $region59: #{glu_forward.1} parent=43 // pred_fallthru
              _
          $region44: #{glu_forward.1} parent=39 // pred_fallthru
            _
          %368 = vnop
        $region40: #{glu_forward.1} parent=31 // pred_fallthru
          _
        // Predicated region
        $region60: #{glu_forward.1} parent=31 // pred_check
          %p369 = pneg %p98
        $region61: #{glu_forward.1} parent=31 // pred_check_branch
          %371 = sbr.rel (%p369) target = $region63
        $region62: #{glu_forward.1} parent=31 // pred_region
          %s372 = smul.u32 32, %s22
          %p373 = scmp.lt.s32.totalorder %s372, 63
          %s374 = scalar_select %p373, %s372, 63
          %s375 = smul.addr %s374, 4
          %s376 = scalar_lea.vmem %s2, %s375
          %s377 = smul.u32 32, %s22
        $region63: #{glu_forward.1} parent=31 // pred_fallthru
          _
        // Predicated region
        $region64: #{glu_forward.1} parent=31 // pred_check
          %p378 = pneg %p166
        $region65: #{glu_forward.1} parent=31 // pred_check_branch
          %380 = sbr.rel (%p378) target = $region67
        $region66: #{glu_forward.1} parent=31 // pred_region
          %s381 = smul.u32 2, %s22
          %p382 = scmp.lt.s32.totalorder %s381, 3
          %s383 = scalar_select %p382, %s381, 3
          %s384 = scalar_lea.vmem %s5, %s383
          %s385 = smul.u32 2, %s22
        $region67: #{glu_forward.1} parent=31 // pred_fallthru
          _
      $region32: #{glu_forward.1} parent=5 // pred_fallthru
        _
      %p386 = scmp.le.s32.totalorder 1, %s14
      %p387 = scmp.lt.s32.totalorder %s14, 5
      %p388 = pnand %p386, %p387
      %p389 = pneg %p388
      // Predicated region
      $region68: #{glu_forward.1} parent=5 // pred_check
        _
      $region69: #{glu_forward.1} parent=5 // pred_check_branch
        %391 = sbr.rel (%p388) target = $region71
      $region70: #{glu_forward.1} parent=5 // pred_region
        %s392 = ssub.s32 %s14, 1
        %s393 = sand.u32 %s65, 1
        %s394 = sand.u32 %s65, 1
        %s395 = smul.addr %s394, 256
        %s396 = scalar_lea.vmem [#allocation6], %s395
        // Predicated region
        $region72: #{glu_forward.1} parent=70 // pred_check
          %p397 = pneg %p78
        $region73: #{glu_forward.1} parent=70 // pred_check_branch
          %399 = sbr.rel (%p397) target = $region75
        $region74: #{glu_forward.1} parent=70 // pred_region
          _
        $region75: #{glu_forward.1} parent=70 // pred_fallthru
          _
        %s400 = smul.u32 32, %s23
        %p401 = scmp.lt.s32.totalorder %s400, 63
        %s402 = scalar_select %p401, %s400, 63
        %s403 = smul.addr %s402, 8
        %s404 = scalar_lea.vmem %s0, %s403
        %p405 = pneg %p52
        %p406 = pneg %p49
        %s407 = sand.u32 %s65, 1
        %s408 = sand.u32 %s65, 1
        %s409 = smul.addr %s408, 256
        %s410 = scalar_lea.vmem [#allocation6], %s409
        %p411 = pneg %p78
        %p412 = pneg %p75
        %s413 = smul.u32 32, %s24
        %p414 = scmp.lt.s32.totalorder %s413, 63
        %s415 = scalar_select %p414, %s413, 63
        %s416 = smul.addr %s415, 4
        %s417 = scalar_lea.vmem %s2, %s416
        %p418 = pneg %p104
        %p419 = pneg %p101
        %p420 = pneg %p125
        %p421 = pneg %p122
        %p422 = pneg %p146
        %p423 = pneg %p143
        %s424 = smul.u32 2, %s24
        %p425 = scmp.lt.s32.totalorder %s424, 3
        %s426 = scalar_select %p425, %s424, 3
        %s427 = scalar_lea.vmem %s5, %s426
        %p428 = pneg %p172
        %p429 = pneg %p169
        %p430 = pneg %p193
        %p431 = pneg %p190
        %p432 = pneg %p214
        %p433 = pneg %p211
        %p434 = pneg %p240
        %p435 = pneg %p237
        %s436 = smul.u32 32, %s23
        %p437 = scmp.lt.s32.totalorder %s436, 63
        %s438 = scalar_select %p437, %s436, 63
        %s439 = smul.addr %s438, 8
        %s440 = scalar_lea.vmem %s8, %s439
        %s441 = smul.u32 32, %s23
        %p442 = scmp.lt.s32.totalorder %s441, 63
        %s443 = scalar_select %p442, %s441, 63
        %s444 = smul.addr %s443, 8
        %s445 = scalar_lea.vmem %s0, %s444
        %s446 = smul.u32 32, %s23
        %s447 = smul.u32 4, %s24
        %s448 = smul.u32 32, %s24
        %p449 = scmp.lt.s32.totalorder %s448, 63
        %s450 = scalar_select %p449, %s448, 63
        %s451 = smul.addr %s450, 4
        %s452 = scalar_lea.vmem %s2, %s451
        %s453 = smul.u32 32, %s24
        %s454 = smul.u32 2, %s24
        %p455 = scmp.lt.s32.totalorder %s454, 3
        %s456 = scalar_select %p455, %s454, 3
        %s457 = scalar_lea.vmem %s5, %s456
        %s458 = smul.u32 2, %s24
        %s459 = smul.u32 32, %s23
        %p460 = scmp.lt.s32.totalorder %s459, 63
        %s461 = scalar_select %p460, %s459, 63
        %s462 = smul.addr %s461, 8
        %s463 = scalar_lea.vmem %s8, %s462
        %s464 = smul.u32 32, %s23
        %p466 = scmp.eq.s32.totalorder %s24, 0
        // Predicated region
        $region76: #{glu_forward.1} parent=70 // pred_check
          %p467 = pneg %p466
        $region77: #{glu_forward.1} parent=70 // pred_check_branch
          %469 = sbr.rel (%p467) target = $region79
        $region78: #{glu_forward.1} parent=70 // pred_region
          %v470 = vld [vmem:[%s3] sm:$0x1]
          %v471 = vld [vmem:[%s4] sm:$0x1]
          %v472 = vld [vmem:[%s445] sm:$0xff]
          %v473 = vld [vmem:[%s445 + $0x8] sm:$0xff]
          %v474 = vld [vmem:[%s445 + $0x10] sm:$0xff]
          %v475 = vld [vmem:[%s445 + $0x18] sm:$0xff]
          %v476 = vld [vmem:[%s445 + $0x20] sm:$0xff]
          %v477 = vld [vmem:[%s445 + $0x28] sm:$0xff]
          %v478 = vld [vmem:[%s445 + $0x30] sm:$0xff]
          %v479 = vld [vmem:[%s445 + $0x38] sm:$0xff]
          %v480 = vld [vmem:[%s445 + $0x40] sm:$0xff]
          %v481 = vld [vmem:[%s445 + $0x48] sm:$0xff]
          %v482 = vld [vmem:[%s445 + $0x50] sm:$0xff]
          %v483 = vld [vmem:[%s445 + $0x58] sm:$0xff]
          %v484 = vld [vmem:[%s445 + $0x60] sm:$0xff]
          %v485 = vld [vmem:[%s445 + $0x68] sm:$0xff]
          %v486 = vld [vmem:[%s445 + $0x70] sm:$0xff]
          %v487 = vld [vmem:[%s445 + $0x78] sm:$0xff]
          %v488 = vld [vmem:[%s445 + $0x80] sm:$0xff]
          %v489 = vld [vmem:[%s445 + $0x88] sm:$0xff]
          %v490 = vld [vmem:[%s445 + $0x90] sm:$0xff]
          %v491 = vld [vmem:[%s445 + $0x98] sm:$0xff]
          %v492 = vld [vmem:[%s445 + $0xa0] sm:$0xff]
          %v493 = vld [vmem:[%s445 + $0xa8] sm:$0xff]
          %v494 = vld [vmem:[%s445 + $0xb0] sm:$0xff]
          %v495 = vld [vmem:[%s445 + $0xb8] sm:$0xff]
          %v496 = vld [vmem:[%s445 + $0xc0] sm:$0xff]
          %v497 = vld [vmem:[%s445 + $0xc8] sm:$0xff]
          %v498 = vld [vmem:[%s445 + $0xd0] sm:$0xff]
          %v499 = vld [vmem:[%s445 + $0xd8] sm:$0xff]
          %v500 = vld [vmem:[%s445 + $0xe0] sm:$0xff]
          %v501 = vld [vmem:[%s445 + $0xe8] sm:$0xff]
          %v502 = vld [vmem:[%s445 + $0xf0] sm:$0xff]
          %v503 = vld [vmem:[%s445 + $0xf8] sm:$0xff]
          %504 = vadd.xlane.f32.xlu0 %v472
          %v505 = vpop.xlane.xlu0 %504
          %506 = vadd.xlane.f32.xlu0 %v473
          %v507 = vpop.xlane.xlu0 %506
          %508 = vadd.xlane.f32.xlu0 %v474
          %v509 = vpop.xlane.xlu0 %508
          %510 = vadd.xlane.f32.xlu0 %v475
          %v511 = vpop.xlane.xlu0 %510
          %512 = vadd.xlane.f32.xlu0 %v476
          %v513 = vpop.xlane.xlu0 %512
          %514 = vadd.xlane.f32.xlu0 %v477
          %v515 = vpop.xlane.xlu0 %514
          %516 = vadd.xlane.f32.xlu0 %v478
          %v517 = vpop.xlane.xlu0 %516
          %518 = vadd.xlane.f32.xlu0 %v479
          %v519 = vpop.xlane.xlu0 %518
          %520 = vadd.xlane.f32.xlu0 %v480
          %v521 = vpop.xlane.xlu0 %520
          %522 = vadd.xlane.f32.xlu0 %v481
          %v523 = vpop.xlane.xlu0 %522
          %524 = vadd.xlane.f32.xlu0 %v482
          %v525 = vpop.xlane.xlu0 %524
          %526 = vadd.xlane.f32.xlu0 %v483
          %v527 = vpop.xlane.xlu0 %526
          %528 = vadd.xlane.f32.xlu0 %v484
          %v529 = vpop.xlane.xlu0 %528
          %530 = vadd.xlane.f32.xlu0 %v485
          %v531 = vpop.xlane.xlu0 %530
          %532 = vadd.xlane.f32.xlu0 %v486
          %v533 = vpop.xlane.xlu0 %532
          %534 = vadd.xlane.f32.xlu0 %v487
          %v535 = vpop.xlane.xlu0 %534
          %536 = vadd.xlane.f32.xlu0 %v488
          %v537 = vpop.xlane.xlu0 %536
          %538 = vadd.xlane.f32.xlu0 %v489
          %v539 = vpop.xlane.xlu0 %538
          %540 = vadd.xlane.f32.xlu0 %v490
          %v541 = vpop.xlane.xlu0 %540
          %542 = vadd.xlane.f32.xlu0 %v491
          %v543 = vpop.xlane.xlu0 %542
          %544 = vadd.xlane.f32.xlu0 %v492
          %v545 = vpop.xlane.xlu0 %544
          %546 = vadd.xlane.f32.xlu0 %v493
          %v547 = vpop.xlane.xlu0 %546
          %548 = vadd.xlane.f32.xlu0 %v494
          %v549 = vpop.xlane.xlu0 %548
          %550 = vadd.xlane.f32.xlu0 %v495
          %v551 = vpop.xlane.xlu0 %550
          %552 = vadd.xlane.f32.xlu0 %v496
          %v553 = vpop.xlane.xlu0 %552
          %554 = vadd.xlane.f32.xlu0 %v497
          %v555 = vpop.xlane.xlu0 %554
          %556 = vadd.xlane.f32.xlu0 %v498
          %v557 = vpop.xlane.xlu0 %556
          %558 = vadd.xlane.f32.xlu0 %v499
          %v559 = vpop.xlane.xlu0 %558
          %560 = vadd.xlane.f32.xlu0 %v500
          %v561 = vpop.xlane.xlu0 %560
          %562 = vadd.xlane.f32.xlu0 %v501
          %v563 = vpop.xlane.xlu0 %562
          %564 = vadd.xlane.f32.xlu0 %v502
          %v565 = vpop.xlane.xlu0 %564
          %566 = vadd.xlane.f32.xlu0 %v503
          %v567 = vpop.xlane.xlu0 %566
          %v568 = vrcp.pop 128.0
          %v569 = vmul.f32 %v505, %v568
          %v570 = vmul.f32 %v507, %v568
          %v571 = vmul.f32 %v509, %v568
          %v572 = vmul.f32 %v511, %v568
          %v573 = vmul.f32 %v513, %v568
          %v574 = vmul.f32 %v515, %v568
          %v575 = vmul.f32 %v517, %v568
          %v576 = vmul.f32 %v519, %v568
          %v577 = vmul.f32 %v521, %v568
          %v578 = vmul.f32 %v523, %v568
          %v579 = vmul.f32 %v525, %v568
          %v580 = vmul.f32 %v527, %v568
          %v581 = vmul.f32 %v529, %v568
          %v582 = vmul.f32 %v531, %v568
          %v583 = vmul.f32 %v533, %v568
          %v584 = vmul.f32 %v535, %v568
          %v585 = vmul.f32 %v537, %v568
          %v586 = vmul.f32 %v539, %v568
          %v587 = vmul.f32 %v541, %v568
          %v588 = vmul.f32 %v543, %v568
          %v589 = vmul.f32 %v545, %v568
          %v590 = vmul.f32 %v547, %v568
          %v591 = vmul.f32 %v549, %v568
          %v592 = vmul.f32 %v551, %v568
          %v593 = vmul.f32 %v553, %v568
          %v594 = vmul.f32 %v555, %v568
          %v595 = vmul.f32 %v557, %v568
          %v596 = vmul.f32 %v559, %v568
          %v597 = vmul.f32 %v561, %v568
          %v598 = vmul.f32 %v563, %v568
          %v599 = vmul.f32 %v565, %v568
          %v600 = vmul.f32 %v567, %v568
          %v601 = vsub.f32 %v472, %v569
          %v602 = vsub.f32 %v473, %v570
          %v603 = vsub.f32 %v474, %v571
          %v604 = vsub.f32 %v475, %v572
          %v605 = vsub.f32 %v476, %v573
          %v606 = vsub.f32 %v477, %v574
          %v607 = vsub.f32 %v478, %v575
          %v608 = vsub.f32 %v479, %v576
          %v609 = vsub.f32 %v480, %v577
          %v610 = vsub.f32 %v481, %v578
          %v611 = vsub.f32 %v482, %v579
          %v612 = vsub.f32 %v483, %v580
          %v613 = vsub.f32 %v484, %v581
          %v614 = vsub.f32 %v485, %v582
          %v615 = vsub.f32 %v486, %v583
          %v616 = vsub.f32 %v487, %v584
          %v617 = vsub.f32 %v488, %v585
          %v618 = vsub.f32 %v489, %v586
          %v619 = vsub.f32 %v490, %v587
          %v620 = vsub.f32 %v491, %v588
          %v621 = vsub.f32 %v492, %v589
          %v622 = vsub.f32 %v493, %v590
          %v623 = vsub.f32 %v494, %v591
          %v624 = vsub.f32 %v495, %v592
          %v625 = vsub.f32 %v496, %v593
          %v626 = vsub.f32 %v497, %v594
          %v627 = vsub.f32 %v498, %v595
          %v628 = vsub.f32 %v499, %v596
          %v629 = vsub.f32 %v500, %v597
          %v630 = vsub.f32 %v501, %v598
          %v631 = vsub.f32 %v502, %v599
          %v632 = vsub.f32 %v503, %v600
          %v633 = vmul.f32 %v601, %v601
          %v634 = vmul.f32 %v602, %v602
          %v635 = vmul.f32 %v603, %v603
          %v636 = vmul.f32 %v604, %v604
          %v637 = vmul.f32 %v605, %v605
          %v638 = vmul.f32 %v606, %v606
          %v639 = vmul.f32 %v607, %v607
          %v640 = vmul.f32 %v608, %v608
          %v641 = vmul.f32 %v609, %v609
          %v642 = vmul.f32 %v610, %v610
          %v643 = vmul.f32 %v611, %v611
          %v644 = vmul.f32 %v612, %v612
          %v645 = vmul.f32 %v613, %v613
          %v646 = vmul.f32 %v614, %v614
          %v647 = vmul.f32 %v615, %v615
          %v648 = vmul.f32 %v616, %v616
          %v649 = vmul.f32 %v617, %v617
          %v650 = vmul.f32 %v618, %v618
          %v651 = vmul.f32 %v619, %v619
          %v652 = vmul.f32 %v620, %v620
          %v653 = vmul.f32 %v621, %v621
          %v654 = vmul.f32 %v622, %v622
          %v655 = vmul.f32 %v623, %v623
          %v656 = vmul.f32 %v624, %v624
          %v657 = vmul.f32 %v625, %v625
          %v658 = vmul.f32 %v626, %v626
          %v659 = vmul.f32 %v627, %v627
          %v660 = vmul.f32 %v628, %v628
          %v661 = vmul.f32 %v629, %v629
          %v662 = vmul.f32 %v630, %v630
          %v663 = vmul.f32 %v631, %v631
          %v664 = vmul.f32 %v632, %v632
          %665 = vadd.xlane.f32.xlu0 %v633
          %v666 = vpop.xlane.xlu0 %665
          %667 = vadd.xlane.f32.xlu0 %v634
          %v668 = vpop.xlane.xlu0 %667
          %669 = vadd.xlane.f32.xlu0 %v635
          %v670 = vpop.xlane.xlu0 %669
          %671 = vadd.xlane.f32.xlu0 %v636
          %v672 = vpop.xlane.xlu0 %671
          %673 = vadd.xlane.f32.xlu0 %v637
          %v674 = vpop.xlane.xlu0 %673
          %675 = vadd.xlane.f32.xlu0 %v638
          %v676 = vpop.xlane.xlu0 %675
          %677 = vadd.xlane.f32.xlu0 %v639
          %v678 = vpop.xlane.xlu0 %677
          %679 = vadd.xlane.f32.xlu0 %v640
          %v680 = vpop.xlane.xlu0 %679
          %681 = vadd.xlane.f32.xlu0 %v641
          %v682 = vpop.xlane.xlu0 %681
          %683 = vadd.xlane.f32.xlu0 %v642
          %v684 = vpop.xlane.xlu0 %683
          %685 = vadd.xlane.f32.xlu0 %v643
          %v686 = vpop.xlane.xlu0 %685
          %687 = vadd.xlane.f32.xlu0 %v644
          %v688 = vpop.xlane.xlu0 %687
          %689 = vadd.xlane.f32.xlu0 %v645
          %v690 = vpop.xlane.xlu0 %689
          %691 = vadd.xlane.f32.xlu0 %v646
          %v692 = vpop.xlane.xlu0 %691
          %693 = vadd.xlane.f32.xlu0 %v647
          %v694 = vpop.xlane.xlu0 %693
          %695 = vadd.xlane.f32.xlu0 %v648
          %v696 = vpop.xlane.xlu0 %695
          %697 = vadd.xlane.f32.xlu0 %v649
          %v698 = vpop.xlane.xlu0 %697
          %699 = vadd.xlane.f32.xlu0 %v650
          %v700 = vpop.xlane.xlu0 %699
          %701 = vadd.xlane.f32.xlu0 %v651
          %v702 = vpop.xlane.xlu0 %701
          %703 = vadd.xlane.f32.xlu0 %v652
          %v704 = vpop.xlane.xlu0 %703
          %705 = vadd.xlane.f32.xlu0 %v653
          %v706 = vpop.xlane.xlu0 %705
          %707 = vadd.xlane.f32.xlu0 %v654
          %v708 = vpop.xlane.xlu0 %707
          %709 = vadd.xlane.f32.xlu0 %v655
          %v710 = vpop.xlane.xlu0 %709
          %711 = vadd.xlane.f32.xlu0 %v656
          %v712 = vpop.xlane.xlu0 %711
          %713 = vadd.xlane.f32.xlu0 %v657
          %v714 = vpop.xlane.xlu0 %713
          %715 = vadd.xlane.f32.xlu0 %v658
          %v716 = vpop.xlane.xlu0 %715
          %717 = vadd.xlane.f32.xlu0 %v659
          %v718 = vpop.xlane.xlu0 %717
          %719 = vadd.xlane.f32.xlu0 %v660
          %v720 = vpop.xlane.xlu0 %719
          %721 = vadd.xlane.f32.xlu0 %v661
          %v722 = vpop.xlane.xlu0 %721
          %723 = vadd.xlane.f32.xlu0 %v662
          %v724 = vpop.xlane.xlu0 %723
          %725 = vadd.xlane.f32.xlu0 %v663
          %v726 = vpop.xlane.xlu0 %725
          %727 = vadd.xlane.f32.xlu0 %v664
          %v728 = vpop.xlane.xlu0 %727
          %v729 = vmul.f32 %v666, %v568
          %v730 = vmul.f32 %v668, %v568
          %v731 = vmul.f32 %v670, %v568
          %v732 = vmul.f32 %v672, %v568
          %v733 = vmul.f32 %v674, %v568
          %v734 = vmul.f32 %v676, %v568
          %v735 = vmul.f32 %v678, %v568
          %v736 = vmul.f32 %v680, %v568
          %v737 = vmul.f32 %v682, %v568
          %v738 = vmul.f32 %v684, %v568
          %v739 = vmul.f32 %v686, %v568
          %v740 = vmul.f32 %v688, %v568
          %v741 = vmul.f32 %v690, %v568
          %v742 = vmul.f32 %v692, %v568
          %v743 = vmul.f32 %v694, %v568
          %v744 = vmul.f32 %v696, %v568
          %v745 = vmul.f32 %v698, %v568
          %v746 = vmul.f32 %v700, %v568
          %v747 = vmul.f32 %v702, %v568
          %v748 = vmul.f32 %v704, %v568
          %v749 = vmul.f32 %v706, %v568
          %v750 = vmul.f32 %v708, %v568
          %v751 = vmul.f32 %v710, %v568
          %v752 = vmul.f32 %v712, %v568
          %v753 = vmul.f32 %v714, %v568
          %v754 = vmul.f32 %v716, %v568
          %v755 = vmul.f32 %v718, %v568
          %v756 = vmul.f32 %v720, %v568
          %v757 = vmul.f32 %v722, %v568
          %v758 = vmul.f32 %v724, %v568
          %v759 = vmul.f32 %v726, %v568
          %v760 = vmul.f32 %v728, %v568
          %v761 = vadd.f32 %v729, 1e-05
          %v762 = vadd.f32 %v730, 1e-05
          %v763 = vadd.f32 %v731, 1e-05
          %v764 = vadd.f32 %v732, 1e-05
          %v765 = vadd.f32 %v733, 1e-05
          %v766 = vadd.f32 %v734, 1e-05
          %v767 = vadd.f32 %v735, 1e-05
          %v768 = vadd.f32 %v736, 1e-05
          %v769 = vadd.f32 %v737, 1e-05
          %v770 = vadd.f32 %v738, 1e-05
          %v771 = vadd.f32 %v739, 1e-05
          %v772 = vadd.f32 %v740, 1e-05
          %v773 = vadd.f32 %v741, 1e-05
          %v774 = vadd.f32 %v742, 1e-05
          %v775 = vadd.f32 %v743, 1e-05
          %v776 = vadd.f32 %v744, 1e-05
          %v777 = vadd.f32 %v745, 1e-05
          %v778 = vadd.f32 %v746, 1e-05
          %v779 = vadd.f32 %v747, 1e-05
          %v780 = vadd.f32 %v748, 1e-05
          %v781 = vadd.f32 %v749, 1e-05
          %v782 = vadd.f32 %v750, 1e-05
          %v783 = vadd.f32 %v751, 1e-05
          %v784 = vadd.f32 %v752, 1e-05
          %v785 = vadd.f32 %v753, 1e-05
          %v786 = vadd.f32 %v754, 1e-05
          %v787 = vadd.f32 %v755, 1e-05
          %v788 = vadd.f32 %v756, 1e-05
          %v789 = vadd.f32 %v757, 1e-05
          %v790 = vadd.f32 %v758, 1e-05
          %v791 = vadd.f32 %v759, 1e-05
          %v792 = vadd.f32 %v760, 1e-05
          %v793 = vrsqrt.pop %v761
          %v794 = vrsqrt.pop %v762
          %v795 = vrsqrt.pop %v763
          %v796 = vrsqrt.pop %v764
          %v797 = vrsqrt.pop %v765
          %v798 = vrsqrt.pop %v766
          %v799 = vrsqrt.pop %v767
          %v800 = vrsqrt.pop %v768
          %v801 = vrsqrt.pop %v769
          %v802 = vrsqrt.pop %v770
          %v803 = vrsqrt.pop %v771
          %v804 = vrsqrt.pop %v772
          %v805 = vrsqrt.pop %v773
          %v806 = vrsqrt.pop %v774
          %v807 = vrsqrt.pop %v775
          %v808 = vrsqrt.pop %v776
          %v809 = vrsqrt.pop %v777
          %v810 = vrsqrt.pop %v778
          %v811 = vrsqrt.pop %v779
          %v812 = vrsqrt.pop %v780
          %v813 = vrsqrt.pop %v781
          %v814 = vrsqrt.pop %v782
          %v815 = vrsqrt.pop %v783
          %v816 = vrsqrt.pop %v784
          %v817 = vrsqrt.pop %v785
          %v818 = vrsqrt.pop %v786
          %v819 = vrsqrt.pop %v787
          %v820 = vrsqrt.pop %v788
          %v821 = vrsqrt.pop %v789
          %v822 = vrsqrt.pop %v790
          %v823 = vrsqrt.pop %v791
          %v824 = vrsqrt.pop %v792
          %v825 = vmul.f32 %v601, %v793
          %v826 = vmul.f32 %v602, %v794
          %v827 = vmul.f32 %v603, %v795
          %v828 = vmul.f32 %v604, %v796
          %v829 = vmul.f32 %v605, %v797
          %v830 = vmul.f32 %v606, %v798
          %v831 = vmul.f32 %v607, %v799
          %v832 = vmul.f32 %v608, %v800
          %v833 = vmul.f32 %v609, %v801
          %v834 = vmul.f32 %v610, %v802
          %v835 = vmul.f32 %v611, %v803
          %v836 = vmul.f32 %v612, %v804
          %v837 = vmul.f32 %v613, %v805
          %v838 = vmul.f32 %v614, %v806
          %v839 = vmul.f32 %v615, %v807
          %v840 = vmul.f32 %v616, %v808
          %v841 = vmul.f32 %v617, %v809
          %v842 = vmul.f32 %v618, %v810
          %v843 = vmul.f32 %v619, %v811
          %v844 = vmul.f32 %v620, %v812
          %v845 = vmul.f32 %v621, %v813
          %v846 = vmul.f32 %v622, %v814
          %v847 = vmul.f32 %v623, %v815
          %v848 = vmul.f32 %v624, %v816
          %v849 = vmul.f32 %v625, %v817
          %v850 = vmul.f32 %v626, %v818
          %v851 = vmul.f32 %v627, %v819
          %v852 = vmul.f32 %v628, %v820
          %v853 = vmul.f32 %v629, %v821
          %v854 = vmul.f32 %v630, %v822
          %v855 = vmul.f32 %v631, %v823
          %v856 = vmul.f32 %v632, %v824
          %v858 = vlaneseq
          %v859 = vshrl.u32 %v858, 7
          %v860 = vsub.s32 0, %v859
          %v861 = vrot.slane %v470, %v860
          %v863 = vmul.f32 %v825, %v861
          %v864 = vmul.f32 %v826, %v861
          %v865 = vmul.f32 %v827, %v861
          %v866 = vmul.f32 %v828, %v861
          %v867 = vmul.f32 %v829, %v861
          %v868 = vmul.f32 %v830, %v861
          %v869 = vmul.f32 %v831, %v861
          %v870 = vmul.f32 %v832, %v861
          %v871 = vmul.f32 %v833, %v861
          %v872 = vmul.f32 %v834, %v861
          %v873 = vmul.f32 %v835, %v861
          %v874 = vmul.f32 %v836, %v861
          %v875 = vmul.f32 %v837, %v861
          %v876 = vmul.f32 %v838, %v861
          %v877 = vmul.f32 %v839, %v861
          %v878 = vmul.f32 %v840, %v861
          %v879 = vmul.f32 %v841, %v861
          %v880 = vmul.f32 %v842, %v861
          %v881 = vmul.f32 %v843, %v861
          %v882 = vmul.f32 %v844, %v861
          %v883 = vmul.f32 %v845, %v861
          %v884 = vmul.f32 %v846, %v861
          %v885 = vmul.f32 %v847, %v861
          %v886 = vmul.f32 %v848, %v861
          %v887 = vmul.f32 %v849, %v861
          %v888 = vmul.f32 %v850, %v861
          %v889 = vmul.f32 %v851, %v861
          %v890 = vmul.f32 %v852, %v861
          %v891 = vmul.f32 %v853, %v861
          %v892 = vmul.f32 %v854, %v861
          %v893 = vmul.f32 %v855, %v861
          %v894 = vmul.f32 %v856, %v861
          %v896 = vlaneseq
          %v897 = vshrl.u32 %v896, 7
          %v898 = vsub.s32 0, %v897
          %v899 = vrot.slane %v471, %v898
          %v901 = vadd.f32 %v863, %v899
          %v902 = vadd.f32 %v864, %v899
          %v903 = vadd.f32 %v865, %v899
          %v904 = vadd.f32 %v866, %v899
          %v905 = vadd.f32 %v867, %v899
          %v906 = vadd.f32 %v868, %v899
          %v907 = vadd.f32 %v869, %v899
          %v908 = vadd.f32 %v870, %v899
          %v909 = vadd.f32 %v871, %v899
          %v910 = vadd.f32 %v872, %v899
          %v911 = vadd.f32 %v873, %v899
          %v912 = vadd.f32 %v874, %v899
          %v913 = vadd.f32 %v875, %v899
          %v914 = vadd.f32 %v876, %v899
          %v915 = vadd.f32 %v877, %v899
          %v916 = vadd.f32 %v878, %v899
          %v917 = vadd.f32 %v879, %v899
          %v918 = vadd.f32 %v880, %v899
          %v919 = vadd.f32 %v881, %v899
          %v920 = vadd.f32 %v882, %v899
          %v921 = vadd.f32 %v883, %v899
          %v922 = vadd.f32 %v884, %v899
          %v923 = vadd.f32 %v885, %v899
          %v924 = vadd.f32 %v886, %v899
          %v925 = vadd.f32 %v887, %v899
          %v926 = vadd.f32 %v888, %v899
          %v927 = vadd.f32 %v889, %v899
          %v928 = vadd.f32 %v890, %v899
          %v929 = vadd.f32 %v891, %v899
          %v930 = vadd.f32 %v892, %v899
          %v931 = vadd.f32 %v893, %v899
          %v932 = vadd.f32 %v894, %v899
          %v933 = vpack.c.bf16 %v902, %v901
          %v934 = vpack.c.bf16 %v904, %v903
          %v935 = vpack.c.bf16 %v906, %v905
          %v936 = vpack.c.bf16 %v908, %v907
          %v937 = vpack.c.bf16 %v910, %v909
          %v938 = vpack.c.bf16 %v912, %v911
          %v939 = vpack.c.bf16 %v914, %v913
          %v940 = vpack.c.bf16 %v916, %v915
          %v941 = vpack.c.bf16 %v918, %v917
          %v942 = vpack.c.bf16 %v920, %v919
          %v943 = vpack.c.bf16 %v922, %v921
          %v944 = vpack.c.bf16 %v924, %v923
          %v945 = vpack.c.bf16 %v926, %v925
          %v946 = vpack.c.bf16 %v928, %v927
          %v947 = vpack.c.bf16 %v930, %v929
          %v948 = vpack.c.bf16 %v932, %v931
          %949 = vst [vmem:[#allocation2] sm:$0xff] %v933
          %950 = vst [vmem:[#allocation2 + $0x8] sm:$0xff] %v934
          %951 = vst [vmem:[#allocation2 + $0x10] sm:$0xff] %v935
          %952 = vst [vmem:[#allocation2 + $0x18] sm:$0xff] %v936
          %953 = vst [vmem:[#allocation2 + $0x20] sm:$0xff] %v937
          %954 = vst [vmem:[#allocation2 + $0x28] sm:$0xff] %v938
          %955 = vst [vmem:[#allocation2 + $0x30] sm:$0xff] %v939
          %956 = vst [vmem:[#allocation2 + $0x38] sm:$0xff] %v940
          %957 = vst [vmem:[#allocation2 + $0x40] sm:$0xff] %v941
          %958 = vst [vmem:[#allocation2 + $0x48] sm:$0xff] %v942
          %959 = vst [vmem:[#allocation2 + $0x50] sm:$0xff] %v943
          %960 = vst [vmem:[#allocation2 + $0x58] sm:$0xff] %v944
          %961 = vst [vmem:[#allocation2 + $0x60] sm:$0xff] %v945
          %962 = vst [vmem:[#allocation2 + $0x68] sm:$0xff] %v946
          %963 = vst [vmem:[#allocation2 + $0x70] sm:$0xff] %v947
          %964 = vst [vmem:[#allocation2 + $0x78] sm:$0xff] %v948
          %965 = vst [vmem:[#allocation3] sm:$0xff] 0.0
          %966 = vst [vmem:[#allocation3 + $0x8] sm:$0xff] 0.0
          %967 = vst [vmem:[#allocation3 + $0x10] sm:$0xff] 0.0
          %968 = vst [vmem:[#allocation3 + $0x18] sm:$0xff] 0.0
          %969 = vst [vmem:[#allocation3 + $0x20] sm:$0xff] 0.0
          %970 = vst [vmem:[#allocation3 + $0x28] sm:$0xff] 0.0
          %971 = vst [vmem:[#allocation3 + $0x30] sm:$0xff] 0.0
          %972 = vst [vmem:[#allocation3 + $0x38] sm:$0xff] 0.0
          %973 = vst [vmem:[#allocation3 + $0x40] sm:$0xff] 0.0
          %974 = vst [vmem:[#allocation3 + $0x48] sm:$0xff] 0.0
          %975 = vst [vmem:[#allocation3 + $0x50] sm:$0xff] 0.0
          %976 = vst [vmem:[#allocation3 + $0x58] sm:$0xff] 0.0
          %977 = vst [vmem:[#allocation3 + $0x60] sm:$0xff] 0.0
          %978 = vst [vmem:[#allocation3 + $0x68] sm:$0xff] 0.0
          %979 = vst [vmem:[#allocation3 + $0x70] sm:$0xff] 0.0
          %980 = vst [vmem:[#allocation3 + $0x78] sm:$0xff] 0.0
          %981 = vst [vmem:[#allocation3 + $0x80] sm:$0xff] 0.0
          %982 = vst [vmem:[#allocation3 + $0x88] sm:$0xff] 0.0
          %983 = vst [vmem:[#allocation3 + $0x90] sm:$0xff] 0.0
          %984 = vst [vmem:[#allocation3 + $0x98] sm:$0xff] 0.0
          %985 = vst [vmem:[#allocation3 + $0xa0] sm:$0xff] 0.0
          %986 = vst [vmem:[#allocation3 + $0xa8] sm:$0xff] 0.0
          %987 = vst [vmem:[#allocation3 + $0xb0] sm:$0xff] 0.0
          %988 = vst [vmem:[#allocation3 + $0xb8] sm:$0xff] 0.0
          %989 = vst [vmem:[#allocation3 + $0xc0] sm:$0xff] 0.0
          %990 = vst [vmem:[#allocation3 + $0xc8] sm:$0xff] 0.0
          %991 = vst [vmem:[#allocation3 + $0xd0] sm:$0xff] 0.0
          %992 = vst [vmem:[#allocation3 + $0xd8] sm:$0xff] 0.0
          %993 = vst [vmem:[#allocation3 + $0xe0] sm:$0xff] 0.0
          %994 = vst [vmem:[#allocation3 + $0xe8] sm:$0xff] 0.0
          %995 = vst [vmem:[#allocation3 + $0xf0] sm:$0xff] 0.0
          %996 = vst [vmem:[#allocation3 + $0xf8] sm:$0xff] 0.0
          %vm997 = vcmask 7168
          %998 = vst.msk [vmem:[#allocation4] sm:$0xff] %vm997, 0.0
          %999 = vst.msk [vmem:[#allocation4 + $0x8] sm:$0xff] %vm997, 0.0
          %1000 = vst.msk [vmem:[#allocation4 + $0x10] sm:$0xff] %vm997, 0.0
          %1001 = vst.msk [vmem:[#allocation4 + $0x18] sm:$0xff] %vm997, 0.0
          %1002 = vst.msk [vmem:[#allocation4 + $0x20] sm:$0xff] %vm997, 0.0
          %1003 = vst.msk [vmem:[#allocation4 + $0x28] sm:$0xff] %vm997, 0.0
          %1004 = vst.msk [vmem:[#allocation4 + $0x30] sm:$0xff] %vm997, 0.0
          %1005 = vst.msk [vmem:[#allocation4 + $0x38] sm:$0xff] %vm997, 0.0
          %1006 = vst.msk [vmem:[#allocation4 + $0x40] sm:$0xff] %vm997, 0.0
          %1007 = vst.msk [vmem:[#allocation4 + $0x48] sm:$0xff] %vm997, 0.0
          %1008 = vst.msk [vmem:[#allocation4 + $0x50] sm:$0xff] %vm997, 0.0
          %1009 = vst.msk [vmem:[#allocation4 + $0x58] sm:$0xff] %vm997, 0.0
          %1010 = vst.msk [vmem:[#allocation4 + $0x60] sm:$0xff] %vm997, 0.0
          %1011 = vst.msk [vmem:[#allocation4 + $0x68] sm:$0xff] %vm997, 0.0
          %1012 = vst.msk [vmem:[#allocation4 + $0x70] sm:$0xff] %vm997, 0.0
          %1013 = vst.msk [vmem:[#allocation4 + $0x78] sm:$0xff] %vm997, 0.0
          %1014 = vst.msk [vmem:[#allocation4 + $0x80] sm:$0xff] %vm997, 0.0
          %1015 = vst.msk [vmem:[#allocation4 + $0x88] sm:$0xff] %vm997, 0.0
          %1016 = vst.msk [vmem:[#allocation4 + $0x90] sm:$0xff] %vm997, 0.0
          %1017 = vst.msk [vmem:[#allocation4 + $0x98] sm:$0xff] %vm997, 0.0
          %1018 = vst.msk [vmem:[#allocation4 + $0xa0] sm:$0xff] %vm997, 0.0
          %1019 = vst.msk [vmem:[#allocation4 + $0xa8] sm:$0xff] %vm997, 0.0
          %1020 = vst.msk [vmem:[#allocation4 + $0xb0] sm:$0xff] %vm997, 0.0
          %1021 = vst.msk [vmem:[#allocation4 + $0xb8] sm:$0xff] %vm997, 0.0
          %1022 = vst.msk [vmem:[#allocation4 + $0xc0] sm:$0xff] %vm997, 0.0
          %1023 = vst.msk [vmem:[#allocation4 + $0xc8] sm:$0xff] %vm997, 0.0
          %1024 = vst.msk [vmem:[#allocation4 + $0xd0] sm:$0xff] %vm997, 0.0
          %1025 = vst.msk [vmem:[#allocation4 + $0xd8] sm:$0xff] %vm997, 0.0
          %1026 = vst.msk [vmem:[#allocation4 + $0xe0] sm:$0xff] %vm997, 0.0
          %1027 = vst.msk [vmem:[#allocation4 + $0xe8] sm:$0xff] %vm997, 0.0
          %1028 = vst.msk [vmem:[#allocation4 + $0xf0] sm:$0xff] %vm997, 0.0
          %1029 = vst.msk [vmem:[#allocation4 + $0xf8] sm:$0xff] %vm997, 0.0
          %1030 = vst.msk [vmem:[#allocation5] sm:$0xff] %vm997, 0.0
          %1031 = vst.msk [vmem:[#allocation5 + $0x8] sm:$0xff] %vm997, 0.0
          %1032 = vst.msk [vmem:[#allocation5 + $0x10] sm:$0xff] %vm997, 0.0
          %1033 = vst.msk [vmem:[#allocation5 + $0x18] sm:$0xff] %vm997, 0.0
          %1034 = vst.msk [vmem:[#allocation5 + $0x20] sm:$0xff] %vm997, 0.0
          %1035 = vst.msk [vmem:[#allocation5 + $0x28] sm:$0xff] %vm997, 0.0
          %1036 = vst.msk [vmem:[#allocation5 + $0x30] sm:$0xff] %vm997, 0.0
          %1037 = vst.msk [vmem:[#allocation5 + $0x38] sm:$0xff] %vm997, 0.0
          %1038 = vst.msk [vmem:[#allocation5 + $0x40] sm:$0xff] %vm997, 0.0
          %1039 = vst.msk [vmem:[#allocation5 + $0x48] sm:$0xff] %vm997, 0.0
          %1040 = vst.msk [vmem:[#allocation5 + $0x50] sm:$0xff] %vm997, 0.0
          %1041 = vst.msk [vmem:[#allocation5 + $0x58] sm:$0xff] %vm997, 0.0
          %1042 = vst.msk [vmem:[#allocation5 + $0x60] sm:$0xff] %vm997, 0.0
          %1043 = vst.msk [vmem:[#allocation5 + $0x68] sm:$0xff] %vm997, 0.0
          %1044 = vst.msk [vmem:[#allocation5 + $0x70] sm:$0xff] %vm997, 0.0
          %1045 = vst.msk [vmem:[#allocation5 + $0x78] sm:$0xff] %vm997, 0.0
          %1046 = vst.msk [vmem:[#allocation5 + $0x80] sm:$0xff] %vm997, 0.0
          %1047 = vst.msk [vmem:[#allocation5 + $0x88] sm:$0xff] %vm997, 0.0
          %1048 = vst.msk [vmem:[#allocation5 + $0x90] sm:$0xff] %vm997, 0.0
          %1049 = vst.msk [vmem:[#allocation5 + $0x98] sm:$0xff] %vm997, 0.0
          %1050 = vst.msk [vmem:[#allocation5 + $0xa0] sm:$0xff] %vm997, 0.0
          %1051 = vst.msk [vmem:[#allocation5 + $0xa8] sm:$0xff] %vm997, 0.0
          %1052 = vst.msk [vmem:[#allocation5 + $0xb0] sm:$0xff] %vm997, 0.0
          %1053 = vst.msk [vmem:[#allocation5 + $0xb8] sm:$0xff] %vm997, 0.0
          %1054 = vst.msk [vmem:[#allocation5 + $0xc0] sm:$0xff] %vm997, 0.0
          %1055 = vst.msk [vmem:[#allocation5 + $0xc8] sm:$0xff] %vm997, 0.0
          %1056 = vst.msk [vmem:[#allocation5 + $0xd0] sm:$0xff] %vm997, 0.0
          %1057 = vst.msk [vmem:[#allocation5 + $0xd8] sm:$0xff] %vm997, 0.0
          %1058 = vst.msk [vmem:[#allocation5 + $0xe0] sm:$0xff] %vm997, 0.0
          %1059 = vst.msk [vmem:[#allocation5 + $0xe8] sm:$0xff] %vm997, 0.0
          %1060 = vst.msk [vmem:[#allocation5 + $0xf0] sm:$0xff] %vm997, 0.0
          %1061 = vst.msk [vmem:[#allocation5 + $0xf8] sm:$0xff] %vm997, 0.0
        $region79: #{glu_forward.1} parent=70 // pred_fallthru
          _
        %v1062 = vld [vmem:[#allocation2] sm:$0xff]
        %v1063 = vld [vmem:[#allocation2 + $0x8] sm:$0xff]
        %v1064 = vld [vmem:[#allocation2 + $0x10] sm:$0xff]
        %v1065 = vld [vmem:[#allocation2 + $0x18] sm:$0xff]
        %v1066 = vld [vmem:[#allocation2 + $0x20] sm:$0xff]
        %v1067 = vld [vmem:[#allocation2 + $0x28] sm:$0xff]
        %v1068 = vld [vmem:[#allocation2 + $0x30] sm:$0xff]
        %v1069 = vld [vmem:[#allocation2 + $0x38] sm:$0xff]
        %v1070 = vld [vmem:[#allocation2 + $0x40] sm:$0xff]
        %v1071 = vld [vmem:[#allocation2 + $0x48] sm:$0xff]
        %v1072 = vld [vmem:[#allocation2 + $0x50] sm:$0xff]
        %v1073 = vld [vmem:[#allocation2 + $0x58] sm:$0xff]
        %v1074 = vld [vmem:[#allocation2 + $0x60] sm:$0xff]
        %v1075 = vld [vmem:[#allocation2 + $0x68] sm:$0xff]
        %v1076 = vld [vmem:[#allocation2 + $0x70] sm:$0xff]
        %v1077 = vld [vmem:[#allocation2 + $0x78] sm:$0xff]
        %v1078 = vld [vmem:[%s396] sm:$0xff]
        %v1079 = vld [vmem:[%s396 + $0x8] sm:$0xff]
        %v1080 = vld [vmem:[%s396 + $0x10] sm:$0xff]
        %v1081 = vld [vmem:[%s396 + $0x18] sm:$0xff]
        %v1082 = vld [vmem:[%s396 + $0x20] sm:$0xff]
        %v1083 = vld [vmem:[%s396 + $0x28] sm:$0xff]
        %v1084 = vld [vmem:[%s396 + $0x30] sm:$0xff]
        %v1085 = vld [vmem:[%s396 + $0x38] sm:$0xff]
        %v1086 = vld [vmem:[%s396 + $0x40] sm:$0xff]
        %v1087 = vld [vmem:[%s396 + $0x48] sm:$0xff]
        %v1088 = vld [vmem:[%s396 + $0x50] sm:$0xff]
        %v1089 = vld [vmem:[%s396 + $0x58] sm:$0xff]
        %v1090 = vld [vmem:[%s396 + $0x60] sm:$0xff]
        %v1091 = vld [vmem:[%s396 + $0x68] sm:$0xff]
        %v1092 = vld [vmem:[%s396 + $0x70] sm:$0xff]
        %v1093 = vld [vmem:[%s396 + $0x78] sm:$0xff]
        %v1094 = vld [vmem:[%s396 + $0x80] sm:$0xff]
        %v1095 = vld [vmem:[%s396 + $0x88] sm:$0xff]
        %v1096 = vld [vmem:[%s396 + $0x90] sm:$0xff]
        %v1097 = vld [vmem:[%s396 + $0x98] sm:$0xff]
        %v1098 = vld [vmem:[%s396 + $0xa0] sm:$0xff]
        %v1099 = vld [vmem:[%s396 + $0xa8] sm:$0xff]
        %v1100 = vld [vmem:[%s396 + $0xb0] sm:$0xff]
        %v1101 = vld [vmem:[%s396 + $0xb8] sm:$0xff]
        %v1102 = vld [vmem:[%s396 + $0xc0] sm:$0xff]
        %v1103 = vld [vmem:[%s396 + $0xc8] sm:$0xff]
        %v1104 = vld [vmem:[%s396 + $0xd0] sm:$0xff]
        %v1105 = vld [vmem:[%s396 + $0xd8] sm:$0xff]
        %v1106 = vld [vmem:[%s396 + $0xe0] sm:$0xff]
        %v1107 = vld [vmem:[%s396 + $0xe8] sm:$0xff]
        %v1108 = vld [vmem:[%s396 + $0xf0] sm:$0xff]
        %v1109 = vld [vmem:[%s396 + $0xf8] sm:$0xff]
        %v1142 = vunpack.c.l.b16 %v1078
        %v1143 = vunpack.c.h.b16 %v1078
        %v1144 = vunpack.c.l.b16 %v1079
        %v1145 = vunpack.c.h.b16 %v1079
        %v1146 = vunpack.c.l.b16 %v1080
        %v1147 = vunpack.c.h.b16 %v1080
        %v1148 = vunpack.c.l.b16 %v1081
        %v1149 = vunpack.c.h.b16 %v1081
        %v1150 = vunpack.c.l.b16 %v1082
        %v1151 = vunpack.c.h.b16 %v1082
        %v1152 = vunpack.c.l.b16 %v1083
        %v1153 = vunpack.c.h.b16 %v1083
        %v1154 = vunpack.c.l.b16 %v1084
        %v1155 = vunpack.c.h.b16 %v1084
        %v1156 = vunpack.c.l.b16 %v1085
        %v1157 = vunpack.c.h.b16 %v1085
        %v1158 = vunpack.c.l.b16 %v1086
        %v1159 = vunpack.c.h.b16 %v1086
        %v1160 = vunpack.c.l.b16 %v1087
        %v1161 = vunpack.c.h.b16 %v1087
        %v1162 = vunpack.c.l.b16 %v1088
        %v1163 = vunpack.c.h.b16 %v1088
        %v1164 = vunpack.c.l.b16 %v1089
        %v1165 = vunpack.c.h.b16 %v1089
        %v1166 = vunpack.c.l.b16 %v1090
        %v1167 = vunpack.c.h.b16 %v1090
        %v1168 = vunpack.c.l.b16 %v1091
        %v1169 = vunpack.c.h.b16 %v1091
        %v1170 = vunpack.c.l.b16 %v1092
        %v1171 = vunpack.c.h.b16 %v1092
        %v1172 = vunpack.c.l.b16 %v1093
        %v1173 = vunpack.c.h.b16 %v1093
        %v1174 = vunpack.c.l.b16 %v1094
        %v1175 = vunpack.c.h.b16 %v1094
        %v1176 = vunpack.c.l.b16 %v1095
        %v1177 = vunpack.c.h.b16 %v1095
        %v1178 = vunpack.c.l.b16 %v1096
        %v1179 = vunpack.c.h.b16 %v1096
        %v1180 = vunpack.c.l.b16 %v1097
        %v1181 = vunpack.c.h.b16 %v1097
        %v1182 = vunpack.c.l.b16 %v1098
        %v1183 = vunpack.c.h.b16 %v1098
        %v1184 = vunpack.c.l.b16 %v1099
        %v1185 = vunpack.c.h.b16 %v1099
        %v1186 = vunpack.c.l.b16 %v1100
        %v1187 = vunpack.c.h.b16 %v1100
        %v1188 = vunpack.c.l.b16 %v1101
        %v1189 = vunpack.c.h.b16 %v1101
        %v1190 = vunpack.c.l.b16 %v1102
        %v1191 = vunpack.c.h.b16 %v1102
        %v1192 = vunpack.c.l.b16 %v1103
        %v1193 = vunpack.c.h.b16 %v1103
        %v1194 = vunpack.c.l.b16 %v1104
        %v1195 = vunpack.c.h.b16 %v1104
        %v1196 = vunpack.c.l.b16 %v1105
        %v1197 = vunpack.c.h.b16 %v1105
        %v1198 = vunpack.c.l.b16 %v1106
        %v1199 = vunpack.c.h.b16 %v1106
        %v1200 = vunpack.c.l.b16 %v1107
        %v1201 = vunpack.c.h.b16 %v1107
        %v1202 = vunpack.c.l.b16 %v1108
        %v1203 = vunpack.c.h.b16 %v1108
        %v1204 = vunpack.c.l.b16 %v1109
        %v1205 = vunpack.c.h.b16 %v1109
        %v1206 = vpack.c.b16 %v1146, %v1142
        %v1207 = vpack.c.b16 %v1147, %v1143
        %v1208 = vpack.c.b16 %v1148, %v1144
        %v1209 = vpack.c.b16 %v1149, %v1145
        %v1210 = vpack.c.b16 %v1154, %v1150
        %v1211 = vpack.c.b16 %v1155, %v1151
        %v1212 = vpack.c.b16 %v1156, %v1152
        %v1213 = vpack.c.b16 %v1157, %v1153
        %v1214 = vpack.c.b16 %v1162, %v1158
        %v1215 = vpack.c.b16 %v1163, %v1159
        %v1216 = vpack.c.b16 %v1164, %v1160
        %v1217 = vpack.c.b16 %v1165, %v1161
        %v1218 = vpack.c.b16 %v1170, %v1166
        %v1219 = vpack.c.b16 %v1171, %v1167
        %v1220 = vpack.c.b16 %v1172, %v1168
        %v1221 = vpack.c.b16 %v1173, %v1169
        %v1222 = vpack.c.b16 %v1178, %v1174
        %v1223 = vpack.c.b16 %v1179, %v1175
        %v1224 = vpack.c.b16 %v1180, %v1176
        %v1225 = vpack.c.b16 %v1181, %v1177
        %v1226 = vpack.c.b16 %v1186, %v1182
        %v1227 = vpack.c.b16 %v1187, %v1183
        %v1228 = vpack.c.b16 %v1188, %v1184
        %v1229 = vpack.c.b16 %v1189, %v1185
        %v1230 = vpack.c.b16 %v1194, %v1190
        %v1231 = vpack.c.b16 %v1195, %v1191
        %v1232 = vpack.c.b16 %v1196, %v1192
        %v1233 = vpack.c.b16 %v1197, %v1193
        %v1234 = vpack.c.b16 %v1202, %v1198
        %v1235 = vpack.c.b16 %v1203, %v1199
        %v1236 = vpack.c.b16 %v1204, %v1200
        %v1237 = vpack.c.b16 %v1205, %v1201
        %1270 = vmatprep.subr.bf16.mxu0 %v1207
        %1271 = vmatpush1.bf16.msra.mxu0 %v1206
        %1272 = vmatprep.subr.bf16.mxu0 %v1211
        %1273 = vmatpush1.bf16.msra.mxu0 %v1210
        %1274 = vmatprep.subr.bf16.mxu0 %v1215
        %1275 = vmatpush1.bf16.msra.mxu0 %v1214
        %1276 = vmatprep.subr.bf16.mxu0 %v1219
        %1277 = vmatpush1.bf16.msra.mxu0 %v1218
        %1278 = vmatprep.subr.bf16.mxu0 %v1223
        %1279 = vmatpush1.bf16.msra.mxu0 %v1222
        %1280 = vmatprep.subr.bf16.mxu0 %v1227
        %1281 = vmatpush1.bf16.msra.mxu0 %v1226
        %1282 = vmatprep.subr.bf16.mxu0 %v1231
        %1283 = vmatpush1.bf16.msra.mxu0 %v1230
        %1284 = vmatprep.subr.bf16.mxu0 %v1235
        %1285 = vmatpush1.bf16.msra.mxu0 %v1234
        %1286 = vmatprep.subr.bf16.mxu0 0
        %1287 = vmatpush1.bf16.msra.mxu0 0
        %1288 = vmatprep.subr.bf16.mxu0 0
        %1289 = vmatpush1.bf16.msra.mxu0 0
        %1290 = vmatprep.subr.bf16.mxu0 0
        %1291 = vmatpush1.bf16.msra.mxu0 0
        %1292 = vmatprep.subr.bf16.mxu0 0
        %1293 = vmatpush1.bf16.msra.mxu0 0
        %1294 = vmatprep.subr.bf16.mxu0 0
        %1295 = vmatpush1.bf16.msra.mxu0 0
        %1296 = vmatprep.subr.bf16.mxu0 0
        %1297 = vmatpush1.bf16.msra.mxu0 0
        %1298 = vmatprep.subr.bf16.mxu0 0
        %1299 = vmatpush1.bf16.msra.mxu0 0
        %1300 = vmatprep.subr.bf16.mxu0 0
        %1301 = vmatpush1.bf16.msra.mxu0 0
        %1302 = vmatprep.mubr.bf16.mxu0 0
        %1303 = vmatmul.mubr.bf16.gmra.mrb[0].mxu0 %v1062
        %v1304 = vpop.f32.mrb[0].mxu0
        %v1305 = vadd.f32 0.0, %v1304
        %v1306 = vpop.f32.mrb[0].mxu0
        %v1307 = vadd.f32 0.0, %v1306
        %v1308 = vpop.f32.mrb[0].mxu0
        %v1309 = vadd.f32 0.0, %v1308
        %v1310 = vpop.f32.mrb[0].mxu0
        %v1311 = vadd.f32 0.0, %v1310
        %1312 = vmatprep.mubr.bf16.mxu0 0
        %1313 = vmatmul.mubr.bf16.gmra.mrb[0].mxu0 %v1063
        %v1314 = vpop.f32.mrb[0].mxu0
        %v1315 = vadd.f32 0.0, %v1314
        %v1316 = vpop.f32.mrb[0].mxu0
        %v1317 = vadd.f32 0.0, %v1316
        %v1318 = vpop.f32.mrb[0].mxu0
        %v1319 = vadd.f32 0.0, %v1318
        %v1320 = vpop.f32.mrb[0].mxu0
        %v1321 = vadd.f32 0.0, %v1320
        %1322 = vmatprep.mubr.bf16.mxu0 0
        %1323 = vmatmul.mubr.bf16.gmra.mrb[0].mxu0 %v1064
        %v1324 = vpop.f32.mrb[0].mxu0
        %v1325 = vadd.f32 0.0, %v1324
        %v1326 = vpop.f32.mrb[0].mxu0
        %v1327 = vadd.f32 0.0, %v1326
        %v1328 = vpop.f32.mrb[0].mxu0
        %v1329 = vadd.f32 0.0, %v1328
        %v1330 = vpop.f32.mrb[0].mxu0
        %v1331 = vadd.f32 0.0, %v1330
        %1332 = vmatprep.mubr.bf16.mxu0 0
        %1333 = vmatmul.mubr.bf16.gmra.mrb[0].mxu0 %v1065
        %v1334 = vpop.f32.mrb[0].mxu0
        %v1335 = vadd.f32 0.0, %v1334
        %v1336 = vpop.f32.mrb[0].mxu0
        %v1337 = vadd.f32 0.0, %v1336
        %v1338 = vpop.f32.mrb[0].mxu0
        %v1339 = vadd.f32 0.0, %v1338
        %v1340 = vpop.f32.mrb[0].mxu0
        %v1341 = vadd.f32 0.0, %v1340
        %1342 = vmatprep.mubr.bf16.mxu0 0
        %1343 = vmatmul.mubr.bf16.gmra.mrb[0].mxu0 %v1066
        %v1344 = vpop.f32.mrb[0].mxu0
        %v1345 = vadd.f32 0.0, %v1344
        %v1346 = vpop.f32.mrb[0].mxu0
        %v1347 = vadd.f32 0.0, %v1346
        %v1348 = vpop.f32.mrb[0].mxu0
        %v1349 = vadd.f32 0.0, %v1348
        %v1350 = vpop.f32.mrb[0].mxu0
        %v1351 = vadd.f32 0.0, %v1350
        %1352 = vmatprep.mubr.bf16.mxu0 0
        %1353 = vmatmul.mubr.bf16.gmra.mrb[0].mxu0 %v1067
        %v1354 = vpop.f32.mrb[0].mxu0
        %v1355 = vadd.f32 0.0, %v1354
        %v1356 = vpop.f32.mrb[0].mxu0
        %v1357 = vadd.f32 0.0, %v1356
        %v1358 = vpop.f32.mrb[0].mxu0
        %v1359 = vadd.f32 0.0, %v1358
        %v1360 = vpop.f32.mrb[0].mxu0
        %v1361 = vadd.f32 0.0, %v1360
        %1362 = vmatprep.mubr.bf16.mxu0 0
        %1363 = vmatmul.mubr.bf16.gmra.mrb[0].mxu0 %v1068
        %v1364 = vpop.f32.mrb[0].mxu0
        %v1365 = vadd.f32 0.0, %v1364
        %v1366 = vpop.f32.mrb[0].mxu0
        %v1367 = vadd.f32 0.0, %v1366
        %v1368 = vpop.f32.mrb[0].mxu0
        %v1369 = vadd.f32 0.0, %v1368
        %v1370 = vpop.f32.mrb[0].mxu0
        %v1371 = vadd.f32 0.0, %v1370
        %1372 = vmatprep.mubr.bf16.mxu0 0
        %1373 = vmatmul.mubr.bf16.gmra.mrb[0].mxu0 %v1069
        %v1374 = vpop.f32.mrb[0].mxu0
        %v1375 = vadd.f32 0.0, %v1374
        %v1376 = vpop.f32.mrb[0].mxu0
        %v1377 = vadd.f32 0.0, %v1376
        %v1378 = vpop.f32.mrb[0].mxu0
        %v1379 = vadd.f32 0.0, %v1378
        %v1380 = vpop.f32.mrb[0].mxu0
        %v1381 = vadd.f32 0.0, %v1380
        %1382 = vmatprep.mubr.bf16.mxu0 0
        %1383 = vmatmul.mubr.bf16.gmra.mrb[0].mxu0 %v1070
        %v1384 = vpop.f32.mrb[0].mxu0
        %v1385 = vadd.f32 0.0, %v1384
        %v1386 = vpop.f32.mrb[0].mxu0
        %v1387 = vadd.f32 0.0, %v1386
        %v1388 = vpop.f32.mrb[0].mxu0
        %v1389 = vadd.f32 0.0, %v1388
        %v1390 = vpop.f32.mrb[0].mxu0
        %v1391 = vadd.f32 0.0, %v1390
        %1392 = vmatprep.mubr.bf16.mxu0 0
        %1393 = vmatmul.mubr.bf16.gmra.mrb[0].mxu0 %v1071
        %v1394 = vpop.f32.mrb[0].mxu0
        %v1395 = vadd.f32 0.0, %v1394
        %v1396 = vpop.f32.mrb[0].mxu0
        %v1397 = vadd.f32 0.0, %v1396
        %v1398 = vpop.f32.mrb[0].mxu0
        %v1399 = vadd.f32 0.0, %v1398
        %v1400 = vpop.f32.mrb[0].mxu0
        %v1401 = vadd.f32 0.0, %v1400
        %1402 = vmatprep.mubr.bf16.mxu0 0
        %1403 = vmatmul.mubr.bf16.gmra.mrb[0].mxu0 %v1072
        %v1404 = vpop.f32.mrb[0].mxu0
        %v1405 = vadd.f32 0.0, %v1404
        %v1406 = vpop.f32.mrb[0].mxu0
        %v1407 = vadd.f32 0.0, %v1406
        %v1408 = vpop.f32.mrb[0].mxu0
        %v1409 = vadd.f32 0.0, %v1408
        %v1410 = vpop.f32.mrb[0].mxu0
        %v1411 = vadd.f32 0.0, %v1410
        %1412 = vmatprep.mubr.bf16.mxu0 0
        %1413 = vmatmul.mubr.bf16.gmra.mrb[0].mxu0 %v1073
        %v1414 = vpop.f32.mrb[0].mxu0
        %v1415 = vadd.f32 0.0, %v1414
        %v1416 = vpop.f32.mrb[0].mxu0
        %v1417 = vadd.f32 0.0, %v1416
        %v1418 = vpop.f32.mrb[0].mxu0
        %v1419 = vadd.f32 0.0, %v1418
        %v1420 = vpop.f32.mrb[0].mxu0
        %v1421 = vadd.f32 0.0, %v1420
        %1422 = vmatprep.mubr.bf16.mxu0 0
        %1423 = vmatmul.mubr.bf16.gmra.mrb[0].mxu0 %v1074
        %v1424 = vpop.f32.mrb[0].mxu0
        %v1425 = vadd.f32 0.0, %v1424
        %v1426 = vpop.f32.mrb[0].mxu0
        %v1427 = vadd.f32 0.0, %v1426
        %v1428 = vpop.f32.mrb[0].mxu0
        %v1429 = vadd.f32 0.0, %v1428
        %v1430 = vpop.f32.mrb[0].mxu0
        %v1431 = vadd.f32 0.0, %v1430
        %1432 = vmatprep.mubr.bf16.mxu0 0
        %1433 = vmatmul.mubr.bf16.gmra.mrb[0].mxu0 %v1075
        %v1434 = vpop.f32.mrb[0].mxu0
        %v1435 = vadd.f32 0.0, %v1434
        %v1436 = vpop.f32.mrb[0].mxu0
        %v1437 = vadd.f32 0.0, %v1436
        %v1438 = vpop.f32.mrb[0].mxu0
        %v1439 = vadd.f32 0.0, %v1438
        %v1440 = vpop.f32.mrb[0].mxu0
        %v1441 = vadd.f32 0.0, %v1440
        %1442 = vmatprep.mubr.bf16.mxu0 0
        %1443 = vmatmul.mubr.bf16.gmra.mrb[0].mxu0 %v1076
        %v1444 = vpop.f32.mrb[0].mxu0
        %v1445 = vadd.f32 0.0, %v1444
        %v1446 = vpop.f32.mrb[0].mxu0
        %v1447 = vadd.f32 0.0, %v1446
        %v1448 = vpop.f32.mrb[0].mxu0
        %v1449 = vadd.f32 0.0, %v1448
        %v1450 = vpop.f32.mrb[0].mxu0
        %v1451 = vadd.f32 0.0, %v1450
        %1452 = vmatprep.mubr.bf16.mxu0 0
        %1453 = vmatmul.mubr.bf16.gmra.mrb[0].mxu0 %v1077
        %v1454 = vpop.f32.mrb[0].mxu0
        %v1455 = vadd.f32 0.0, %v1454
        %v1456 = vpop.f32.mrb[0].mxu0
        %v1457 = vadd.f32 0.0, %v1456
        %v1458 = vpop.f32.mrb[0].mxu0
        %v1459 = vadd.f32 0.0, %v1458
        %v1460 = vpop.f32.mrb[0].mxu0
        %v1461 = vadd.f32 0.0, %v1460
        %1462 = vdwg.mxu0
        %1463 = vmatprep.subr.bf16.mxu0 %v1209
        %1464 = vmatpush1.bf16.msra.mxu0 %v1208
        %1465 = vmatprep.subr.bf16.mxu0 %v1213
        %1466 = vmatpush1.bf16.msra.mxu0 %v1212
        %1467 = vmatprep.subr.bf16.mxu0 %v1217
        %1468 = vmatpush1.bf16.msra.mxu0 %v1216
        %1469 = vmatprep.subr.bf16.mxu0 %v1221
        %1470 = vmatpush1.bf16.msra.mxu0 %v1220
        %1471 = vmatprep.subr.bf16.mxu0 %v1225
        %1472 = vmatpush1.bf16.msra.mxu0 %v1224
        %1473 = vmatprep.subr.bf16.mxu0 %v1229
        %1474 = vmatpush1.bf16.msra.mxu0 %v1228
        %1475 = vmatprep.subr.bf16.mxu0 %v1233
        %1476 = vmatpush1.bf16.msra.mxu0 %v1232
        %1477 = vmatprep.subr.bf16.mxu0 %v1237
        %1478 = vmatpush1.bf16.msra.mxu0 %v1236
        %1479 = vmatprep.subr.bf16.mxu0 0
        %1480 = vmatpush1.bf16.msra.mxu0 0
        %1481 = vmatprep.subr.bf16.mxu0 0
        %1482 = vmatpush1.bf16.msra.mxu0 0
        %1483 = vmatprep.subr.bf16.mxu0 0
        %1484 = vmatpush1.bf16.msra.mxu0 0
        %1485 = vmatprep.subr.bf16.mxu0 0
        %1486 = vmatpush1.bf16.msra.mxu0 0
        %1487 = vmatprep.subr.bf16.mxu0 0
        %1488 = vmatpush1.bf16.msra.mxu0 0
        %1489 = vmatprep.subr.bf16.mxu0 0
        %1490 = vmatpush1.bf16.msra.mxu0 0
        %1491 = vmatprep.subr.bf16.mxu0 0
        %1492 = vmatpush1.bf16.msra.mxu0 0
        %1493 = vmatprep.subr.bf16.mxu0 0
        %1494 = vmatpush1.bf16.msra.mxu0 0
        %1495 = vmatprep.mubr.bf16.mxu0 0
        %1496 = vmatmul.mubr.bf16.gmra.mrb[0].mxu0 %v1062
        %v1497 = vpop.f32.mrb[0].mxu0
        %v1498 = vadd.f32 0.0, %v1497
        %v1499 = vpop.f32.mrb[0].mxu0
        %v1500 = vadd.f32 0.0, %v1499
        %v1501 = vpop.f32.mrb[0].mxu0
        %v1502 = vadd.f32 0.0, %v1501
        %v1503 = vpop.f32.mrb[0].mxu0
        %v1504 = vadd.f32 0.0, %v1503
        %1505 = vmatprep.mubr.bf16.mxu0 0
        %1506 = vmatmul.mubr.bf16.gmra.mrb[0].mxu0 %v1063
        %v1507 = vpop.f32.mrb[0].mxu0
        %v1508 = vadd.f32 0.0, %v1507
        %v1509 = vpop.f32.mrb[0].mxu0
        %v1510 = vadd.f32 0.0, %v1509
        %v1511 = vpop.f32.mrb[0].mxu0
        %v1512 = vadd.f32 0.0, %v1511
        %v1513 = vpop.f32.mrb[0].mxu0
        %v1514 = vadd.f32 0.0, %v1513
        %1515 = vmatprep.mubr.bf16.mxu0 0
        %1516 = vmatmul.mubr.bf16.gmra.mrb[0].mxu0 %v1064
        %v1517 = vpop.f32.mrb[0].mxu0
        %v1518 = vadd.f32 0.0, %v1517
        %v1519 = vpop.f32.mrb[0].mxu0
        %v1520 = vadd.f32 0.0, %v1519
        %v1521 = vpop.f32.mrb[0].mxu0
        %v1522 = vadd.f32 0.0, %v1521
        %v1523 = vpop.f32.mrb[0].mxu0
        %v1524 = vadd.f32 0.0, %v1523
        %1525 = vmatprep.mubr.bf16.mxu0 0
        %1526 = vmatmul.mubr.bf16.gmra.mrb[0].mxu0 %v1065
        %v1527 = vpop.f32.mrb[0].mxu0
        %v1528 = vadd.f32 0.0, %v1527
        %v1529 = vpop.f32.mrb[0].mxu0
        %v1530 = vadd.f32 0.0, %v1529
        %v1531 = vpop.f32.mrb[0].mxu0
        %v1532 = vadd.f32 0.0, %v1531
        %v1533 = vpop.f32.mrb[0].mxu0
        %v1534 = vadd.f32 0.0, %v1533
        %1535 = vmatprep.mubr.bf16.mxu0 0
        %1536 = vmatmul.mubr.bf16.gmra.mrb[0].mxu0 %v1066
        %v1537 = vpop.f32.mrb[0].mxu0
        %v1538 = vadd.f32 0.0, %v1537
        %v1539 = vpop.f32.mrb[0].mxu0
        %v1540 = vadd.f32 0.0, %v1539
        %v1541 = vpop.f32.mrb[0].mxu0
        %v1542 = vadd.f32 0.0, %v1541
        %v1543 = vpop.f32.mrb[0].mxu0
        %v1544 = vadd.f32 0.0, %v1543
        %1545 = vmatprep.mubr.bf16.mxu0 0
        %1546 = vmatmul.mubr.bf16.gmra.mrb[0].mxu0 %v1067
        %v1547 = vpop.f32.mrb[0].mxu0
        %v1548 = vadd.f32 0.0, %v1547
        %v1549 = vpop.f32.mrb[0].mxu0
        %v1550 = vadd.f32 0.0, %v1549
        %v1551 = vpop.f32.mrb[0].mxu0
        %v1552 = vadd.f32 0.0, %v1551
        %v1553 = vpop.f32.mrb[0].mxu0
        %v1554 = vadd.f32 0.0, %v1553
        %1555 = vmatprep.mubr.bf16.mxu0 0
        %1556 = vmatmul.mubr.bf16.gmra.mrb[0].mxu0 %v1068
        %v1557 = vpop.f32.mrb[0].mxu0
        %v1558 = vadd.f32 0.0, %v1557
        %v1559 = vpop.f32.mrb[0].mxu0
        %v1560 = vadd.f32 0.0, %v1559
        %v1561 = vpop.f32.mrb[0].mxu0
        %v1562 = vadd.f32 0.0, %v1561
        %v1563 = vpop.f32.mrb[0].mxu0
        %v1564 = vadd.f32 0.0, %v1563
        %1565 = vmatprep.mubr.bf16.mxu0 0
        %1566 = vmatmul.mubr.bf16.gmra.mrb[0].mxu0 %v1069
        %v1567 = vpop.f32.mrb[0].mxu0
        %v1568 = vadd.f32 0.0, %v1567
        %v1569 = vpop.f32.mrb[0].mxu0
        %v1570 = vadd.f32 0.0, %v1569
        %v1571 = vpop.f32.mrb[0].mxu0
        %v1572 = vadd.f32 0.0, %v1571
        %v1573 = vpop.f32.mrb[0].mxu0
        %v1574 = vadd.f32 0.0, %v1573
        %1575 = vmatprep.mubr.bf16.mxu0 0
        %1576 = vmatmul.mubr.bf16.gmra.mrb[0].mxu0 %v1070
        %v1577 = vpop.f32.mrb[0].mxu0
        %v1578 = vadd.f32 0.0, %v1577
        %v1579 = vpop.f32.mrb[0].mxu0
        %v1580 = vadd.f32 0.0, %v1579
        %v1581 = vpop.f32.mrb[0].mxu0
        %v1582 = vadd.f32 0.0, %v1581
        %v1583 = vpop.f32.mrb[0].mxu0
        %v1584 = vadd.f32 0.0, %v1583
        %1585 = vmatprep.mubr.bf16.mxu0 0
        %1586 = vmatmul.mubr.bf16.gmra.mrb[0].mxu0 %v1071
        %v1587 = vpop.f32.mrb[0].mxu0
        %v1588 = vadd.f32 0.0, %v1587
        %v1589 = vpop.f32.mrb[0].mxu0
        %v1590 = vadd.f32 0.0, %v1589
        %v1591 = vpop.f32.mrb[0].mxu0
        %v1592 = vadd.f32 0.0, %v1591
        %v1593 = vpop.f32.mrb[0].mxu0
        %v1594 = vadd.f32 0.0, %v1593
        %1595 = vmatprep.mubr.bf16.mxu0 0
        %1596 = vmatmul.mubr.bf16.gmra.mrb[0].mxu0 %v1072
        %v1597 = vpop.f32.mrb[0].mxu0
        %v1598 = vadd.f32 0.0, %v1597
        %v1599 = vpop.f32.mrb[0].mxu0
        %v1600 = vadd.f32 0.0, %v1599
        %v1601 = vpop.f32.mrb[0].mxu0
        %v1602 = vadd.f32 0.0, %v1601
        %v1603 = vpop.f32.mrb[0].mxu0
        %v1604 = vadd.f32 0.0, %v1603
        %1605 = vmatprep.mubr.bf16.mxu0 0
        %1606 = vmatmul.mubr.bf16.gmra.mrb[0].mxu0 %v1073
        %v1607 = vpop.f32.mrb[0].mxu0
        %v1608 = vadd.f32 0.0, %v1607
        %v1609 = vpop.f32.mrb[0].mxu0
        %v1610 = vadd.f32 0.0, %v1609
        %v1611 = vpop.f32.mrb[0].mxu0
        %v1612 = vadd.f32 0.0, %v1611
        %v1613 = vpop.f32.mrb[0].mxu0
        %v1614 = vadd.f32 0.0, %v1613
        %1615 = vmatprep.mubr.bf16.mxu0 0
        %1616 = vmatmul.mubr.bf16.gmra.mrb[0].mxu0 %v1074
        %v1617 = vpop.f32.mrb[0].mxu0
        %v1618 = vadd.f32 0.0, %v1617
        %v1619 = vpop.f32.mrb[0].mxu0
        %v1620 = vadd.f32 0.0, %v1619
        %v1621 = vpop.f32.mrb[0].mxu0
        %v1622 = vadd.f32 0.0, %v1621
        %v1623 = vpop.f32.mrb[0].mxu0
        %v1624 = vadd.f32 0.0, %v1623
        %1625 = vmatprep.mubr.bf16.mxu0 0
        %1626 = vmatmul.mubr.bf16.gmra.mrb[0].mxu0 %v1075
        %v1627 = vpop.f32.mrb[0].mxu0
        %v1628 = vadd.f32 0.0, %v1627
        %v1629 = vpop.f32.mrb[0].mxu0
        %v1630 = vadd.f32 0.0, %v1629
        %v1631 = vpop.f32.mrb[0].mxu0
        %v1632 = vadd.f32 0.0, %v1631
        %v1633 = vpop.f32.mrb[0].mxu0
        %v1634 = vadd.f32 0.0, %v1633
        %1635 = vmatprep.mubr.bf16.mxu0 0
        %1636 = vmatmul.mubr.bf16.gmra.mrb[0].mxu0 %v1076
        %v1637 = vpop.f32.mrb[0].mxu0
        %v1638 = vadd.f32 0.0, %v1637
        %v1639 = vpop.f32.mrb[0].mxu0
        %v1640 = vadd.f32 0.0, %v1639
        %v1641 = vpop.f32.mrb[0].mxu0
        %v1642 = vadd.f32 0.0, %v1641
        %v1643 = vpop.f32.mrb[0].mxu0
        %v1644 = vadd.f32 0.0, %v1643
        %1645 = vmatprep.mubr.bf16.mxu0 0
        %1646 = vmatmul.mubr.bf16.gmra.mrb[0].mxu0 %v1077
        %v1647 = vpop.f32.mrb[0].mxu0
        %v1648 = vadd.f32 0.0, %v1647
        %v1649 = vpop.f32.mrb[0].mxu0
        %v1650 = vadd.f32 0.0, %v1649
        %v1651 = vpop.f32.mrb[0].mxu0
        %v1652 = vadd.f32 0.0, %v1651
        %v1653 = vpop.f32.mrb[0].mxu0
        %v1654 = vadd.f32 0.0, %v1653
        %1655 = vdwg.mxu0
        %v1656 = vmul.f32 %v1305, 0.5
        %v1657 = vmul.f32 %v1307, 0.5
        %v1658 = vmul.f32 %v1309, 0.5
        %v1659 = vmul.f32 %v1311, 0.5
        %v1660 = vmul.f32 %v1315, 0.5
        %v1661 = vmul.f32 %v1317, 0.5
        %v1662 = vmul.f32 %v1319, 0.5
        %v1663 = vmul.f32 %v1321, 0.5
        %v1664 = vmul.f32 %v1325, 0.5
        %v1665 = vmul.f32 %v1327, 0.5
        %v1666 = vmul.f32 %v1329, 0.5
        %v1667 = vmul.f32 %v1331, 0.5
        %v1668 = vmul.f32 %v1335, 0.5
        %v1669 = vmul.f32 %v1337, 0.5
        %v1670 = vmul.f32 %v1339, 0.5
        %v1671 = vmul.f32 %v1341, 0.5
        %v1672 = vmul.f32 %v1345, 0.5
        %v1673 = vmul.f32 %v1347, 0.5
        %v1674 = vmul.f32 %v1349, 0.5
        %v1675 = vmul.f32 %v1351, 0.5
        %v1676 = vmul.f32 %v1355, 0.5
        %v1677 = vmul.f32 %v1357, 0.5
        %v1678 = vmul.f32 %v1359, 0.5
        %v1679 = vmul.f32 %v1361, 0.5
        %v1680 = vmul.f32 %v1365, 0.5
        %v1681 = vmul.f32 %v1367, 0.5
        %v1682 = vmul.f32 %v1369, 0.5
        %v1683 = vmul.f32 %v1371, 0.5
        %v1684 = vmul.f32 %v1375, 0.5
        %v1685 = vmul.f32 %v1377, 0.5
        %v1686 = vmul.f32 %v1379, 0.5
        %v1687 = vmul.f32 %v1381, 0.5
        %v1688 = vmul.f32 %v1385, 0.5
        %v1689 = vmul.f32 %v1387, 0.5
        %v1690 = vmul.f32 %v1389, 0.5
        %v1691 = vmul.f32 %v1391, 0.5
        %v1692 = vmul.f32 %v1395, 0.5
        %v1693 = vmul.f32 %v1397, 0.5
        %v1694 = vmul.f32 %v1399, 0.5
        %v1695 = vmul.f32 %v1401, 0.5
        %v1696 = vmul.f32 %v1405, 0.5
        %v1697 = vmul.f32 %v1407, 0.5
        %v1698 = vmul.f32 %v1409, 0.5
        %v1699 = vmul.f32 %v1411, 0.5
        %v1700 = vmul.f32 %v1415, 0.5
        %v1701 = vmul.f32 %v1417, 0.5
        %v1702 = vmul.f32 %v1419, 0.5
        %v1703 = vmul.f32 %v1421, 0.5
        %v1704 = vmul.f32 %v1425, 0.5
        %v1705 = vmul.f32 %v1427, 0.5
        %v1706 = vmul.f32 %v1429, 0.5
        %v1707 = vmul.f32 %v1431, 0.5
        %v1708 = vmul.f32 %v1435, 0.5
        %v1709 = vmul.f32 %v1437, 0.5
        %v1710 = vmul.f32 %v1439, 0.5
        %v1711 = vmul.f32 %v1441, 0.5
        %v1712 = vmul.f32 %v1445, 0.5
        %v1713 = vmul.f32 %v1447, 0.5
        %v1714 = vmul.f32 %v1449, 0.5
        %v1715 = vmul.f32 %v1451, 0.5
        %v1716 = vmul.f32 %v1455, 0.5
        %v1717 = vmul.f32 %v1457, 0.5
        %v1718 = vmul.f32 %v1459, 0.5
        %v1719 = vmul.f32 %v1461, 0.5
        %v1720 = vmul.f32 %v1305, 0.70710677
        %v1721 = vmul.f32 %v1307, 0.70710677
        %v1722 = vmul.f32 %v1309, 0.70710677
        %v1723 = vmul.f32 %v1311, 0.70710677
        %v1724 = vmul.f32 %v1315, 0.70710677
        %v1725 = vmul.f32 %v1317, 0.70710677
        %v1726 = vmul.f32 %v1319, 0.70710677
        %v1727 = vmul.f32 %v1321, 0.70710677
        %v1728 = vmul.f32 %v1325, 0.70710677
        %v1729 = vmul.f32 %v1327, 0.70710677
        %v1730 = vmul.f32 %v1329, 0.70710677
        %v1731 = vmul.f32 %v1331, 0.70710677
        %v1732 = vmul.f32 %v1335, 0.70710677
        %v1733 = vmul.f32 %v1337, 0.70710677
        %v1734 = vmul.f32 %v1339, 0.70710677
        %v1735 = vmul.f32 %v1341, 0.70710677
        %v1736 = vmul.f32 %v1345, 0.70710677
        %v1737 = vmul.f32 %v1347, 0.70710677
        %v1738 = vmul.f32 %v1349, 0.70710677
        %v1739 = vmul.f32 %v1351, 0.70710677
        %v1740 = vmul.f32 %v1355, 0.70710677
        %v1741 = vmul.f32 %v1357, 0.70710677
        %v1742 = vmul.f32 %v1359, 0.70710677
        %v1743 = vmul.f32 %v1361, 0.70710677
        %v1744 = vmul.f32 %v1365, 0.70710677
        %v1745 = vmul.f32 %v1367, 0.70710677
        %v1746 = vmul.f32 %v1369, 0.70710677
        %v1747 = vmul.f32 %v1371, 0.70710677
        %v1748 = vmul.f32 %v1375, 0.70710677
        %v1749 = vmul.f32 %v1377, 0.70710677
        %v1750 = vmul.f32 %v1379, 0.70710677
        %v1751 = vmul.f32 %v1381, 0.70710677
        %v1752 = vmul.f32 %v1385, 0.70710677
        %v1753 = vmul.f32 %v1387, 0.70710677
        %v1754 = vmul.f32 %v1389, 0.70710677
        %v1755 = vmul.f32 %v1391, 0.70710677
        %v1756 = vmul.f32 %v1395, 0.70710677
        %v1757 = vmul.f32 %v1397, 0.70710677
        %v1758 = vmul.f32 %v1399, 0.70710677
        %v1759 = vmul.f32 %v1401, 0.70710677
        %v1760 = vmul.f32 %v1405, 0.70710677
        %v1761 = vmul.f32 %v1407, 0.70710677
        %v1762 = vmul.f32 %v1409, 0.70710677
        %v1763 = vmul.f32 %v1411, 0.70710677
        %v1764 = vmul.f32 %v1415, 0.70710677
        %v1765 = vmul.f32 %v1417, 0.70710677
        %v1766 = vmul.f32 %v1419, 0.70710677
        %v1767 = vmul.f32 %v1421, 0.70710677
        %v1768 = vmul.f32 %v1425, 0.70710677
        %v1769 = vmul.f32 %v1427, 0.70710677
        %v1770 = vmul.f32 %v1429, 0.70710677
        %v1771 = vmul.f32 %v1431, 0.70710677
        %v1772 = vmul.f32 %v1435, 0.70710677
        %v1773 = vmul.f32 %v1437, 0.70710677
        %v1774 = vmul.f32 %v1439, 0.70710677
        %v1775 = vmul.f32 %v1441, 0.70710677
        %v1776 = vmul.f32 %v1445, 0.70710677
        %v1777 = vmul.f32 %v1447, 0.70710677
        %v1778 = vmul.f32 %v1449, 0.70710677
        %v1779 = vmul.f32 %v1451, 0.70710677
        %v1780 = vmul.f32 %v1455, 0.70710677
        %v1781 = vmul.f32 %v1457, 0.70710677
        %v1782 = vmul.f32 %v1459, 0.70710677
        %v1783 = vmul.f32 %v1461, 0.70710677
        %v1784 = verf.f32.pop %v1720
        %v1785 = verf.f32.pop %v1721
        %v1786 = verf.f32.pop %v1722
        %v1787 = verf.f32.pop %v1723
        %v1788 = verf.f32.pop %v1724
        %v1789 = verf.f32.pop %v1725
        %v1790 = verf.f32.pop %v1726
        %v1791 = verf.f32.pop %v1727
        %v1792 = verf.f32.pop %v1728
        %v1793 = verf.f32.pop %v1729
        %v1794 = verf.f32.pop %v1730
        %v1795 = verf.f32.pop %v1731
        %v1796 = verf.f32.pop %v1732
        %v1797 = verf.f32.pop %v1733
        %v1798 = verf.f32.pop %v1734
        %v1799 = verf.f32.pop %v1735
        %v1800 = verf.f32.pop %v1736
        %v1801 = verf.f32.pop %v1737
        %v1802 = verf.f32.pop %v1738
        %v1803 = verf.f32.pop %v1739
        %v1804 = verf.f32.pop %v1740
        %v1805 = verf.f32.pop %v1741
        %v1806 = verf.f32.pop %v1742
        %v1807 = verf.f32.pop %v1743
        %v1808 = verf.f32.pop %v1744
        %v1809 = verf.f32.pop %v1745
        %v1810 = verf.f32.pop %v1746
        %v1811 = verf.f32.pop %v1747
        %v1812 = verf.f32.pop %v1748
        %v1813 = verf.f32.pop %v1749
        %v1814 = verf.f32.pop %v1750
        %v1815 = verf.f32.pop %v1751
        %v1816 = verf.f32.pop %v1752
        %v1817 = verf.f32.pop %v1753
        %v1818 = verf.f32.pop %v1754
        %v1819 = verf.f32.pop %v1755
        %v1820 = verf.f32.pop %v1756
        %v1821 = verf.f32.pop %v1757
        %v1822 = verf.f32.pop %v1758
        %v1823 = verf.f32.pop %v1759
        %v1824 = verf.f32.pop %v1760
        %v1825 = verf.f32.pop %v1761
        %v1826 = verf.f32.pop %v1762
        %v1827 = verf.f32.pop %v1763
        %v1828 = verf.f32.pop %v1764
        %v1829 = verf.f32.pop %v1765
        %v1830 = verf.f32.pop %v1766
        %v1831 = verf.f32.pop %v1767
        %v1832 = verf.f32.pop %v1768
        %v1833 = verf.f32.pop %v1769
        %v1834 = verf.f32.pop %v1770
        %v1835 = verf.f32.pop %v1771
        %v1836 = verf.f32.pop %v1772
        %v1837 = verf.f32.pop %v1773
        %v1838 = verf.f32.pop %v1774
        %v1839 = verf.f32.pop %v1775
        %v1840 = verf.f32.pop %v1776
        %v1841 = verf.f32.pop %v1777
        %v1842 = verf.f32.pop %v1778
        %v1843 = verf.f32.pop %v1779
        %v1844 = verf.f32.pop %v1780
        %v1845 = verf.f32.pop %v1781
        %v1846 = verf.f32.pop %v1782
        %v1847 = verf.f32.pop %v1783
        %v1848 = vadd.f32 %v1784, 1.0
        %v1849 = vadd.f32 %v1785, 1.0
        %v1850 = vadd.f32 %v1786, 1.0
        %v1851 = vadd.f32 %v1787, 1.0
        %v1852 = vadd.f32 %v1788, 1.0
        %v1853 = vadd.f32 %v1789, 1.0
        %v1854 = vadd.f32 %v1790, 1.0
        %v1855 = vadd.f32 %v1791, 1.0
        %v1856 = vadd.f32 %v1792, 1.0
        %v1857 = vadd.f32 %v1793, 1.0
        %v1858 = vadd.f32 %v1794, 1.0
        %v1859 = vadd.f32 %v1795, 1.0
        %v1860 = vadd.f32 %v1796, 1.0
        %v1861 = vadd.f32 %v1797, 1.0
        %v1862 = vadd.f32 %v1798, 1.0
        %v1863 = vadd.f32 %v1799, 1.0
        %v1864 = vadd.f32 %v1800, 1.0
        %v1865 = vadd.f32 %v1801, 1.0
        %v1866 = vadd.f32 %v1802, 1.0
        %v1867 = vadd.f32 %v1803, 1.0
        %v1868 = vadd.f32 %v1804, 1.0
        %v1869 = vadd.f32 %v1805, 1.0
        %v1870 = vadd.f32 %v1806, 1.0
        %v1871 = vadd.f32 %v1807, 1.0
        %v1872 = vadd.f32 %v1808, 1.0
        %v1873 = vadd.f32 %v1809, 1.0
        %v1874 = vadd.f32 %v1810, 1.0
        %v1875 = vadd.f32 %v1811, 1.0
        %v1876 = vadd.f32 %v1812, 1.0
        %v1877 = vadd.f32 %v1813, 1.0
        %v1878 = vadd.f32 %v1814, 1.0
        %v1879 = vadd.f32 %v1815, 1.0
        %v1880 = vadd.f32 %v1816, 1.0
        %v1881 = vadd.f32 %v1817, 1.0
        %v1882 = vadd.f32 %v1818, 1.0
        %v1883 = vadd.f32 %v1819, 1.0
        %v1884 = vadd.f32 %v1820, 1.0
        %v1885 = vadd.f32 %v1821, 1.0
        %v1886 = vadd.f32 %v1822, 1.0
        %v1887 = vadd.f32 %v1823, 1.0
        %v1888 = vadd.f32 %v1824, 1.0
        %v1889 = vadd.f32 %v1825, 1.0
        %v1890 = vadd.f32 %v1826, 1.0
        %v1891 = vadd.f32 %v1827, 1.0
        %v1892 = vadd.f32 %v1828, 1.0
        %v1893 = vadd.f32 %v1829, 1.0
        %v1894 = vadd.f32 %v1830, 1.0
        %v1895 = vadd.f32 %v1831, 1.0
        %v1896 = vadd.f32 %v1832, 1.0
        %v1897 = vadd.f32 %v1833, 1.0
        %v1898 = vadd.f32 %v1834, 1.0
        %v1899 = vadd.f32 %v1835, 1.0
        %v1900 = vadd.f32 %v1836, 1.0
        %v1901 = vadd.f32 %v1837, 1.0
        %v1902 = vadd.f32 %v1838, 1.0
        %v1903 = vadd.f32 %v1839, 1.0
        %v1904 = vadd.f32 %v1840, 1.0
        %v1905 = vadd.f32 %v1841, 1.0
        %v1906 = vadd.f32 %v1842, 1.0
        %v1907 = vadd.f32 %v1843, 1.0
        %v1908 = vadd.f32 %v1844, 1.0
        %v1909 = vadd.f32 %v1845, 1.0
        %v1910 = vadd.f32 %v1846, 1.0
        %v1911 = vadd.f32 %v1847, 1.0
        %v1912 = vmul.f32 %v1656, %v1848
        %v1913 = vmul.f32 %v1657, %v1849
        %v1914 = vmul.f32 %v1658, %v1850
        %v1915 = vmul.f32 %v1659, %v1851
        %v1916 = vmul.f32 %v1660, %v1852
        %v1917 = vmul.f32 %v1661, %v1853
        %v1918 = vmul.f32 %v1662, %v1854
        %v1919 = vmul.f32 %v1663, %v1855
        %v1920 = vmul.f32 %v1664, %v1856
        %v1921 = vmul.f32 %v1665, %v1857
        %v1922 = vmul.f32 %v1666, %v1858
        %v1923 = vmul.f32 %v1667, %v1859
        %v1924 = vmul.f32 %v1668, %v1860
        %v1925 = vmul.f32 %v1669, %v1861
        %v1926 = vmul.f32 %v1670, %v1862
        %v1927 = vmul.f32 %v1671, %v1863
        %v1928 = vmul.f32 %v1672, %v1864
        %v1929 = vmul.f32 %v1673, %v1865
        %v1930 = vmul.f32 %v1674, %v1866
        %v1931 = vmul.f32 %v1675, %v1867
        %v1932 = vmul.f32 %v1676, %v1868
        %v1933 = vmul.f32 %v1677, %v1869
        %v1934 = vmul.f32 %v1678, %v1870
        %v1935 = vmul.f32 %v1679, %v1871
        %v1936 = vmul.f32 %v1680, %v1872
        %v1937 = vmul.f32 %v1681, %v1873
        %v1938 = vmul.f32 %v1682, %v1874
        %v1939 = vmul.f32 %v1683, %v1875
        %v1940 = vmul.f32 %v1684, %v1876
        %v1941 = vmul.f32 %v1685, %v1877
        %v1942 = vmul.f32 %v1686, %v1878
        %v1943 = vmul.f32 %v1687, %v1879
        %v1944 = vmul.f32 %v1688, %v1880
        %v1945 = vmul.f32 %v1689, %v1881
        %v1946 = vmul.f32 %v1690, %v1882
        %v1947 = vmul.f32 %v1691, %v1883
        %v1948 = vmul.f32 %v1692, %v1884
        %v1949 = vmul.f32 %v1693, %v1885
        %v1950 = vmul.f32 %v1694, %v1886
        %v1951 = vmul.f32 %v1695, %v1887
        %v1952 = vmul.f32 %v1696, %v1888
        %v1953 = vmul.f32 %v1697, %v1889
        %v1954 = vmul.f32 %v1698, %v1890
        %v1955 = vmul.f32 %v1699, %v1891
        %v1956 = vmul.f32 %v1700, %v1892
        %v1957 = vmul.f32 %v1701, %v1893
        %v1958 = vmul.f32 %v1702, %v1894
        %v1959 = vmul.f32 %v1703, %v1895
        %v1960 = vmul.f32 %v1704, %v1896
        %v1961 = vmul.f32 %v1705, %v1897
        %v1962 = vmul.f32 %v1706, %v1898
        %v1963 = vmul.f32 %v1707, %v1899
        %v1964 = vmul.f32 %v1708, %v1900
        %v1965 = vmul.f32 %v1709, %v1901
        %v1966 = vmul.f32 %v1710, %v1902
        %v1967 = vmul.f32 %v1711, %v1903
        %v1968 = vmul.f32 %v1712, %v1904
        %v1969 = vmul.f32 %v1713, %v1905
        %v1970 = vmul.f32 %v1714, %v1906
        %v1971 = vmul.f32 %v1715, %v1907
        %v1972 = vmul.f32 %v1716, %v1908
        %v1973 = vmul.f32 %v1717, %v1909
        %v1974 = vmul.f32 %v1718, %v1910
        %v1975 = vmul.f32 %v1719, %v1911
        %v1976 = vmul.f32 %v1912, %v1498
        %v1977 = vmul.f32 %v1913, %v1500
        %v1978 = vmul.f32 %v1914, %v1502
        %v1979 = vmul.f32 %v1915, %v1504
        %v1980 = vmul.f32 %v1916, %v1508
        %v1981 = vmul.f32 %v1917, %v1510
        %v1982 = vmul.f32 %v1918, %v1512
        %v1983 = vmul.f32 %v1919, %v1514
        %v1984 = vmul.f32 %v1920, %v1518
        %v1985 = vmul.f32 %v1921, %v1520
        %v1986 = vmul.f32 %v1922, %v1522
        %v1987 = vmul.f32 %v1923, %v1524
        %v1988 = vmul.f32 %v1924, %v1528
        %v1989 = vmul.f32 %v1925, %v1530
        %v1990 = vmul.f32 %v1926, %v1532
        %v1991 = vmul.f32 %v1927, %v1534
        %v1992 = vmul.f32 %v1928, %v1538
        %v1993 = vmul.f32 %v1929, %v1540
        %v1994 = vmul.f32 %v1930, %v1542
        %v1995 = vmul.f32 %v1931, %v1544
        %v1996 = vmul.f32 %v1932, %v1548
        %v1997 = vmul.f32 %v1933, %v1550
        %v1998 = vmul.f32 %v1934, %v1552
        %v1999 = vmul.f32 %v1935, %v1554
        %v2000 = vmul.f32 %v1936, %v1558
        %v2001 = vmul.f32 %v1937, %v1560
        %v2002 = vmul.f32 %v1938, %v1562
        %v2003 = vmul.f32 %v1939, %v1564
        %v2004 = vmul.f32 %v1940, %v1568
        %v2005 = vmul.f32 %v1941, %v1570
        %v2006 = vmul.f32 %v1942, %v1572
        %v2007 = vmul.f32 %v1943, %v1574
        %v2008 = vmul.f32 %v1944, %v1578
        %v2009 = vmul.f32 %v1945, %v1580
        %v2010 = vmul.f32 %v1946, %v1582
        %v2011 = vmul.f32 %v1947, %v1584
        %v2012 = vmul.f32 %v1948, %v1588
        %v2013 = vmul.f32 %v1949, %v1590
        %v2014 = vmul.f32 %v1950, %v1592
        %v2015 = vmul.f32 %v1951, %v1594
        %v2016 = vmul.f32 %v1952, %v1598
        %v2017 = vmul.f32 %v1953, %v1600
        %v2018 = vmul.f32 %v1954, %v1602
        %v2019 = vmul.f32 %v1955, %v1604
        %v2020 = vmul.f32 %v1956, %v1608
        %v2021 = vmul.f32 %v1957, %v1610
        %v2022 = vmul.f32 %v1958, %v1612
        %v2023 = vmul.f32 %v1959, %v1614
        %v2024 = vmul.f32 %v1960, %v1618
        %v2025 = vmul.f32 %v1961, %v1620
        %v2026 = vmul.f32 %v1962, %v1622
        %v2027 = vmul.f32 %v1963, %v1624
        %v2028 = vmul.f32 %v1964, %v1628
        %v2029 = vmul.f32 %v1965, %v1630
        %v2030 = vmul.f32 %v1966, %v1632
        %v2031 = vmul.f32 %v1967, %v1634
        %v2032 = vmul.f32 %v1968, %v1638
        %v2033 = vmul.f32 %v1969, %v1640
        %v2034 = vmul.f32 %v1970, %v1642
        %v2035 = vmul.f32 %v1971, %v1644
        %v2036 = vmul.f32 %v1972, %v1648
        %v2037 = vmul.f32 %v1973, %v1650
        %v2038 = vmul.f32 %v1974, %v1652
        %v2039 = vmul.f32 %v1975, %v1654
        %v2040 = vld [vmem:[#allocation4] sm:$0xff]
        %v2041 = vld [vmem:[#allocation4 + $0x8] sm:$0xff]
        %v2042 = vld [vmem:[#allocation4 + $0x10] sm:$0xff]
        %v2043 = vld [vmem:[#allocation4 + $0x18] sm:$0xff]
        %v2044 = vld [vmem:[#allocation4 + $0x20] sm:$0xff]
        %v2045 = vld [vmem:[#allocation4 + $0x28] sm:$0xff]
        %v2046 = vld [vmem:[#allocation4 + $0x30] sm:$0xff]
        %v2047 = vld [vmem:[#allocation4 + $0x38] sm:$0xff]
        %v2048 = vld [vmem:[#allocation4 + $0x40] sm:$0xff]
        %v2049 = vld [vmem:[#allocation4 + $0x48] sm:$0xff]
        %v2050 = vld [vmem:[#allocation4 + $0x50] sm:$0xff]
        %v2051 = vld [vmem:[#allocation4 + $0x58] sm:$0xff]
        %v2052 = vld [vmem:[#allocation4 + $0x60] sm:$0xff]
        %v2053 = vld [vmem:[#allocation4 + $0x68] sm:$0xff]
        %v2054 = vld [vmem:[#allocation4 + $0x70] sm:$0xff]
        %v2055 = vld [vmem:[#allocation4 + $0x78] sm:$0xff]
        %v2056 = vld [vmem:[#allocation4 + $0x80] sm:$0xff]
        %v2057 = vld [vmem:[#allocation4 + $0x88] sm:$0xff]
        %v2058 = vld [vmem:[#allocation4 + $0x90] sm:$0xff]
        %v2059 = vld [vmem:[#allocation4 + $0x98] sm:$0xff]
        %v2060 = vld [vmem:[#allocation4 + $0xa0] sm:$0xff]
        %v2061 = vld [vmem:[#allocation4 + $0xa8] sm:$0xff]
        %v2062 = vld [vmem:[#allocation4 + $0xb0] sm:$0xff]
        %v2063 = vld [vmem:[#allocation4 + $0xb8] sm:$0xff]
        %v2064 = vld [vmem:[#allocation4 + $0xc0] sm:$0xff]
        %v2065 = vld [vmem:[#allocation4 + $0xc8] sm:$0xff]
        %v2066 = vld [vmem:[#allocation4 + $0xd0] sm:$0xff]
        %v2067 = vld [vmem:[#allocation4 + $0xd8] sm:$0xff]
        %v2068 = vld [vmem:[#allocation4 + $0xe0] sm:$0xff]
        %v2069 = vld [vmem:[#allocation4 + $0xe8] sm:$0xff]
        %v2070 = vld [vmem:[#allocation4 + $0xf0] sm:$0xff]
        %v2071 = vld [vmem:[#allocation4 + $0xf8] sm:$0xff]
        %v2072 = vadd.f32 %v1976, %v1977
        %2073 = vadd.xlane.f32.xlu0 %v2072
        %v2074 = vpop.xlane.xlu0 %2073
        %v2075 = vadd.f32 %v1978, %v1979
        %2076 = vadd.xlane.f32.xlu0 %v2075
        %v2077 = vpop.xlane.xlu0 %2076
        %v2078 = vadd.f32 %v1980, %v1981
        %2079 = vadd.xlane.f32.xlu0 %v2078
        %v2080 = vpop.xlane.xlu0 %2079
        %v2081 = vadd.f32 %v1982, %v1983
        %2082 = vadd.xlane.f32.xlu0 %v2081
        %v2083 = vpop.xlane.xlu0 %2082
        %v2084 = vadd.f32 %v1984, %v1985
        %2085 = vadd.xlane.f32.xlu0 %v2084
        %v2086 = vpop.xlane.xlu0 %2085
        %v2087 = vadd.f32 %v1986, %v1987
        %2088 = vadd.xlane.f32.xlu0 %v2087
        %v2089 = vpop.xlane.xlu0 %2088
        %v2090 = vadd.f32 %v1988, %v1989
        %2091 = vadd.xlane.f32.xlu0 %v2090
        %v2092 = vpop.xlane.xlu0 %2091
        %v2093 = vadd.f32 %v1990, %v1991
        %2094 = vadd.xlane.f32.xlu0 %v2093
        %v2095 = vpop.xlane.xlu0 %2094
        %v2096 = vadd.f32 %v1992, %v1993
        %2097 = vadd.xlane.f32.xlu0 %v2096
        %v2098 = vpop.xlane.xlu0 %2097
        %v2099 = vadd.f32 %v1994, %v1995
        %2100 = vadd.xlane.f32.xlu0 %v2099
        %v2101 = vpop.xlane.xlu0 %2100
        %v2102 = vadd.f32 %v1996, %v1997
        %2103 = vadd.xlane.f32.xlu0 %v2102
        %v2104 = vpop.xlane.xlu0 %2103
        %v2105 = vadd.f32 %v1998, %v1999
        %2106 = vadd.xlane.f32.xlu0 %v2105
        %v2107 = vpop.xlane.xlu0 %2106
        %v2108 = vadd.f32 %v2000, %v2001
        %2109 = vadd.xlane.f32.xlu0 %v2108
        %v2110 = vpop.xlane.xlu0 %2109
        %v2111 = vadd.f32 %v2002, %v2003
        %2112 = vadd.xlane.f32.xlu0 %v2111
        %v2113 = vpop.xlane.xlu0 %2112
        %v2114 = vadd.f32 %v2004, %v2005
        %2115 = vadd.xlane.f32.xlu0 %v2114
        %v2116 = vpop.xlane.xlu0 %2115
        %v2117 = vadd.f32 %v2006, %v2007
        %2118 = vadd.xlane.f32.xlu0 %v2117
        %v2119 = vpop.xlane.xlu0 %2118
        %v2120 = vadd.f32 %v2008, %v2009
        %2121 = vadd.xlane.f32.xlu0 %v2120
        %v2122 = vpop.xlane.xlu0 %2121
        %v2123 = vadd.f32 %v2010, %v2011
        %2124 = vadd.xlane.f32.xlu0 %v2123
        %v2125 = vpop.xlane.xlu0 %2124
        %v2126 = vadd.f32 %v2012, %v2013
        %2127 = vadd.xlane.f32.xlu0 %v2126
        %v2128 = vpop.xlane.xlu0 %2127
        %v2129 = vadd.f32 %v2014, %v2015
        %2130 = vadd.xlane.f32.xlu0 %v2129
        %v2131 = vpop.xlane.xlu0 %2130
        %v2132 = vadd.f32 %v2016, %v2017
        %2133 = vadd.xlane.f32.xlu0 %v2132
        %v2134 = vpop.xlane.xlu0 %2133
        %v2135 = vadd.f32 %v2018, %v2019
        %2136 = vadd.xlane.f32.xlu0 %v2135
        %v2137 = vpop.xlane.xlu0 %2136
        %v2138 = vadd.f32 %v2020, %v2021
        %2139 = vadd.xlane.f32.xlu0 %v2138
        %v2140 = vpop.xlane.xlu0 %2139
        %v2141 = vadd.f32 %v2022, %v2023
        %2142 = vadd.xlane.f32.xlu0 %v2141
        %v2143 = vpop.xlane.xlu0 %2142
        %v2144 = vadd.f32 %v2024, %v2025
        %2145 = vadd.xlane.f32.xlu0 %v2144
        %v2146 = vpop.xlane.xlu0 %2145
        %v2147 = vadd.f32 %v2026, %v2027
        %2148 = vadd.xlane.f32.xlu0 %v2147
        %v2149 = vpop.xlane.xlu0 %2148
        %v2150 = vadd.f32 %v2028, %v2029
        %2151 = vadd.xlane.f32.xlu0 %v2150
        %v2152 = vpop.xlane.xlu0 %2151
        %v2153 = vadd.f32 %v2030, %v2031
        %2154 = vadd.xlane.f32.xlu0 %v2153
        %v2155 = vpop.xlane.xlu0 %2154
        %v2156 = vadd.f32 %v2032, %v2033
        %2157 = vadd.xlane.f32.xlu0 %v2156
        %v2158 = vpop.xlane.xlu0 %2157
        %v2159 = vadd.f32 %v2034, %v2035
        %2160 = vadd.xlane.f32.xlu0 %v2159
        %v2161 = vpop.xlane.xlu0 %2160
        %v2162 = vadd.f32 %v2036, %v2037
        %2163 = vadd.xlane.f32.xlu0 %v2162
        %v2164 = vpop.xlane.xlu0 %2163
        %v2165 = vadd.f32 %v2038, %v2039
        %2166 = vadd.xlane.f32.xlu0 %v2165
        %v2167 = vpop.xlane.xlu0 %2166
        %v2168 = vadd.f32 %v2040, %v2074
        %v2169 = vadd.f32 %v2041, %v2077
        %v2170 = vadd.f32 %v2042, %v2080
        %v2171 = vadd.f32 %v2043, %v2083
        %v2172 = vadd.f32 %v2044, %v2086
        %v2173 = vadd.f32 %v2045, %v2089
        %v2174 = vadd.f32 %v2046, %v2092
        %v2175 = vadd.f32 %v2047, %v2095
        %v2176 = vadd.f32 %v2048, %v2098
        %v2177 = vadd.f32 %v2049, %v2101
        %v2178 = vadd.f32 %v2050, %v2104
        %v2179 = vadd.f32 %v2051, %v2107
        %v2180 = vadd.f32 %v2052, %v2110
        %v2181 = vadd.f32 %v2053, %v2113
        %v2182 = vadd.f32 %v2054, %v2116
        %v2183 = vadd.f32 %v2055, %v2119
        %v2184 = vadd.f32 %v2056, %v2122
        %v2185 = vadd.f32 %v2057, %v2125
        %v2186 = vadd.f32 %v2058, %v2128
        %v2187 = vadd.f32 %v2059, %v2131
        %v2188 = vadd.f32 %v2060, %v2134
        %v2189 = vadd.f32 %v2061, %v2137
        %v2190 = vadd.f32 %v2062, %v2140
        %v2191 = vadd.f32 %v2063, %v2143
        %v2192 = vadd.f32 %v2064, %v2146
        %v2193 = vadd.f32 %v2065, %v2149
        %v2194 = vadd.f32 %v2066, %v2152
        %v2195 = vadd.f32 %v2067, %v2155
        %v2196 = vadd.f32 %v2068, %v2158
        %v2197 = vadd.f32 %v2069, %v2161
        %v2198 = vadd.f32 %v2070, %v2164
        %v2199 = vadd.f32 %v2071, %v2167
        %vm2200 = vcmask 7168
        %2201 = vst.msk [vmem:[#allocation4] sm:$0xff] %vm2200, %v2168
        %2202 = vst.msk [vmem:[#allocation4 + $0x8] sm:$0xff] %vm2200, %v2169
        %2203 = vst.msk [vmem:[#allocation4 + $0x10] sm:$0xff] %vm2200, %v2170
        %2204 = vst.msk [vmem:[#allocation4 + $0x18] sm:$0xff] %vm2200, %v2171
        %2205 = vst.msk [vmem:[#allocation4 + $0x20] sm:$0xff] %vm2200, %v2172
        %2206 = vst.msk [vmem:[#allocation4 + $0x28] sm:$0xff] %vm2200, %v2173
        %2207 = vst.msk [vmem:[#allocation4 + $0x30] sm:$0xff] %vm2200, %v2174
        %2208 = vst.msk [vmem:[#allocation4 + $0x38] sm:$0xff] %vm2200, %v2175
        %2209 = vst.msk [vmem:[#allocation4 + $0x40] sm:$0xff] %vm2200, %v2176
        %2210 = vst.msk [vmem:[#allocation4 + $0x48] sm:$0xff] %vm2200, %v2177
        %2211 = vst.msk [vmem:[#allocation4 + $0x50] sm:$0xff] %vm2200, %v2178
        %2212 = vst.msk [vmem:[#allocation4 + $0x58] sm:$0xff] %vm2200, %v2179
        %2213 = vst.msk [vmem:[#allocation4 + $0x60] sm:$0xff] %vm2200, %v2180
        %2214 = vst.msk [vmem:[#allocation4 + $0x68] sm:$0xff] %vm2200, %v2181
        %2215 = vst.msk [vmem:[#allocation4 + $0x70] sm:$0xff] %vm2200, %v2182
        %2216 = vst.msk [vmem:[#allocation4 + $0x78] sm:$0xff] %vm2200, %v2183
        %2217 = vst.msk [vmem:[#allocation4 + $0x80] sm:$0xff] %vm2200, %v2184
        %2218 = vst.msk [vmem:[#allocation4 + $0x88] sm:$0xff] %vm2200, %v2185
        %2219 = vst.msk [vmem:[#allocation4 + $0x90] sm:$0xff] %vm2200, %v2186
        %2220 = vst.msk [vmem:[#allocation4 + $0x98] sm:$0xff] %vm2200, %v2187
        %2221 = vst.msk [vmem:[#allocation4 + $0xa0] sm:$0xff] %vm2200, %v2188
        %2222 = vst.msk [vmem:[#allocation4 + $0xa8] sm:$0xff] %vm2200, %v2189
        %2223 = vst.msk [vmem:[#allocation4 + $0xb0] sm:$0xff] %vm2200, %v2190
        %2224 = vst.msk [vmem:[#allocation4 + $0xb8] sm:$0xff] %vm2200, %v2191
        %2225 = vst.msk [vmem:[#allocation4 + $0xc0] sm:$0xff] %vm2200, %v2192
        %2226 = vst.msk [vmem:[#allocation4 + $0xc8] sm:$0xff] %vm2200, %v2193
        %2227 = vst.msk [vmem:[#allocation4 + $0xd0] sm:$0xff] %vm2200, %v2194
        %2228 = vst.msk [vmem:[#allocation4 + $0xd8] sm:$0xff] %vm2200, %v2195
        %2229 = vst.msk [vmem:[#allocation4 + $0xe0] sm:$0xff] %vm2200, %v2196
        %2230 = vst.msk [vmem:[#allocation4 + $0xe8] sm:$0xff] %vm2200, %v2197
        %2231 = vst.msk [vmem:[#allocation4 + $0xf0] sm:$0xff] %vm2200, %v2198
        %2232 = vst.msk [vmem:[#allocation4 + $0xf8] sm:$0xff] %vm2200, %v2199
        %v2233 = vld [vmem:[#allocation5] sm:$0xff]
        %v2234 = vld [vmem:[#allocation5 + $0x8] sm:$0xff]
        %v2235 = vld [vmem:[#allocation5 + $0x10] sm:$0xff]
        %v2236 = vld [vmem:[#allocation5 + $0x18] sm:$0xff]
        %v2237 = vld [vmem:[#allocation5 + $0x20] sm:$0xff]
        %v2238 = vld [vmem:[#allocation5 + $0x28] sm:$0xff]
        %v2239 = vld [vmem:[#allocation5 + $0x30] sm:$0xff]
        %v2240 = vld [vmem:[#allocation5 + $0x38] sm:$0xff]
        %v2241 = vld [vmem:[#allocation5 + $0x40] sm:$0xff]
        %v2242 = vld [vmem:[#allocation5 + $0x48] sm:$0xff]
        %v2243 = vld [vmem:[#allocation5 + $0x50] sm:$0xff]
        %v2244 = vld [vmem:[#allocation5 + $0x58] sm:$0xff]
        %v2245 = vld [vmem:[#allocation5 + $0x60] sm:$0xff]
        %v2246 = vld [vmem:[#allocation5 + $0x68] sm:$0xff]
        %v2247 = vld [vmem:[#allocation5 + $0x70] sm:$0xff]
        %v2248 = vld [vmem:[#allocation5 + $0x78] sm:$0xff]
        %v2249 = vld [vmem:[#allocation5 + $0x80] sm:$0xff]
        %v2250 = vld [vmem:[#allocation5 + $0x88] sm:$0xff]
        %v2251 = vld [vmem:[#allocation5 + $0x90] sm:$0xff]
        %v2252 = vld [vmem:[#allocation5 + $0x98] sm:$0xff]
        %v2253 = vld [vmem:[#allocation5 + $0xa0] sm:$0xff]
        %v2254 = vld [vmem:[#allocation5 + $0xa8] sm:$0xff]
        %v2255 = vld [vmem:[#allocation5 + $0xb0] sm:$0xff]
        %v2256 = vld [vmem:[#allocation5 + $0xb8] sm:$0xff]
        %v2257 = vld [vmem:[#allocation5 + $0xc0] sm:$0xff]
        %v2258 = vld [vmem:[#allocation5 + $0xc8] sm:$0xff]
        %v2259 = vld [vmem:[#allocation5 + $0xd0] sm:$0xff]
        %v2260 = vld [vmem:[#allocation5 + $0xd8] sm:$0xff]
        %v2261 = vld [vmem:[#allocation5 + $0xe0] sm:$0xff]
        %v2262 = vld [vmem:[#allocation5 + $0xe8] sm:$0xff]
        %v2263 = vld [vmem:[#allocation5 + $0xf0] sm:$0xff]
        %v2264 = vld [vmem:[#allocation5 + $0xf8] sm:$0xff]
        %v2265 = vmul.f32 %v1976, %v1976
        %v2266 = vmul.f32 %v1977, %v1977
        %v2267 = vmul.f32 %v1978, %v1978
        %v2268 = vmul.f32 %v1979, %v1979
        %v2269 = vmul.f32 %v1980, %v1980
        %v2270 = vmul.f32 %v1981, %v1981
        %v2271 = vmul.f32 %v1982, %v1982
        %v2272 = vmul.f32 %v1983, %v1983
        %v2273 = vmul.f32 %v1984, %v1984
        %v2274 = vmul.f32 %v1985, %v1985
        %v2275 = vmul.f32 %v1986, %v1986
        %v2276 = vmul.f32 %v1987, %v1987
        %v2277 = vmul.f32 %v1988, %v1988
        %v2278 = vmul.f32 %v1989, %v1989
        %v2279 = vmul.f32 %v1990, %v1990
        %v2280 = vmul.f32 %v1991, %v1991
        %v2281 = vmul.f32 %v1992, %v1992
        %v2282 = vmul.f32 %v1993, %v1993
        %v2283 = vmul.f32 %v1994, %v1994
        %v2284 = vmul.f32 %v1995, %v1995
        %v2285 = vmul.f32 %v1996, %v1996
        %v2286 = vmul.f32 %v1997, %v1997
        %v2287 = vmul.f32 %v1998, %v1998
        %v2288 = vmul.f32 %v1999, %v1999
        %v2289 = vmul.f32 %v2000, %v2000
        %v2290 = vmul.f32 %v2001, %v2001
        %v2291 = vmul.f32 %v2002, %v2002
        %v2292 = vmul.f32 %v2003, %v2003
        %v2293 = vmul.f32 %v2004, %v2004
        %v2294 = vmul.f32 %v2005, %v2005
        %v2295 = vmul.f32 %v2006, %v2006
        %v2296 = vmul.f32 %v2007, %v2007
        %v2297 = vmul.f32 %v2008, %v2008
        %v2298 = vmul.f32 %v2009, %v2009
        %v2299 = vmul.f32 %v2010, %v2010
        %v2300 = vmul.f32 %v2011, %v2011
        %v2301 = vmul.f32 %v2012, %v2012
        %v2302 = vmul.f32 %v2013, %v2013
        %v2303 = vmul.f32 %v2014, %v2014
        %v2304 = vmul.f32 %v2015, %v2015
        %v2305 = vmul.f32 %v2016, %v2016
        %v2306 = vmul.f32 %v2017, %v2017
        %v2307 = vmul.f32 %v2018, %v2018
        %v2308 = vmul.f32 %v2019, %v2019
        %v2309 = vmul.f32 %v2020, %v2020
        %v2310 = vmul.f32 %v2021, %v2021
        %v2311 = vmul.f32 %v2022, %v2022
        %v2312 = vmul.f32 %v2023, %v2023
        %v2313 = vmul.f32 %v2024, %v2024
        %v2314 = vmul.f32 %v2025, %v2025
        %v2315 = vmul.f32 %v2026, %v2026
        %v2316 = vmul.f32 %v2027, %v2027
        %v2317 = vmul.f32 %v2028, %v2028
        %v2318 = vmul.f32 %v2029, %v2029
        %v2319 = vmul.f32 %v2030, %v2030
        %v2320 = vmul.f32 %v2031, %v2031
        %v2321 = vmul.f32 %v2032, %v2032
        %v2322 = vmul.f32 %v2033, %v2033
        %v2323 = vmul.f32 %v2034, %v2034
        %v2324 = vmul.f32 %v2035, %v2035
        %v2325 = vmul.f32 %v2036, %v2036
        %v2326 = vmul.f32 %v2037, %v2037
        %v2327 = vmul.f32 %v2038, %v2038
        %v2328 = vmul.f32 %v2039, %v2039
        %v2329 = vadd.f32 %v2265, %v2266
        %2330 = vadd.xlane.f32.xlu0 %v2329
        %v2331 = vpop.xlane.xlu0 %2330
        %v2332 = vadd.f32 %v2267, %v2268
        %2333 = vadd.xlane.f32.xlu0 %v2332
        %v2334 = vpop.xlane.xlu0 %2333
        %v2335 = vadd.f32 %v2269, %v2270
        %2336 = vadd.xlane.f32.xlu0 %v2335
        %v2337 = vpop.xlane.xlu0 %2336
        %v2338 = vadd.f32 %v2271, %v2272
        %2339 = vadd.xlane.f32.xlu0 %v2338
        %v2340 = vpop.xlane.xlu0 %2339
        %v2341 = vadd.f32 %v2273, %v2274
        %2342 = vadd.xlane.f32.xlu0 %v2341
        %v2343 = vpop.xlane.xlu0 %2342
        %v2344 = vadd.f32 %v2275, %v2276
        %2345 = vadd.xlane.f32.xlu0 %v2344
        %v2346 = vpop.xlane.xlu0 %2345
        %v2347 = vadd.f32 %v2277, %v2278
        %2348 = vadd.xlane.f32.xlu0 %v2347
        %v2349 = vpop.xlane.xlu0 %2348
        %v2350 = vadd.f32 %v2279, %v2280
        %2351 = vadd.xlane.f32.xlu0 %v2350
        %v2352 = vpop.xlane.xlu0 %2351
        %v2353 = vadd.f32 %v2281, %v2282
        %2354 = vadd.xlane.f32.xlu0 %v2353
        %v2355 = vpop.xlane.xlu0 %2354
        %v2356 = vadd.f32 %v2283, %v2284
        %2357 = vadd.xlane.f32.xlu0 %v2356
        %v2358 = vpop.xlane.xlu0 %2357
        %v2359 = vadd.f32 %v2285, %v2286
        %2360 = vadd.xlane.f32.xlu0 %v2359
        %v2361 = vpop.xlane.xlu0 %2360
        %v2362 = vadd.f32 %v2287, %v2288
        %2363 = vadd.xlane.f32.xlu0 %v2362
        %v2364 = vpop.xlane.xlu0 %2363
        %v2365 = vadd.f32 %v2289, %v2290
        %2366 = vadd.xlane.f32.xlu0 %v2365
        %v2367 = vpop.xlane.xlu0 %2366
        %v2368 = vadd.f32 %v2291, %v2292
        %2369 = vadd.xlane.f32.xlu0 %v2368
        %v2370 = vpop.xlane.xlu0 %2369
        %v2371 = vadd.f32 %v2293, %v2294
        %2372 = vadd.xlane.f32.xlu0 %v2371
        %v2373 = vpop.xlane.xlu0 %2372
        %v2374 = vadd.f32 %v2295, %v2296
        %2375 = vadd.xlane.f32.xlu0 %v2374
        %v2376 = vpop.xlane.xlu0 %2375
        %v2377 = vadd.f32 %v2297, %v2298
        %2378 = vadd.xlane.f32.xlu0 %v2377
        %v2379 = vpop.xlane.xlu0 %2378
        %v2380 = vadd.f32 %v2299, %v2300
        %2381 = vadd.xlane.f32.xlu0 %v2380
        %v2382 = vpop.xlane.xlu0 %2381
        %v2383 = vadd.f32 %v2301, %v2302
        %2384 = vadd.xlane.f32.xlu0 %v2383
        %v2385 = vpop.xlane.xlu0 %2384
        %v2386 = vadd.f32 %v2303, %v2304
        %2387 = vadd.xlane.f32.xlu0 %v2386
        %v2388 = vpop.xlane.xlu0 %2387
        %v2389 = vadd.f32 %v2305, %v2306
        %2390 = vadd.xlane.f32.xlu0 %v2389
        %v2391 = vpop.xlane.xlu0 %2390
        %v2392 = vadd.f32 %v2307, %v2308
        %2393 = vadd.xlane.f32.xlu0 %v2392
        %v2394 = vpop.xlane.xlu0 %2393
        %v2395 = vadd.f32 %v2309, %v2310
        %2396 = vadd.xlane.f32.xlu0 %v2395
        %v2397 = vpop.xlane.xlu0 %2396
        %v2398 = vadd.f32 %v2311, %v2312
        %2399 = vadd.xlane.f32.xlu0 %v2398
        %v2400 = vpop.xlane.xlu0 %2399
        %v2401 = vadd.f32 %v2313, %v2314
        %2402 = vadd.xlane.f32.xlu0 %v2401
        %v2403 = vpop.xlane.xlu0 %2402
        %v2404 = vadd.f32 %v2315, %v2316
        %2405 = vadd.xlane.f32.xlu0 %v2404
        %v2406 = vpop.xlane.xlu0 %2405
        %v2407 = vadd.f32 %v2317, %v2318
        %2408 = vadd.xlane.f32.xlu0 %v2407
        %v2409 = vpop.xlane.xlu0 %2408
        %v2410 = vadd.f32 %v2319, %v2320
        %2411 = vadd.xlane.f32.xlu0 %v2410
        %v2412 = vpop.xlane.xlu0 %2411
        %v2413 = vadd.f32 %v2321, %v2322
        %2414 = vadd.xlane.f32.xlu0 %v2413
        %v2415 = vpop.xlane.xlu0 %2414
        %v2416 = vadd.f32 %v2323, %v2324
        %2417 = vadd.xlane.f32.xlu0 %v2416
        %v2418 = vpop.xlane.xlu0 %2417
        %v2419 = vadd.f32 %v2325, %v2326
        %2420 = vadd.xlane.f32.xlu0 %v2419
        %v2421 = vpop.xlane.xlu0 %2420
        %v2422 = vadd.f32 %v2327, %v2328
        %2423 = vadd.xlane.f32.xlu0 %v2422
        %v2424 = vpop.xlane.xlu0 %2423
        %v2425 = vadd.f32 %v2233, %v2331
        %v2426 = vadd.f32 %v2234, %v2334
        %v2427 = vadd.f32 %v2235, %v2337
        %v2428 = vadd.f32 %v2236, %v2340
        %v2429 = vadd.f32 %v2237, %v2343
        %v2430 = vadd.f32 %v2238, %v2346
        %v2431 = vadd.f32 %v2239, %v2349
        %v2432 = vadd.f32 %v2240, %v2352
        %v2433 = vadd.f32 %v2241, %v2355
        %v2434 = vadd.f32 %v2242, %v2358
        %v2435 = vadd.f32 %v2243, %v2361
        %v2436 = vadd.f32 %v2244, %v2364
        %v2437 = vadd.f32 %v2245, %v2367
        %v2438 = vadd.f32 %v2246, %v2370
        %v2439 = vadd.f32 %v2247, %v2373
        %v2440 = vadd.f32 %v2248, %v2376
        %v2441 = vadd.f32 %v2249, %v2379
        %v2442 = vadd.f32 %v2250, %v2382
        %v2443 = vadd.f32 %v2251, %v2385
        %v2444 = vadd.f32 %v2252, %v2388
        %v2445 = vadd.f32 %v2253, %v2391
        %v2446 = vadd.f32 %v2254, %v2394
        %v2447 = vadd.f32 %v2255, %v2397
        %v2448 = vadd.f32 %v2256, %v2400
        %v2449 = vadd.f32 %v2257, %v2403
        %v2450 = vadd.f32 %v2258, %v2406
        %v2451 = vadd.f32 %v2259, %v2409
        %v2452 = vadd.f32 %v2260, %v2412
        %v2453 = vadd.f32 %v2261, %v2415
        %v2454 = vadd.f32 %v2262, %v2418
        %v2455 = vadd.f32 %v2263, %v2421
        %v2456 = vadd.f32 %v2264, %v2424
        %2457 = vst.msk [vmem:[#allocation5] sm:$0xff] %vm2200, %v2425
        %2458 = vst.msk [vmem:[#allocation5 + $0x8] sm:$0xff] %vm2200, %v2426
        %2459 = vst.msk [vmem:[#allocation5 + $0x10] sm:$0xff] %vm2200, %v2427
        %2460 = vst.msk [vmem:[#allocation5 + $0x18] sm:$0xff] %vm2200, %v2428
        %2461 = vst.msk [vmem:[#allocation5 + $0x20] sm:$0xff] %vm2200, %v2429
        %2462 = vst.msk [vmem:[#allocation5 + $0x28] sm:$0xff] %vm2200, %v2430
        %2463 = vst.msk [vmem:[#allocation5 + $0x30] sm:$0xff] %vm2200, %v2431
        %2464 = vst.msk [vmem:[#allocation5 + $0x38] sm:$0xff] %vm2200, %v2432
        %2465 = vst.msk [vmem:[#allocation5 + $0x40] sm:$0xff] %vm2200, %v2433
        %2466 = vst.msk [vmem:[#allocation5 + $0x48] sm:$0xff] %vm2200, %v2434
        %2467 = vst.msk [vmem:[#allocation5 + $0x50] sm:$0xff] %vm2200, %v2435
        %2468 = vst.msk [vmem:[#allocation5 + $0x58] sm:$0xff] %vm2200, %v2436
        %2469 = vst.msk [vmem:[#allocation5 + $0x60] sm:$0xff] %vm2200, %v2437
        %2470 = vst.msk [vmem:[#allocation5 + $0x68] sm:$0xff] %vm2200, %v2438
        %2471 = vst.msk [vmem:[#allocation5 + $0x70] sm:$0xff] %vm2200, %v2439
        %2472 = vst.msk [vmem:[#allocation5 + $0x78] sm:$0xff] %vm2200, %v2440
        %2473 = vst.msk [vmem:[#allocation5 + $0x80] sm:$0xff] %vm2200, %v2441
        %2474 = vst.msk [vmem:[#allocation5 + $0x88] sm:$0xff] %vm2200, %v2442
        %2475 = vst.msk [vmem:[#allocation5 + $0x90] sm:$0xff] %vm2200, %v2443
        %2476 = vst.msk [vmem:[#allocation5 + $0x98] sm:$0xff] %vm2200, %v2444
        %2477 = vst.msk [vmem:[#allocation5 + $0xa0] sm:$0xff] %vm2200, %v2445
        %2478 = vst.msk [vmem:[#allocation5 + $0xa8] sm:$0xff] %vm2200, %v2446
        %2479 = vst.msk [vmem:[#allocation5 + $0xb0] sm:$0xff] %vm2200, %v2447
        %2480 = vst.msk [vmem:[#allocation5 + $0xb8] sm:$0xff] %vm2200, %v2448
        %2481 = vst.msk [vmem:[#allocation5 + $0xc0] sm:$0xff] %vm2200, %v2449
        %2482 = vst.msk [vmem:[#allocation5 + $0xc8] sm:$0xff] %vm2200, %v2450
        %2483 = vst.msk [vmem:[#allocation5 + $0xd0] sm:$0xff] %vm2200, %v2451
        %2484 = vst.msk [vmem:[#allocation5 + $0xd8] sm:$0xff] %vm2200, %v2452
        %2485 = vst.msk [vmem:[#allocation5 + $0xe0] sm:$0xff] %vm2200, %v2453
        %2486 = vst.msk [vmem:[#allocation5 + $0xe8] sm:$0xff] %vm2200, %v2454
        %2487 = vst.msk [vmem:[#allocation5 + $0xf0] sm:$0xff] %vm2200, %v2455
        %2488 = vst.msk [vmem:[#allocation5 + $0xf8] sm:$0xff] %vm2200, %v2456
        %v2489 = vld [vmem:[%s457] sm:$0x3]
        %v2491 = vlaneseq
        %v2492 = vshrl.u32 %v2491, 7
        %v2493 = vsub.s32 0, %v2492
        %v2494 = vrot.slane %v2489, %v2493
        %v2495 = vlaneseq
        %v2496 = vshrl.u32 %v2495, 7
        %v2497 = vsub.s32 1, %v2496
        %v2498 = vrot.slane %v2489, %v2497
        %v2501 = vmul.f32 %v1976, %v2494
        %v2502 = vmul.f32 %v1977, %v2498
        %v2503 = vmul.f32 %v1978, %v2494
        %v2504 = vmul.f32 %v1979, %v2498
        %v2505 = vmul.f32 %v1980, %v2494
        %v2506 = vmul.f32 %v1981, %v2498
        %v2507 = vmul.f32 %v1982, %v2494
        %v2508 = vmul.f32 %v1983, %v2498
        %v2509 = vmul.f32 %v1984, %v2494
        %v2510 = vmul.f32 %v1985, %v2498
        %v2511 = vmul.f32 %v1986, %v2494
        %v2512 = vmul.f32 %v1987, %v2498
        %v2513 = vmul.f32 %v1988, %v2494
        %v2514 = vmul.f32 %v1989, %v2498
        %v2515 = vmul.f32 %v1990, %v2494
        %v2516 = vmul.f32 %v1991, %v2498
        %v2517 = vmul.f32 %v1992, %v2494
        %v2518 = vmul.f32 %v1993, %v2498
        %v2519 = vmul.f32 %v1994, %v2494
        %v2520 = vmul.f32 %v1995, %v2498
        %v2521 = vmul.f32 %v1996, %v2494
        %v2522 = vmul.f32 %v1997, %v2498
        %v2523 = vmul.f32 %v1998, %v2494
        %v2524 = vmul.f32 %v1999, %v2498
        %v2525 = vmul.f32 %v2000, %v2494
        %v2526 = vmul.f32 %v2001, %v2498
        %v2527 = vmul.f32 %v2002, %v2494
        %v2528 = vmul.f32 %v2003, %v2498
        %v2529 = vmul.f32 %v2004, %v2494
        %v2530 = vmul.f32 %v2005, %v2498
        %v2531 = vmul.f32 %v2006, %v2494
        %v2532 = vmul.f32 %v2007, %v2498
        %v2533 = vmul.f32 %v2008, %v2494
        %v2534 = vmul.f32 %v2009, %v2498
        %v2535 = vmul.f32 %v2010, %v2494
        %v2536 = vmul.f32 %v2011, %v2498
        %v2537 = vmul.f32 %v2012, %v2494
        %v2538 = vmul.f32 %v2013, %v2498
        %v2539 = vmul.f32 %v2014, %v2494
        %v2540 = vmul.f32 %v2015, %v2498
        %v2541 = vmul.f32 %v2016, %v2494
        %v2542 = vmul.f32 %v2017, %v2498
        %v2543 = vmul.f32 %v2018, %v2494
        %v2544 = vmul.f32 %v2019, %v2498
        %v2545 = vmul.f32 %v2020, %v2494
        %v2546 = vmul.f32 %v2021, %v2498
        %v2547 = vmul.f32 %v2022, %v2494
        %v2548 = vmul.f32 %v2023, %v2498
        %v2549 = vmul.f32 %v2024, %v2494
        %v2550 = vmul.f32 %v2025, %v2498
        %v2551 = vmul.f32 %v2026, %v2494
        %v2552 = vmul.f32 %v2027, %v2498
        %v2553 = vmul.f32 %v2028, %v2494
        %v2554 = vmul.f32 %v2029, %v2498
        %v2555 = vmul.f32 %v2030, %v2494
        %v2556 = vmul.f32 %v2031, %v2498
        %v2557 = vmul.f32 %v2032, %v2494
        %v2558 = vmul.f32 %v2033, %v2498
        %v2559 = vmul.f32 %v2034, %v2494
        %v2560 = vmul.f32 %v2035, %v2498
        %v2561 = vmul.f32 %v2036, %v2494
        %v2562 = vmul.f32 %v2037, %v2498
        %v2563 = vmul.f32 %v2038, %v2494
        %v2564 = vmul.f32 %v2039, %v2498
        %v2565 = vpack.c.bf16 %v2503, %v2501
        %v2566 = vpack.c.bf16 %v2504, %v2502
        %v2567 = vpack.c.bf16 %v2507, %v2505
        %v2568 = vpack.c.bf16 %v2508, %v2506
        %v2569 = vpack.c.bf16 %v2511, %v2509
        %v2570 = vpack.c.bf16 %v2512, %v2510
        %v2571 = vpack.c.bf16 %v2515, %v2513
        %v2572 = vpack.c.bf16 %v2516, %v2514
        %v2573 = vpack.c.bf16 %v2519, %v2517
        %v2574 = vpack.c.bf16 %v2520, %v2518
        %v2575 = vpack.c.bf16 %v2523, %v2521
        %v2576 = vpack.c.bf16 %v2524, %v2522
        %v2577 = vpack.c.bf16 %v2527, %v2525
        %v2578 = vpack.c.bf16 %v2528, %v2526
        %v2579 = vpack.c.bf16 %v2531, %v2529
        %v2580 = vpack.c.bf16 %v2532, %v2530
        %v2581 = vpack.c.bf16 %v2535, %v2533
        %v2582 = vpack.c.bf16 %v2536, %v2534
        %v2583 = vpack.c.bf16 %v2539, %v2537
        %v2584 = vpack.c.bf16 %v2540, %v2538
        %v2585 = vpack.c.bf16 %v2543, %v2541
        %v2586 = vpack.c.bf16 %v2544, %v2542
        %v2587 = vpack.c.bf16 %v2547, %v2545
        %v2588 = vpack.c.bf16 %v2548, %v2546
        %v2589 = vpack.c.bf16 %v2551, %v2549
        %v2590 = vpack.c.bf16 %v2552, %v2550
        %v2591 = vpack.c.bf16 %v2555, %v2553
        %v2592 = vpack.c.bf16 %v2556, %v2554
        %v2593 = vpack.c.bf16 %v2559, %v2557
        %v2594 = vpack.c.bf16 %v2560, %v2558
        %v2595 = vpack.c.bf16 %v2563, %v2561
        %v2596 = vpack.c.bf16 %v2564, %v2562
        %v2597 = vld [vmem:[#allocation3] sm:$0xff]
        %v2598 = vld [vmem:[#allocation3 + $0x8] sm:$0xff]
        %v2599 = vld [vmem:[#allocation3 + $0x10] sm:$0xff]
        %v2600 = vld [vmem:[#allocation3 + $0x18] sm:$0xff]
        %v2601 = vld [vmem:[#allocation3 + $0x20] sm:$0xff]
        %v2602 = vld [vmem:[#allocation3 + $0x28] sm:$0xff]
        %v2603 = vld [vmem:[#allocation3 + $0x30] sm:$0xff]
        %v2604 = vld [vmem:[#allocation3 + $0x38] sm:$0xff]
        %v2605 = vld [vmem:[#allocation3 + $0x40] sm:$0xff]
        %v2606 = vld [vmem:[#allocation3 + $0x48] sm:$0xff]
        %v2607 = vld [vmem:[#allocation3 + $0x50] sm:$0xff]
        %v2608 = vld [vmem:[#allocation3 + $0x58] sm:$0xff]
        %v2609 = vld [vmem:[#allocation3 + $0x60] sm:$0xff]
        %v2610 = vld [vmem:[#allocation3 + $0x68] sm:$0xff]
        %v2611 = vld [vmem:[#allocation3 + $0x70] sm:$0xff]
        %v2612 = vld [vmem:[#allocation3 + $0x78] sm:$0xff]
        %v2613 = vld [vmem:[#allocation3 + $0x80] sm:$0xff]
        %v2614 = vld [vmem:[#allocation3 + $0x88] sm:$0xff]
        %v2615 = vld [vmem:[#allocation3 + $0x90] sm:$0xff]
        %v2616 = vld [vmem:[#allocation3 + $0x98] sm:$0xff]
        %v2617 = vld [vmem:[#allocation3 + $0xa0] sm:$0xff]
        %v2618 = vld [vmem:[#allocation3 + $0xa8] sm:$0xff]
        %v2619 = vld [vmem:[#allocation3 + $0xb0] sm:$0xff]
        %v2620 = vld [vmem:[#allocation3 + $0xb8] sm:$0xff]
        %v2621 = vld [vmem:[#allocation3 + $0xc0] sm:$0xff]
        %v2622 = vld [vmem:[#allocation3 + $0xc8] sm:$0xff]
        %v2623 = vld [vmem:[#allocation3 + $0xd0] sm:$0xff]
        %v2624 = vld [vmem:[#allocation3 + $0xd8] sm:$0xff]
        %v2625 = vld [vmem:[#allocation3 + $0xe0] sm:$0xff]
        %v2626 = vld [vmem:[#allocation3 + $0xe8] sm:$0xff]
        %v2627 = vld [vmem:[#allocation3 + $0xf0] sm:$0xff]
        %v2628 = vld [vmem:[#allocation3 + $0xf8] sm:$0xff]
        %v2629 = vld [vmem:[%s452] sm:$0xf]
        %v2630 = vld [vmem:[%s452 + $0x4] sm:$0xf]
        %v2631 = vld [vmem:[%s452 + $0x8] sm:$0xf]
        %v2632 = vld [vmem:[%s452 + $0xc] sm:$0xf]
        %v2633 = vld [vmem:[%s452 + $0x10] sm:$0xf]
        %v2634 = vld [vmem:[%s452 + $0x14] sm:$0xf]
        %v2635 = vld [vmem:[%s452 + $0x18] sm:$0xf]
        %v2636 = vld [vmem:[%s452 + $0x1c] sm:$0xf]
        %v2637 = vld [vmem:[%s452 + $0x20] sm:$0xf]
        %v2638 = vld [vmem:[%s452 + $0x24] sm:$0xf]
        %v2639 = vld [vmem:[%s452 + $0x28] sm:$0xf]
        %v2640 = vld [vmem:[%s452 + $0x2c] sm:$0xf]
        %v2641 = vld [vmem:[%s452 + $0x30] sm:$0xf]
        %v2642 = vld [vmem:[%s452 + $0x34] sm:$0xf]
        %v2643 = vld [vmem:[%s452 + $0x38] sm:$0xf]
        %v2644 = vld [vmem:[%s452 + $0x3c] sm:$0xf]
        %v2645 = vld [vmem:[%s452 + $0x40] sm:$0xf]
        %v2646 = vld [vmem:[%s452 + $0x44] sm:$0xf]
        %v2647 = vld [vmem:[%s452 + $0x48] sm:$0xf]
        %v2648 = vld [vmem:[%s452 + $0x4c] sm:$0xf]
        %v2649 = vld [vmem:[%s452 + $0x50] sm:$0xf]
        %v2650 = vld [vmem:[%s452 + $0x54] sm:$0xf]
        %v2651 = vld [vmem:[%s452 + $0x58] sm:$0xf]
        %v2652 = vld [vmem:[%s452 + $0x5c] sm:$0xf]
        %v2653 = vld [vmem:[%s452 + $0x60] sm:$0xf]
        %v2654 = vld [vmem:[%s452 + $0x64] sm:$0xf]
        %v2655 = vld [vmem:[%s452 + $0x68] sm:$0xf]
        %v2656 = vld [vmem:[%s452 + $0x6c] sm:$0xf]
        %v2657 = vld [vmem:[%s452 + $0x70] sm:$0xf]
        %v2658 = vld [vmem:[%s452 + $0x74] sm:$0xf]
        %v2659 = vld [vmem:[%s452 + $0x78] sm:$0xf]
        %v2660 = vld [vmem:[%s452 + $0x7c] sm:$0xf]
        %v2693 = vunpack.c.l.b16 %v2629
        %v2694 = vunpack.c.l.b16 %v2630
        %v2695 = vunpack.c.l.b16 %v2631
        %v2696 = vunpack.c.l.b16 %v2632
        %v2697 = vunpack.c.l.b16 %v2633
        %v2698 = vunpack.c.l.b16 %v2634
        %v2699 = vunpack.c.l.b16 %v2635
        %v2700 = vunpack.c.l.b16 %v2636
        %v2701 = vunpack.c.l.b16 %v2637
        %v2702 = vunpack.c.l.b16 %v2638
        %v2703 = vunpack.c.l.b16 %v2639
        %v2704 = vunpack.c.l.b16 %v2640
        %v2705 = vunpack.c.l.b16 %v2641
        %v2706 = vunpack.c.l.b16 %v2642
        %v2707 = vunpack.c.l.b16 %v2643
        %v2708 = vunpack.c.l.b16 %v2644
        %v2709 = vunpack.c.l.b16 %v2645
        %v2710 = vunpack.c.l.b16 %v2646
        %v2711 = vunpack.c.l.b16 %v2647
        %v2712 = vunpack.c.l.b16 %v2648
        %v2713 = vunpack.c.l.b16 %v2649
        %v2714 = vunpack.c.l.b16 %v2650
        %v2715 = vunpack.c.l.b16 %v2651
        %v2716 = vunpack.c.l.b16 %v2652
        %v2717 = vunpack.c.l.b16 %v2653
        %v2718 = vunpack.c.l.b16 %v2654
        %v2719 = vunpack.c.l.b16 %v2655
        %v2720 = vunpack.c.l.b16 %v2656
        %v2721 = vunpack.c.l.b16 %v2657
        %v2722 = vunpack.c.l.b16 %v2658
        %v2723 = vunpack.c.l.b16 %v2659
        %v2724 = vunpack.c.l.b16 %v2660
        %v2725 = vpack.c.b16 %v2694, %v2693
        %v2726 = vpack.c.b16 %v2696, %v2695
        %v2727 = vpack.c.b16 %v2698, %v2697
        %v2728 = vpack.c.b16 %v2700, %v2699
        %v2729 = vpack.c.b16 %v2702, %v2701
        %v2730 = vpack.c.b16 %v2704, %v2703
        %v2731 = vpack.c.b16 %v2706, %v2705
        %v2732 = vpack.c.b16 %v2708, %v2707
        %v2733 = vpack.c.b16 %v2710, %v2709
        %v2734 = vpack.c.b16 %v2712, %v2711
        %v2735 = vpack.c.b16 %v2714, %v2713
        %v2736 = vpack.c.b16 %v2716, %v2715
        %v2737 = vpack.c.b16 %v2718, %v2717
        %v2738 = vpack.c.b16 %v2720, %v2719
        %v2739 = vpack.c.b16 %v2722, %v2721
        %v2740 = vpack.c.b16 %v2724, %v2723
        %2757 = vmatprep.subr.bf16.mxu0 0
        %2758 = vmatpush1.bf16.msra.mxu0 %v2725
        %2759 = vmatprep.subr.bf16.mxu0 0
        %2760 = vmatpush1.bf16.msra.mxu0 %v2726
        %2761 = vmatprep.subr.bf16.mxu0 0
        %2762 = vmatpush1.bf16.msra.mxu0 %v2727
        %2763 = vmatprep.subr.bf16.mxu0 0
        %2764 = vmatpush1.bf16.msra.mxu0 %v2728
        %2765 = vmatprep.subr.bf16.mxu0 0
        %2766 = vmatpush1.bf16.msra.mxu0 %v2729
        %2767 = vmatprep.subr.bf16.mxu0 0
        %2768 = vmatpush1.bf16.msra.mxu0 %v2730
        %2769 = vmatprep.subr.bf16.mxu0 0
        %2770 = vmatpush1.bf16.msra.mxu0 %v2731
        %2771 = vmatprep.subr.bf16.mxu0 0
        %2772 = vmatpush1.bf16.msra.mxu0 %v2732
        %2773 = vmatprep.subr.bf16.mxu0 0
        %2774 = vmatpush1.bf16.msra.mxu0 %v2733
        %2775 = vmatprep.subr.bf16.mxu0 0
        %2776 = vmatpush1.bf16.msra.mxu0 %v2734
        %2777 = vmatprep.subr.bf16.mxu0 0
        %2778 = vmatpush1.bf16.msra.mxu0 %v2735
        %2779 = vmatprep.subr.bf16.mxu0 0
        %2780 = vmatpush1.bf16.msra.mxu0 %v2736
        %2781 = vmatprep.subr.bf16.mxu0 0
        %2782 = vmatpush1.bf16.msra.mxu0 %v2737
        %2783 = vmatprep.subr.bf16.mxu0 0
        %2784 = vmatpush1.bf16.msra.mxu0 %v2738
        %2785 = vmatprep.subr.bf16.mxu0 0
        %2786 = vmatpush1.bf16.msra.mxu0 %v2739
        %2787 = vmatprep.subr.bf16.mxu0 0
        %2788 = vmatpush1.bf16.msra.mxu0 %v2740
        %2789 = vmatprep.mubr.bf16.mxu0 %v2566
        %2790 = vmatmul.mubr.bf16.gmra.mrb[0].mxu0 %v2565
        %v2791 = vpop.f32.mrb[0].mxu0
        %v2792 = vadd.f32 0.0, %v2791
        %v2793 = vpop.f32.mrb[0].mxu0
        %v2794 = vpop.f32.mrb[0].mxu0
        %v2795 = vadd.f32 0.0, %v2794
        %v2796 = vpop.f32.mrb[0].mxu0
        %2797 = vmatprep.mubr.bf16.mxu0 %v2568
        %2798 = vmatmul.mubr.bf16.gmra.mrb[0].mxu0 %v2567
        %v2799 = vpop.f32.mrb[0].mxu0
        %v2800 = vadd.f32 0.0, %v2799
        %v2801 = vpop.f32.mrb[0].mxu0
        %v2802 = vpop.f32.mrb[0].mxu0
        %v2803 = vadd.f32 0.0, %v2802
        %v2804 = vpop.f32.mrb[0].mxu0
        %2805 = vmatprep.mubr.bf16.mxu0 %v2570
        %2806 = vmatmul.mubr.bf16.gmra.mrb[0].mxu0 %v2569
        %v2807 = vpop.f32.mrb[0].mxu0
        %v2808 = vadd.f32 0.0, %v2807
        %v2809 = vpop.f32.mrb[0].mxu0
        %v2810 = vpop.f32.mrb[0].mxu0
        %v2811 = vadd.f32 0.0, %v2810
        %v2812 = vpop.f32.mrb[0].mxu0
        %2813 = vmatprep.mubr.bf16.mxu0 %v2572
        %2814 = vmatmul.mubr.bf16.gmra.mrb[0].mxu0 %v2571
        %v2815 = vpop.f32.mrb[0].mxu0
        %v2816 = vadd.f32 0.0, %v2815
        %v2817 = vpop.f32.mrb[0].mxu0
        %v2818 = vpop.f32.mrb[0].mxu0
        %v2819 = vadd.f32 0.0, %v2818
        %v2820 = vpop.f32.mrb[0].mxu0
        %2821 = vmatprep.mubr.bf16.mxu0 %v2574
        %2822 = vmatmul.mubr.bf16.gmra.mrb[0].mxu0 %v2573
        %v2823 = vpop.f32.mrb[0].mxu0
        %v2824 = vadd.f32 0.0, %v2823
        %v2825 = vpop.f32.mrb[0].mxu0
        %v2826 = vpop.f32.mrb[0].mxu0
        %v2827 = vadd.f32 0.0, %v2826
        %v2828 = vpop.f32.mrb[0].mxu0
        %2829 = vmatprep.mubr.bf16.mxu0 %v2576
        %2830 = vmatmul.mubr.bf16.gmra.mrb[0].mxu0 %v2575
        %v2831 = vpop.f32.mrb[0].mxu0
        %v2832 = vadd.f32 0.0, %v2831
        %v2833 = vpop.f32.mrb[0].mxu0
        %v2834 = vpop.f32.mrb[0].mxu0
        %v2835 = vadd.f32 0.0, %v2834
        %v2836 = vpop.f32.mrb[0].mxu0
        %2837 = vmatprep.mubr.bf16.mxu0 %v2578
        %2838 = vmatmul.mubr.bf16.gmra.mrb[0].mxu0 %v2577
        %v2839 = vpop.f32.mrb[0].mxu0
        %v2840 = vadd.f32 0.0, %v2839
        %v2841 = vpop.f32.mrb[0].mxu0
        %v2842 = vpop.f32.mrb[0].mxu0
        %v2843 = vadd.f32 0.0, %v2842
        %v2844 = vpop.f32.mrb[0].mxu0
        %2845 = vmatprep.mubr.bf16.mxu0 %v2580
        %2846 = vmatmul.mubr.bf16.gmra.mrb[0].mxu0 %v2579
        %v2847 = vpop.f32.mrb[0].mxu0
        %v2848 = vadd.f32 0.0, %v2847
        %v2849 = vpop.f32.mrb[0].mxu0
        %v2850 = vpop.f32.mrb[0].mxu0
        %v2851 = vadd.f32 0.0, %v2850
        %v2852 = vpop.f32.mrb[0].mxu0
        %2853 = vmatprep.mubr.bf16.mxu0 %v2582
        %2854 = vmatmul.mubr.bf16.gmra.mrb[0].mxu0 %v2581
        %v2855 = vpop.f32.mrb[0].mxu0
        %v2856 = vadd.f32 0.0, %v2855
        %v2857 = vpop.f32.mrb[0].mxu0
        %v2858 = vpop.f32.mrb[0].mxu0
        %v2859 = vadd.f32 0.0, %v2858
        %v2860 = vpop.f32.mrb[0].mxu0
        %2861 = vmatprep.mubr.bf16.mxu0 %v2584
        %2862 = vmatmul.mubr.bf16.gmra.mrb[0].mxu0 %v2583
        %v2863 = vpop.f32.mrb[0].mxu0
        %v2864 = vadd.f32 0.0, %v2863
        %v2865 = vpop.f32.mrb[0].mxu0
        %v2866 = vpop.f32.mrb[0].mxu0
        %v2867 = vadd.f32 0.0, %v2866
        %v2868 = vpop.f32.mrb[0].mxu0
        %2869 = vmatprep.mubr.bf16.mxu0 %v2586
        %2870 = vmatmul.mubr.bf16.gmra.mrb[0].mxu0 %v2585
        %v2871 = vpop.f32.mrb[0].mxu0
        %v2872 = vadd.f32 0.0, %v2871
        %v2873 = vpop.f32.mrb[0].mxu0
        %v2874 = vpop.f32.mrb[0].mxu0
        %v2875 = vadd.f32 0.0, %v2874
        %v2876 = vpop.f32.mrb[0].mxu0
        %2877 = vmatprep.mubr.bf16.mxu0 %v2588
        %2878 = vmatmul.mubr.bf16.gmra.mrb[0].mxu0 %v2587
        %v2879 = vpop.f32.mrb[0].mxu0
        %v2880 = vadd.f32 0.0, %v2879
        %v2881 = vpop.f32.mrb[0].mxu0
        %v2882 = vpop.f32.mrb[0].mxu0
        %v2883 = vadd.f32 0.0, %v2882
        %v2884 = vpop.f32.mrb[0].mxu0
        %2885 = vmatprep.mubr.bf16.mxu0 %v2590
        %2886 = vmatmul.mubr.bf16.gmra.mrb[0].mxu0 %v2589
        %v2887 = vpop.f32.mrb[0].mxu0
        %v2888 = vadd.f32 0.0, %v2887
        %v2889 = vpop.f32.mrb[0].mxu0
        %v2890 = vpop.f32.mrb[0].mxu0
        %v2891 = vadd.f32 0.0, %v2890
        %v2892 = vpop.f32.mrb[0].mxu0
        %2893 = vmatprep.mubr.bf16.mxu0 %v2592
        %2894 = vmatmul.mubr.bf16.gmra.mrb[0].mxu0 %v2591
        %v2895 = vpop.f32.mrb[0].mxu0
        %v2896 = vadd.f32 0.0, %v2895
        %v2897 = vpop.f32.mrb[0].mxu0
        %v2898 = vpop.f32.mrb[0].mxu0
        %v2899 = vadd.f32 0.0, %v2898
        %v2900 = vpop.f32.mrb[0].mxu0
        %2901 = vmatprep.mubr.bf16.mxu0 %v2594
        %2902 = vmatmul.mubr.bf16.gmra.mrb[0].mxu0 %v2593
        %v2903 = vpop.f32.mrb[0].mxu0
        %v2904 = vadd.f32 0.0, %v2903
        %v2905 = vpop.f32.mrb[0].mxu0
        %v2906 = vpop.f32.mrb[0].mxu0
        %v2907 = vadd.f32 0.0, %v2906
        %v2908 = vpop.f32.mrb[0].mxu0
        %2909 = vmatprep.mubr.bf16.mxu0 %v2596
        %2910 = vmatmul.mubr.bf16.gmra.mrb[0].mxu0 %v2595
        %v2911 = vpop.f32.mrb[0].mxu0
        %v2912 = vadd.f32 0.0, %v2911
        %v2913 = vpop.f32.mrb[0].mxu0
        %v2914 = vpop.f32.mrb[0].mxu0
        %v2915 = vadd.f32 0.0, %v2914
        %v2916 = vpop.f32.mrb[0].mxu0
        %2917 = vdwg.mxu0
        %v2918 = vadd.f32 %v2597, %v2792
        %v2919 = vadd.f32 %v2598, %v2795
        %v2920 = vadd.f32 %v2599, %v2800
        %v2921 = vadd.f32 %v2600, %v2803
        %v2922 = vadd.f32 %v2601, %v2808
        %v2923 = vadd.f32 %v2602, %v2811
        %v2924 = vadd.f32 %v2603, %v2816
        %v2925 = vadd.f32 %v2604, %v2819
        %v2926 = vadd.f32 %v2605, %v2824
        %v2927 = vadd.f32 %v2606, %v2827
        %v2928 = vadd.f32 %v2607, %v2832
        %v2929 = vadd.f32 %v2608, %v2835
        %v2930 = vadd.f32 %v2609, %v2840
        %v2931 = vadd.f32 %v2610, %v2843
        %v2932 = vadd.f32 %v2611, %v2848
        %v2933 = vadd.f32 %v2612, %v2851
        %v2934 = vadd.f32 %v2613, %v2856
        %v2935 = vadd.f32 %v2614, %v2859
        %v2936 = vadd.f32 %v2615, %v2864
        %v2937 = vadd.f32 %v2616, %v2867
        %v2938 = vadd.f32 %v2617, %v2872
        %v2939 = vadd.f32 %v2618, %v2875
        %v2940 = vadd.f32 %v2619, %v2880
        %v2941 = vadd.f32 %v2620, %v2883
        %v2942 = vadd.f32 %v2621, %v2888
        %v2943 = vadd.f32 %v2622, %v2891
        %v2944 = vadd.f32 %v2623, %v2896
        %v2945 = vadd.f32 %v2624, %v2899
        %v2946 = vadd.f32 %v2625, %v2904
        %v2947 = vadd.f32 %v2626, %v2907
        %v2948 = vadd.f32 %v2627, %v2912
        %v2949 = vadd.f32 %v2628, %v2915
        %2950 = vst [vmem:[#allocation3] sm:$0xff] %v2918
        %2951 = vst [vmem:[#allocation3 + $0x8] sm:$0xff] %v2919
        %2952 = vst [vmem:[#allocation3 + $0x10] sm:$0xff] %v2920
        %2953 = vst [vmem:[#allocation3 + $0x18] sm:$0xff] %v2921
        %2954 = vst [vmem:[#allocation3 + $0x20] sm:$0xff] %v2922
        %2955 = vst [vmem:[#allocation3 + $0x28] sm:$0xff] %v2923
        %2956 = vst [vmem:[#allocation3 + $0x30] sm:$0xff] %v2924
        %2957 = vst [vmem:[#allocation3 + $0x38] sm:$0xff] %v2925
        %2958 = vst [vmem:[#allocation3 + $0x40] sm:$0xff] %v2926
        %2959 = vst [vmem:[#allocation3 + $0x48] sm:$0xff] %v2927
        %2960 = vst [vmem:[#allocation3 + $0x50] sm:$0xff] %v2928
        %2961 = vst [vmem:[#allocation3 + $0x58] sm:$0xff] %v2929
        %2962 = vst [vmem:[#allocation3 + $0x60] sm:$0xff] %v2930
        %2963 = vst [vmem:[#allocation3 + $0x68] sm:$0xff] %v2931
        %2964 = vst [vmem:[#allocation3 + $0x70] sm:$0xff] %v2932
        %2965 = vst [vmem:[#allocation3 + $0x78] sm:$0xff] %v2933
        %2966 = vst [vmem:[#allocation3 + $0x80] sm:$0xff] %v2934
        %2967 = vst [vmem:[#allocation3 + $0x88] sm:$0xff] %v2935
        %2968 = vst [vmem:[#allocation3 + $0x90] sm:$0xff] %v2936
        %2969 = vst [vmem:[#allocation3 + $0x98] sm:$0xff] %v2937
        %2970 = vst [vmem:[#allocation3 + $0xa0] sm:$0xff] %v2938
        %2971 = vst [vmem:[#allocation3 + $0xa8] sm:$0xff] %v2939
        %2972 = vst [vmem:[#allocation3 + $0xb0] sm:$0xff] %v2940
        %2973 = vst [vmem:[#allocation3 + $0xb8] sm:$0xff] %v2941
        %2974 = vst [vmem:[#allocation3 + $0xc0] sm:$0xff] %v2942
        %2975 = vst [vmem:[#allocation3 + $0xc8] sm:$0xff] %v2943
        %2976 = vst [vmem:[#allocation3 + $0xd0] sm:$0xff] %v2944
        %2977 = vst [vmem:[#allocation3 + $0xd8] sm:$0xff] %v2945
        %2978 = vst [vmem:[#allocation3 + $0xe0] sm:$0xff] %v2946
        %2979 = vst [vmem:[#allocation3 + $0xe8] sm:$0xff] %v2947
        %2980 = vst [vmem:[#allocation3 + $0xf0] sm:$0xff] %v2948
        %2981 = vst [vmem:[#allocation3 + $0xf8] sm:$0xff] %v2949
        %p2982 = scmp.eq.s32.totalorder %s24, 1
        // Predicated region
        $region80: #{glu_forward.1} parent=70 // pred_check
          %p2983 = pneg %p2982
        $region81: #{glu_forward.1} parent=70 // pred_check_branch
          %2985 = sbr.rel (%p2983) target = $region83
        $region82: #{glu_forward.1} parent=70 // pred_region
          %v2986 = vld [vmem:[#allocation4] sm:$0xff]
          %v2987 = vld [vmem:[#allocation4 + $0x8] sm:$0xff]
          %v2988 = vld [vmem:[#allocation4 + $0x10] sm:$0xff]
          %v2989 = vld [vmem:[#allocation4 + $0x18] sm:$0xff]
          %v2990 = vld [vmem:[#allocation4 + $0x20] sm:$0xff]
          %v2991 = vld [vmem:[#allocation4 + $0x28] sm:$0xff]
          %v2992 = vld [vmem:[#allocation4 + $0x30] sm:$0xff]
          %v2993 = vld [vmem:[#allocation4 + $0x38] sm:$0xff]
          %v2994 = vld [vmem:[#allocation4 + $0x40] sm:$0xff]
          %v2995 = vld [vmem:[#allocation4 + $0x48] sm:$0xff]
          %v2996 = vld [vmem:[#allocation4 + $0x50] sm:$0xff]
          %v2997 = vld [vmem:[#allocation4 + $0x58] sm:$0xff]
          %v2998 = vld [vmem:[#allocation4 + $0x60] sm:$0xff]
          %v2999 = vld [vmem:[#allocation4 + $0x68] sm:$0xff]
          %v3000 = vld [vmem:[#allocation4 + $0x70] sm:$0xff]
          %v3001 = vld [vmem:[#allocation4 + $0x78] sm:$0xff]
          %v3002 = vld [vmem:[#allocation4 + $0x80] sm:$0xff]
          %v3003 = vld [vmem:[#allocation4 + $0x88] sm:$0xff]
          %v3004 = vld [vmem:[#allocation4 + $0x90] sm:$0xff]
          %v3005 = vld [vmem:[#allocation4 + $0x98] sm:$0xff]
          %v3006 = vld [vmem:[#allocation4 + $0xa0] sm:$0xff]
          %v3007 = vld [vmem:[#allocation4 + $0xa8] sm:$0xff]
          %v3008 = vld [vmem:[#allocation4 + $0xb0] sm:$0xff]
          %v3009 = vld [vmem:[#allocation4 + $0xb8] sm:$0xff]
          %v3010 = vld [vmem:[#allocation4 + $0xc0] sm:$0xff]
          %v3011 = vld [vmem:[#allocation4 + $0xc8] sm:$0xff]
          %v3012 = vld [vmem:[#allocation4 + $0xd0] sm:$0xff]
          %v3013 = vld [vmem:[#allocation4 + $0xd8] sm:$0xff]
          %v3014 = vld [vmem:[#allocation4 + $0xe0] sm:$0xff]
          %v3015 = vld [vmem:[#allocation4 + $0xe8] sm:$0xff]
          %v3016 = vld [vmem:[#allocation4 + $0xf0] sm:$0xff]
          %v3017 = vld [vmem:[#allocation4 + $0xf8] sm:$0xff]
          %v3018 = vmul.f32 %v2986, 0.001953125
          %v3019 = vmul.f32 %v2987, 0.001953125
          %v3020 = vmul.f32 %v2988, 0.001953125
          %v3021 = vmul.f32 %v2989, 0.001953125
          %v3022 = vmul.f32 %v2990, 0.001953125
          %v3023 = vmul.f32 %v2991, 0.001953125
          %v3024 = vmul.f32 %v2992, 0.001953125
          %v3025 = vmul.f32 %v2993, 0.001953125
          %v3026 = vmul.f32 %v2994, 0.001953125
          %v3027 = vmul.f32 %v2995, 0.001953125
          %v3028 = vmul.f32 %v2996, 0.001953125
          %v3029 = vmul.f32 %v2997, 0.001953125
          %v3030 = vmul.f32 %v2998, 0.001953125
          %v3031 = vmul.f32 %v2999, 0.001953125
          %v3032 = vmul.f32 %v3000, 0.001953125
          %v3033 = vmul.f32 %v3001, 0.001953125
          %v3034 = vmul.f32 %v3002, 0.001953125
          %v3035 = vmul.f32 %v3003, 0.001953125
          %v3036 = vmul.f32 %v3004, 0.001953125
          %v3037 = vmul.f32 %v3005, 0.001953125
          %v3038 = vmul.f32 %v3006, 0.001953125
          %v3039 = vmul.f32 %v3007, 0.001953125
          %v3040 = vmul.f32 %v3008, 0.001953125
          %v3041 = vmul.f32 %v3009, 0.001953125
          %v3042 = vmul.f32 %v3010, 0.001953125
          %v3043 = vmul.f32 %v3011, 0.001953125
          %v3044 = vmul.f32 %v3012, 0.001953125
          %v3045 = vmul.f32 %v3013, 0.001953125
          %v3046 = vmul.f32 %v3014, 0.001953125
          %v3047 = vmul.f32 %v3015, 0.001953125
          %v3048 = vmul.f32 %v3016, 0.001953125
          %v3049 = vmul.f32 %v3017, 0.001953125
          %v3050 = vld [vmem:[#allocation5] sm:$0xff]
          %v3051 = vld [vmem:[#allocation5 + $0x8] sm:$0xff]
          %v3052 = vld [vmem:[#allocation5 + $0x10] sm:$0xff]
          %v3053 = vld [vmem:[#allocation5 + $0x18] sm:$0xff]
          %v3054 = vld [vmem:[#allocation5 + $0x20] sm:$0xff]
          %v3055 = vld [vmem:[#allocation5 + $0x28] sm:$0xff]
          %v3056 = vld [vmem:[#allocation5 + $0x30] sm:$0xff]
          %v3057 = vld [vmem:[#allocation5 + $0x38] sm:$0xff]
          %v3058 = vld [vmem:[#allocation5 + $0x40] sm:$0xff]
          %v3059 = vld [vmem:[#allocation5 + $0x48] sm:$0xff]
          %v3060 = vld [vmem:[#allocation5 + $0x50] sm:$0xff]
          %v3061 = vld [vmem:[#allocation5 + $0x58] sm:$0xff]
          %v3062 = vld [vmem:[#allocation5 + $0x60] sm:$0xff]
          %v3063 = vld [vmem:[#allocation5 + $0x68] sm:$0xff]
          %v3064 = vld [vmem:[#allocation5 + $0x70] sm:$0xff]
          %v3065 = vld [vmem:[#allocation5 + $0x78] sm:$0xff]
          %v3066 = vld [vmem:[#allocation5 + $0x80] sm:$0xff]
          %v3067 = vld [vmem:[#allocation5 + $0x88] sm:$0xff]
          %v3068 = vld [vmem:[#allocation5 + $0x90] sm:$0xff]
          %v3069 = vld [vmem:[#allocation5 + $0x98] sm:$0xff]
          %v3070 = vld [vmem:[#allocation5 + $0xa0] sm:$0xff]
          %v3071 = vld [vmem:[#allocation5 + $0xa8] sm:$0xff]
          %v3072 = vld [vmem:[#allocation5 + $0xb0] sm:$0xff]
          %v3073 = vld [vmem:[#allocation5 + $0xb8] sm:$0xff]
          %v3074 = vld [vmem:[#allocation5 + $0xc0] sm:$0xff]
          %v3075 = vld [vmem:[#allocation5 + $0xc8] sm:$0xff]
          %v3076 = vld [vmem:[#allocation5 + $0xd0] sm:$0xff]
          %v3077 = vld [vmem:[#allocation5 + $0xd8] sm:$0xff]
          %v3078 = vld [vmem:[#allocation5 + $0xe0] sm:$0xff]
          %v3079 = vld [vmem:[#allocation5 + $0xe8] sm:$0xff]
          %v3080 = vld [vmem:[#allocation5 + $0xf0] sm:$0xff]
          %v3081 = vld [vmem:[#allocation5 + $0xf8] sm:$0xff]
          %v3082 = vmul.f32 %v3050, 0.001953125
          %v3083 = vmul.f32 %v3051, 0.001953125
          %v3084 = vmul.f32 %v3052, 0.001953125
          %v3085 = vmul.f32 %v3053, 0.001953125
          %v3086 = vmul.f32 %v3054, 0.001953125
          %v3087 = vmul.f32 %v3055, 0.001953125
          %v3088 = vmul.f32 %v3056, 0.001953125
          %v3089 = vmul.f32 %v3057, 0.001953125
          %v3090 = vmul.f32 %v3058, 0.001953125
          %v3091 = vmul.f32 %v3059, 0.001953125
          %v3092 = vmul.f32 %v3060, 0.001953125
          %v3093 = vmul.f32 %v3061, 0.001953125
          %v3094 = vmul.f32 %v3062, 0.001953125
          %v3095 = vmul.f32 %v3063, 0.001953125
          %v3096 = vmul.f32 %v3064, 0.001953125
          %v3097 = vmul.f32 %v3065, 0.001953125
          %v3098 = vmul.f32 %v3066, 0.001953125
          %v3099 = vmul.f32 %v3067, 0.001953125
          %v3100 = vmul.f32 %v3068, 0.001953125
          %v3101 = vmul.f32 %v3069, 0.001953125
          %v3102 = vmul.f32 %v3070, 0.001953125
          %v3103 = vmul.f32 %v3071, 0.001953125
          %v3104 = vmul.f32 %v3072, 0.001953125
          %v3105 = vmul.f32 %v3073, 0.001953125
          %v3106 = vmul.f32 %v3074, 0.001953125
          %v3107 = vmul.f32 %v3075, 0.001953125
          %v3108 = vmul.f32 %v3076, 0.001953125
          %v3109 = vmul.f32 %v3077, 0.001953125
          %v3110 = vmul.f32 %v3078, 0.001953125
          %v3111 = vmul.f32 %v3079, 0.001953125
          %v3112 = vmul.f32 %v3080, 0.001953125
          %v3113 = vmul.f32 %v3081, 0.001953125
          %v3114 = vmul.f32 %v3018, %v3018
          %v3115 = vmul.f32 %v3019, %v3019
          %v3116 = vmul.f32 %v3020, %v3020
          %v3117 = vmul.f32 %v3021, %v3021
          %v3118 = vmul.f32 %v3022, %v3022
          %v3119 = vmul.f32 %v3023, %v3023
          %v3120 = vmul.f32 %v3024, %v3024
          %v3121 = vmul.f32 %v3025, %v3025
          %v3122 = vmul.f32 %v3026, %v3026
          %v3123 = vmul.f32 %v3027, %v3027
          %v3124 = vmul.f32 %v3028, %v3028
          %v3125 = vmul.f32 %v3029, %v3029
          %v3126 = vmul.f32 %v3030, %v3030
          %v3127 = vmul.f32 %v3031, %v3031
          %v3128 = vmul.f32 %v3032, %v3032
          %v3129 = vmul.f32 %v3033, %v3033
          %v3130 = vmul.f32 %v3034, %v3034
          %v3131 = vmul.f32 %v3035, %v3035
          %v3132 = vmul.f32 %v3036, %v3036
          %v3133 = vmul.f32 %v3037, %v3037
          %v3134 = vmul.f32 %v3038, %v3038
          %v3135 = vmul.f32 %v3039, %v3039
          %v3136 = vmul.f32 %v3040, %v3040
          %v3137 = vmul.f32 %v3041, %v3041
          %v3138 = vmul.f32 %v3042, %v3042
          %v3139 = vmul.f32 %v3043, %v3043
          %v3140 = vmul.f32 %v3044, %v3044
          %v3141 = vmul.f32 %v3045, %v3045
          %v3142 = vmul.f32 %v3046, %v3046
          %v3143 = vmul.f32 %v3047, %v3047
          %v3144 = vmul.f32 %v3048, %v3048
          %v3145 = vmul.f32 %v3049, %v3049
          %v3146 = vsub.f32 %v3082, %v3114
          %v3147 = vsub.f32 %v3083, %v3115
          %v3148 = vsub.f32 %v3084, %v3116
          %v3149 = vsub.f32 %v3085, %v3117
          %v3150 = vsub.f32 %v3086, %v3118
          %v3151 = vsub.f32 %v3087, %v3119
          %v3152 = vsub.f32 %v3088, %v3120
          %v3153 = vsub.f32 %v3089, %v3121
          %v3154 = vsub.f32 %v3090, %v3122
          %v3155 = vsub.f32 %v3091, %v3123
          %v3156 = vsub.f32 %v3092, %v3124
          %v3157 = vsub.f32 %v3093, %v3125
          %v3158 = vsub.f32 %v3094, %v3126
          %v3159 = vsub.f32 %v3095, %v3127
          %v3160 = vsub.f32 %v3096, %v3128
          %v3161 = vsub.f32 %v3097, %v3129
          %v3162 = vsub.f32 %v3098, %v3130
          %v3163 = vsub.f32 %v3099, %v3131
          %v3164 = vsub.f32 %v3100, %v3132
          %v3165 = vsub.f32 %v3101, %v3133
          %v3166 = vsub.f32 %v3102, %v3134
          %v3167 = vsub.f32 %v3103, %v3135
          %v3168 = vsub.f32 %v3104, %v3136
          %v3169 = vsub.f32 %v3105, %v3137
          %v3170 = vsub.f32 %v3106, %v3138
          %v3171 = vsub.f32 %v3107, %v3139
          %v3172 = vsub.f32 %v3108, %v3140
          %v3173 = vsub.f32 %v3109, %v3141
          %v3174 = vsub.f32 %v3110, %v3142
          %v3175 = vsub.f32 %v3111, %v3143
          %v3176 = vsub.f32 %v3112, %v3144
          %v3177 = vsub.f32 %v3113, %v3145
          %v3178 = vmax.f32 %v3146, 0.0
          %v3179 = vmax.f32 %v3147, 0.0
          %v3180 = vmax.f32 %v3148, 0.0
          %v3181 = vmax.f32 %v3149, 0.0
          %v3182 = vmax.f32 %v3150, 0.0
          %v3183 = vmax.f32 %v3151, 0.0
          %v3184 = vmax.f32 %v3152, 0.0
          %v3185 = vmax.f32 %v3153, 0.0
          %v3186 = vmax.f32 %v3154, 0.0
          %v3187 = vmax.f32 %v3155, 0.0
          %v3188 = vmax.f32 %v3156, 0.0
          %v3189 = vmax.f32 %v3157, 0.0
          %v3190 = vmax.f32 %v3158, 0.0
          %v3191 = vmax.f32 %v3159, 0.0
          %v3192 = vmax.f32 %v3160, 0.0
          %v3193 = vmax.f32 %v3161, 0.0
          %v3194 = vmax.f32 %v3162, 0.0
          %v3195 = vmax.f32 %v3163, 0.0
          %v3196 = vmax.f32 %v3164, 0.0
          %v3197 = vmax.f32 %v3165, 0.0
          %v3198 = vmax.f32 %v3166, 0.0
          %v3199 = vmax.f32 %v3167, 0.0
          %v3200 = vmax.f32 %v3168, 0.0
          %v3201 = vmax.f32 %v3169, 0.0
          %v3202 = vmax.f32 %v3170, 0.0
          %v3203 = vmax.f32 %v3171, 0.0
          %v3204 = vmax.f32 %v3172, 0.0
          %v3205 = vmax.f32 %v3173, 0.0
          %v3206 = vmax.f32 %v3174, 0.0
          %v3207 = vmax.f32 %v3175, 0.0
          %v3208 = vmax.f32 %v3176, 0.0
          %v3209 = vmax.f32 %v3177, 0.0
          %v3210 = vadd.f32 %v3178, 1e-05
          %v3211 = vadd.f32 %v3179, 1e-05
          %v3212 = vadd.f32 %v3180, 1e-05
          %v3213 = vadd.f32 %v3181, 1e-05
          %v3214 = vadd.f32 %v3182, 1e-05
          %v3215 = vadd.f32 %v3183, 1e-05
          %v3216 = vadd.f32 %v3184, 1e-05
          %v3217 = vadd.f32 %v3185, 1e-05
          %v3218 = vadd.f32 %v3186, 1e-05
          %v3219 = vadd.f32 %v3187, 1e-05
          %v3220 = vadd.f32 %v3188, 1e-05
          %v3221 = vadd.f32 %v3189, 1e-05
          %v3222 = vadd.f32 %v3190, 1e-05
          %v3223 = vadd.f32 %v3191, 1e-05
          %v3224 = vadd.f32 %v3192, 1e-05
          %v3225 = vadd.f32 %v3193, 1e-05
          %v3226 = vadd.f32 %v3194, 1e-05
          %v3227 = vadd.f32 %v3195, 1e-05
          %v3228 = vadd.f32 %v3196, 1e-05
          %v3229 = vadd.f32 %v3197, 1e-05
          %v3230 = vadd.f32 %v3198, 1e-05
          %v3231 = vadd.f32 %v3199, 1e-05
          %v3232 = vadd.f32 %v3200, 1e-05
          %v3233 = vadd.f32 %v3201, 1e-05
          %v3234 = vadd.f32 %v3202, 1e-05
          %v3235 = vadd.f32 %v3203, 1e-05
          %v3236 = vadd.f32 %v3204, 1e-05
          %v3237 = vadd.f32 %v3205, 1e-05
          %v3238 = vadd.f32 %v3206, 1e-05
          %v3239 = vadd.f32 %v3207, 1e-05
          %v3240 = vadd.f32 %v3208, 1e-05
          %v3241 = vadd.f32 %v3209, 1e-05
          %v3242 = vrsqrt.pop %v3210
          %v3243 = vrsqrt.pop %v3211
          %v3244 = vrsqrt.pop %v3212
          %v3245 = vrsqrt.pop %v3213
          %v3246 = vrsqrt.pop %v3214
          %v3247 = vrsqrt.pop %v3215
          %v3248 = vrsqrt.pop %v3216
          %v3249 = vrsqrt.pop %v3217
          %v3250 = vrsqrt.pop %v3218
          %v3251 = vrsqrt.pop %v3219
          %v3252 = vrsqrt.pop %v3220
          %v3253 = vrsqrt.pop %v3221
          %v3254 = vrsqrt.pop %v3222
          %v3255 = vrsqrt.pop %v3223
          %v3256 = vrsqrt.pop %v3224
          %v3257 = vrsqrt.pop %v3225
          %v3258 = vrsqrt.pop %v3226
          %v3259 = vrsqrt.pop %v3227
          %v3260 = vrsqrt.pop %v3228
          %v3261 = vrsqrt.pop %v3229
          %v3262 = vrsqrt.pop %v3230
          %v3263 = vrsqrt.pop %v3231
          %v3264 = vrsqrt.pop %v3232
          %v3265 = vrsqrt.pop %v3233
          %v3266 = vrsqrt.pop %v3234
          %v3267 = vrsqrt.pop %v3235
          %v3268 = vrsqrt.pop %v3236
          %v3269 = vrsqrt.pop %v3237
          %v3270 = vrsqrt.pop %v3238
          %v3271 = vrsqrt.pop %v3239
          %v3272 = vrsqrt.pop %v3240
          %v3273 = vrsqrt.pop %v3241
          %v3274 = vld [vmem:[#allocation3] sm:$0xff]
          %v3275 = vld [vmem:[#allocation3 + $0x8] sm:$0xff]
          %v3276 = vld [vmem:[#allocation3 + $0x10] sm:$0xff]
          %v3277 = vld [vmem:[#allocation3 + $0x18] sm:$0xff]
          %v3278 = vld [vmem:[#allocation3 + $0x20] sm:$0xff]
          %v3279 = vld [vmem:[#allocation3 + $0x28] sm:$0xff]
          %v3280 = vld [vmem:[#allocation3 + $0x30] sm:$0xff]
          %v3281 = vld [vmem:[#allocation3 + $0x38] sm:$0xff]
          %v3282 = vld [vmem:[#allocation3 + $0x40] sm:$0xff]
          %v3283 = vld [vmem:[#allocation3 + $0x48] sm:$0xff]
          %v3284 = vld [vmem:[#allocation3 + $0x50] sm:$0xff]
          %v3285 = vld [vmem:[#allocation3 + $0x58] sm:$0xff]
          %v3286 = vld [vmem:[#allocation3 + $0x60] sm:$0xff]
          %v3287 = vld [vmem:[#allocation3 + $0x68] sm:$0xff]
          %v3288 = vld [vmem:[#allocation3 + $0x70] sm:$0xff]
          %v3289 = vld [vmem:[#allocation3 + $0x78] sm:$0xff]
          %v3290 = vld [vmem:[#allocation3 + $0x80] sm:$0xff]
          %v3291 = vld [vmem:[#allocation3 + $0x88] sm:$0xff]
          %v3292 = vld [vmem:[#allocation3 + $0x90] sm:$0xff]
          %v3293 = vld [vmem:[#allocation3 + $0x98] sm:$0xff]
          %v3294 = vld [vmem:[#allocation3 + $0xa0] sm:$0xff]
          %v3295 = vld [vmem:[#allocation3 + $0xa8] sm:$0xff]
          %v3296 = vld [vmem:[#allocation3 + $0xb0] sm:$0xff]
          %v3297 = vld [vmem:[#allocation3 + $0xb8] sm:$0xff]
          %v3298 = vld [vmem:[#allocation3 + $0xc0] sm:$0xff]
          %v3299 = vld [vmem:[#allocation3 + $0xc8] sm:$0xff]
          %v3300 = vld [vmem:[#allocation3 + $0xd0] sm:$0xff]
          %v3301 = vld [vmem:[#allocation3 + $0xd8] sm:$0xff]
          %v3302 = vld [vmem:[#allocation3 + $0xe0] sm:$0xff]
          %v3303 = vld [vmem:[#allocation3 + $0xe8] sm:$0xff]
          %v3304 = vld [vmem:[#allocation3 + $0xf0] sm:$0xff]
          %v3305 = vld [vmem:[#allocation3 + $0xf8] sm:$0xff]
          %v3306 = vld [vmem:[%s6] sm:$0x1]
          %3308 = vset.pattern.permute.xlu0 0
          %3309 = vperm.xlu0 %3308, %v3018
          %v3310 = vpop.permute.xlu0 %3309
          %3313 = vset.pattern.permute.xlu0 0
          %3314 = vperm.xlu0 %3313, %v3019
          %v3315 = vpop.permute.xlu0 %3314
          %3318 = vset.pattern.permute.xlu0 0
          %3319 = vperm.xlu0 %3318, %v3020
          %v3320 = vpop.permute.xlu0 %3319
          %3323 = vset.pattern.permute.xlu0 0
          %3324 = vperm.xlu0 %3323, %v3021
          %v3325 = vpop.permute.xlu0 %3324
          %3328 = vset.pattern.permute.xlu0 0
          %3329 = vperm.xlu0 %3328, %v3022
          %v3330 = vpop.permute.xlu0 %3329
          %3333 = vset.pattern.permute.xlu0 0
          %3334 = vperm.xlu0 %3333, %v3023
          %v3335 = vpop.permute.xlu0 %3334
          %3338 = vset.pattern.permute.xlu0 0
          %3339 = vperm.xlu0 %3338, %v3024
          %v3340 = vpop.permute.xlu0 %3339
          %3343 = vset.pattern.permute.xlu0 0
          %3344 = vperm.xlu0 %3343, %v3025
          %v3345 = vpop.permute.xlu0 %3344
          %3348 = vset.pattern.permute.xlu0 0
          %3349 = vperm.xlu0 %3348, %v3026
          %v3350 = vpop.permute.xlu0 %3349
          %3353 = vset.pattern.permute.xlu0 0
          %3354 = vperm.xlu0 %3353, %v3027
          %v3355 = vpop.permute.xlu0 %3354
          %3358 = vset.pattern.permute.xlu0 0
          %3359 = vperm.xlu0 %3358, %v3028
          %v3360 = vpop.permute.xlu0 %3359
          %3363 = vset.pattern.permute.xlu0 0
          %3364 = vperm.xlu0 %3363, %v3029
          %v3365 = vpop.permute.xlu0 %3364
          %3368 = vset.pattern.permute.xlu0 0
          %3369 = vperm.xlu0 %3368, %v3030
          %v3370 = vpop.permute.xlu0 %3369
          %3373 = vset.pattern.permute.xlu0 0
          %3374 = vperm.xlu0 %3373, %v3031
          %v3375 = vpop.permute.xlu0 %3374
          %3378 = vset.pattern.permute.xlu0 0
          %3379 = vperm.xlu0 %3378, %v3032
          %v3380 = vpop.permute.xlu0 %3379
          %3383 = vset.pattern.permute.xlu0 0
          %3384 = vperm.xlu0 %3383, %v3033
          %v3385 = vpop.permute.xlu0 %3384
          %3388 = vset.pattern.permute.xlu0 0
          %3389 = vperm.xlu0 %3388, %v3034
          %v3390 = vpop.permute.xlu0 %3389
          %3393 = vset.pattern.permute.xlu0 0
          %3394 = vperm.xlu0 %3393, %v3035
          %v3395 = vpop.permute.xlu0 %3394
          %3398 = vset.pattern.permute.xlu0 0
          %3399 = vperm.xlu0 %3398, %v3036
          %v3400 = vpop.permute.xlu0 %3399
          %3403 = vset.pattern.permute.xlu0 0
          %3404 = vperm.xlu0 %3403, %v3037
          %v3405 = vpop.permute.xlu0 %3404
          %3408 = vset.pattern.permute.xlu0 0
          %3409 = vperm.xlu0 %3408, %v3038
          %v3410 = vpop.permute.xlu0 %3409
          %3413 = vset.pattern.permute.xlu0 0
          %3414 = vperm.xlu0 %3413, %v3039
          %v3415 = vpop.permute.xlu0 %3414
          %3418 = vset.pattern.permute.xlu0 0
          %3419 = vperm.xlu0 %3418, %v3040
          %v3420 = vpop.permute.xlu0 %3419
          %3423 = vset.pattern.permute.xlu0 0
          %3424 = vperm.xlu0 %3423, %v3041
          %v3425 = vpop.permute.xlu0 %3424
          %3428 = vset.pattern.permute.xlu0 0
          %3429 = vperm.xlu0 %3428, %v3042
          %v3430 = vpop.permute.xlu0 %3429
          %3433 = vset.pattern.permute.xlu0 0
          %3434 = vperm.xlu0 %3433, %v3043
          %v3435 = vpop.permute.xlu0 %3434
          %3438 = vset.pattern.permute.xlu0 0
          %3439 = vperm.xlu0 %3438, %v3044
          %v3440 = vpop.permute.xlu0 %3439
          %3443 = vset.pattern.permute.xlu0 0
          %3444 = vperm.xlu0 %3443, %v3045
          %v3445 = vpop.permute.xlu0 %3444
          %3448 = vset.pattern.permute.xlu0 0
          %3449 = vperm.xlu0 %3448, %v3046
          %v3450 = vpop.permute.xlu0 %3449
          %3453 = vset.pattern.permute.xlu0 0
          %3454 = vperm.xlu0 %3453, %v3047
          %v3455 = vpop.permute.xlu0 %3454
          %3458 = vset.pattern.permute.xlu0 0
          %3459 = vperm.xlu0 %3458, %v3048
          %v3460 = vpop.permute.xlu0 %3459
          %3463 = vset.pattern.permute.xlu0 0
          %3464 = vperm.xlu0 %3463, %v3049
          %v3465 = vpop.permute.xlu0 %3464
          %v3468 = vlaneseq
          %v3469 = vshrl.u32 %v3468, 7
          %v3470 = vsub.s32 0, %v3469
          %v3471 = vrot.slane %v3306, %v3470
          %v3473 = vmul.f32 %v3310, %v3471
          %v3474 = vmul.f32 %v3315, %v3471
          %v3475 = vmul.f32 %v3320, %v3471
          %v3476 = vmul.f32 %v3325, %v3471
          %v3477 = vmul.f32 %v3330, %v3471
          %v3478 = vmul.f32 %v3335, %v3471
          %v3479 = vmul.f32 %v3340, %v3471
          %v3480 = vmul.f32 %v3345, %v3471
          %v3481 = vmul.f32 %v3350, %v3471
          %v3482 = vmul.f32 %v3355, %v3471
          %v3483 = vmul.f32 %v3360, %v3471
          %v3484 = vmul.f32 %v3365, %v3471
          %v3485 = vmul.f32 %v3370, %v3471
          %v3486 = vmul.f32 %v3375, %v3471
          %v3487 = vmul.f32 %v3380, %v3471
          %v3488 = vmul.f32 %v3385, %v3471
          %v3489 = vmul.f32 %v3390, %v3471
          %v3490 = vmul.f32 %v3395, %v3471
          %v3491 = vmul.f32 %v3400, %v3471
          %v3492 = vmul.f32 %v3405, %v3471
          %v3493 = vmul.f32 %v3410, %v3471
          %v3494 = vmul.f32 %v3415, %v3471
          %v3495 = vmul.f32 %v3420, %v3471
          %v3496 = vmul.f32 %v3425, %v3471
          %v3497 = vmul.f32 %v3430, %v3471
          %v3498 = vmul.f32 %v3435, %v3471
          %v3499 = vmul.f32 %v3440, %v3471
          %v3500 = vmul.f32 %v3445, %v3471
          %v3501 = vmul.f32 %v3450, %v3471
          %v3502 = vmul.f32 %v3455, %v3471
          %v3503 = vmul.f32 %v3460, %v3471
          %v3504 = vmul.f32 %v3465, %v3471
          %v3505 = vsub.f32 %v3274, %v3473
          %v3506 = vsub.f32 %v3275, %v3474
          %v3507 = vsub.f32 %v3276, %v3475
          %v3508 = vsub.f32 %v3277, %v3476
          %v3509 = vsub.f32 %v3278, %v3477
          %v3510 = vsub.f32 %v3279, %v3478
          %v3511 = vsub.f32 %v3280, %v3479
          %v3512 = vsub.f32 %v3281, %v3480
          %v3513 = vsub.f32 %v3282, %v3481
          %v3514 = vsub.f32 %v3283, %v3482
          %v3515 = vsub.f32 %v3284, %v3483
          %v3516 = vsub.f32 %v3285, %v3484
          %v3517 = vsub.f32 %v3286, %v3485
          %v3518 = vsub.f32 %v3287, %v3486
          %v3519 = vsub.f32 %v3288, %v3487
          %v3520 = vsub.f32 %v3289, %v3488
          %v3521 = vsub.f32 %v3290, %v3489
          %v3522 = vsub.f32 %v3291, %v3490
          %v3523 = vsub.f32 %v3292, %v3491
          %v3524 = vsub.f32 %v3293, %v3492
          %v3525 = vsub.f32 %v3294, %v3493
          %v3526 = vsub.f32 %v3295, %v3494
          %v3527 = vsub.f32 %v3296, %v3495
          %v3528 = vsub.f32 %v3297, %v3496
          %v3529 = vsub.f32 %v3298, %v3497
          %v3530 = vsub.f32 %v3299, %v3498
          %v3531 = vsub.f32 %v3300, %v3499
          %v3532 = vsub.f32 %v3301, %v3500
          %v3533 = vsub.f32 %v3302, %v3501
          %v3534 = vsub.f32 %v3303, %v3502
          %v3535 = vsub.f32 %v3304, %v3503
          %v3536 = vsub.f32 %v3305, %v3504
          %3538 = vset.pattern.permute.xlu0 0
          %3539 = vperm.xlu0 %3538, %v3242
          %v3540 = vpop.permute.xlu0 %3539
          %3543 = vset.pattern.permute.xlu0 0
          %3544 = vperm.xlu0 %3543, %v3243
          %v3545 = vpop.permute.xlu0 %3544
          %3548 = vset.pattern.permute.xlu0 0
          %3549 = vperm.xlu0 %3548, %v3244
          %v3550 = vpop.permute.xlu0 %3549
          %3553 = vset.pattern.permute.xlu0 0
          %3554 = vperm.xlu0 %3553, %v3245
          %v3555 = vpop.permute.xlu0 %3554
          %3558 = vset.pattern.permute.xlu0 0
          %3559 = vperm.xlu0 %3558, %v3246
          %v3560 = vpop.permute.xlu0 %3559
          %3563 = vset.pattern.permute.xlu0 0
          %3564 = vperm.xlu0 %3563, %v3247
          %v3565 = vpop.permute.xlu0 %3564
          %3568 = vset.pattern.permute.xlu0 0
          %3569 = vperm.xlu0 %3568, %v3248
          %v3570 = vpop.permute.xlu0 %3569
          %3573 = vset.pattern.permute.xlu0 0
          %3574 = vperm.xlu0 %3573, %v3249
          %v3575 = vpop.permute.xlu0 %3574
          %3578 = vset.pattern.permute.xlu0 0
          %3579 = vperm.xlu0 %3578, %v3250
          %v3580 = vpop.permute.xlu0 %3579
          %3583 = vset.pattern.permute.xlu0 0
          %3584 = vperm.xlu0 %3583, %v3251
          %v3585 = vpop.permute.xlu0 %3584
          %3588 = vset.pattern.permute.xlu0 0
          %3589 = vperm.xlu0 %3588, %v3252
          %v3590 = vpop.permute.xlu0 %3589
          %3593 = vset.pattern.permute.xlu0 0
          %3594 = vperm.xlu0 %3593, %v3253
          %v3595 = vpop.permute.xlu0 %3594
          %3598 = vset.pattern.permute.xlu0 0
          %3599 = vperm.xlu0 %3598, %v3254
          %v3600 = vpop.permute.xlu0 %3599
          %3603 = vset.pattern.permute.xlu0 0
          %3604 = vperm.xlu0 %3603, %v3255
          %v3605 = vpop.permute.xlu0 %3604
          %3608 = vset.pattern.permute.xlu0 0
          %3609 = vperm.xlu0 %3608, %v3256
          %v3610 = vpop.permute.xlu0 %3609
          %3613 = vset.pattern.permute.xlu0 0
          %3614 = vperm.xlu0 %3613, %v3257
          %v3615 = vpop.permute.xlu0 %3614
          %3618 = vset.pattern.permute.xlu0 0
          %3619 = vperm.xlu0 %3618, %v3258
          %v3620 = vpop.permute.xlu0 %3619
          %3623 = vset.pattern.permute.xlu0 0
          %3624 = vperm.xlu0 %3623, %v3259
          %v3625 = vpop.permute.xlu0 %3624
          %3628 = vset.pattern.permute.xlu0 0
          %3629 = vperm.xlu0 %3628, %v3260
          %v3630 = vpop.permute.xlu0 %3629
          %3633 = vset.pattern.permute.xlu0 0
          %3634 = vperm.xlu0 %3633, %v3261
          %v3635 = vpop.permute.xlu0 %3634
          %3638 = vset.pattern.permute.xlu0 0
          %3639 = vperm.xlu0 %3638, %v3262
          %v3640 = vpop.permute.xlu0 %3639
          %3643 = vset.pattern.permute.xlu0 0
          %3644 = vperm.xlu0 %3643, %v3263
          %v3645 = vpop.permute.xlu0 %3644
          %3648 = vset.pattern.permute.xlu0 0
          %3649 = vperm.xlu0 %3648, %v3264
          %v3650 = vpop.permute.xlu0 %3649
          %3653 = vset.pattern.permute.xlu0 0
          %3654 = vperm.xlu0 %3653, %v3265
          %v3655 = vpop.permute.xlu0 %3654
          %3658 = vset.pattern.permute.xlu0 0
          %3659 = vperm.xlu0 %3658, %v3266
          %v3660 = vpop.permute.xlu0 %3659
          %3663 = vset.pattern.permute.xlu0 0
          %3664 = vperm.xlu0 %3663, %v3267
          %v3665 = vpop.permute.xlu0 %3664
          %3668 = vset.pattern.permute.xlu0 0
          %3669 = vperm.xlu0 %3668, %v3268
          %v3670 = vpop.permute.xlu0 %3669
          %3673 = vset.pattern.permute.xlu0 0
          %3674 = vperm.xlu0 %3673, %v3269
          %v3675 = vpop.permute.xlu0 %3674
          %3678 = vset.pattern.permute.xlu0 0
          %3679 = vperm.xlu0 %3678, %v3270
          %v3680 = vpop.permute.xlu0 %3679
          %3683 = vset.pattern.permute.xlu0 0
          %3684 = vperm.xlu0 %3683, %v3271
          %v3685 = vpop.permute.xlu0 %3684
          %3688 = vset.pattern.permute.xlu0 0
          %3689 = vperm.xlu0 %3688, %v3272
          %v3690 = vpop.permute.xlu0 %3689
          %3693 = vset.pattern.permute.xlu0 0
          %3694 = vperm.xlu0 %3693, %v3273
          %v3695 = vpop.permute.xlu0 %3694
          %v3697 = vmul.f32 %v3540, %v3505
          %v3698 = vmul.f32 %v3545, %v3506
          %v3699 = vmul.f32 %v3550, %v3507
          %v3700 = vmul.f32 %v3555, %v3508
          %v3701 = vmul.f32 %v3560, %v3509
          %v3702 = vmul.f32 %v3565, %v3510
          %v3703 = vmul.f32 %v3570, %v3511
          %v3704 = vmul.f32 %v3575, %v3512
          %v3705 = vmul.f32 %v3580, %v3513
          %v3706 = vmul.f32 %v3585, %v3514
          %v3707 = vmul.f32 %v3590, %v3515
          %v3708 = vmul.f32 %v3595, %v3516
          %v3709 = vmul.f32 %v3600, %v3517
          %v3710 = vmul.f32 %v3605, %v3518
          %v3711 = vmul.f32 %v3610, %v3519
          %v3712 = vmul.f32 %v3615, %v3520
          %v3713 = vmul.f32 %v3620, %v3521
          %v3714 = vmul.f32 %v3625, %v3522
          %v3715 = vmul.f32 %v3630, %v3523
          %v3716 = vmul.f32 %v3635, %v3524
          %v3717 = vmul.f32 %v3640, %v3525
          %v3718 = vmul.f32 %v3645, %v3526
          %v3719 = vmul.f32 %v3650, %v3527
          %v3720 = vmul.f32 %v3655, %v3528
          %v3721 = vmul.f32 %v3660, %v3529
          %v3722 = vmul.f32 %v3665, %v3530
          %v3723 = vmul.f32 %v3670, %v3531
          %v3724 = vmul.f32 %v3675, %v3532
          %v3725 = vmul.f32 %v3680, %v3533
          %v3726 = vmul.f32 %v3685, %v3534
          %v3727 = vmul.f32 %v3690, %v3535
          %v3728 = vmul.f32 %v3695, %v3536
          %v3729 = vld [vmem:[%s7] sm:$0x1]
          %v3731 = vlaneseq
          %v3732 = vshrl.u32 %v3731, 7
          %v3733 = vsub.s32 0, %v3732
          %v3734 = vrot.slane %v3729, %v3733
          %v3736 = vadd.f32 %v3697, %v3734
          %v3737 = vadd.f32 %v3698, %v3734
          %v3738 = vadd.f32 %v3699, %v3734
          %v3739 = vadd.f32 %v3700, %v3734
          %v3740 = vadd.f32 %v3701, %v3734
          %v3741 = vadd.f32 %v3702, %v3734
          %v3742 = vadd.f32 %v3703, %v3734
          %v3743 = vadd.f32 %v3704, %v3734
          %v3744 = vadd.f32 %v3705, %v3734
          %v3745 = vadd.f32 %v3706, %v3734
          %v3746 = vadd.f32 %v3707, %v3734
          %v3747 = vadd.f32 %v3708, %v3734
          %v3748 = vadd.f32 %v3709, %v3734
          %v3749 = vadd.f32 %v3710, %v3734
          %v3750 = vadd.f32 %v3711, %v3734
          %v3751 = vadd.f32 %v3712, %v3734
          %v3752 = vadd.f32 %v3713, %v3734
          %v3753 = vadd.f32 %v3714, %v3734
          %v3754 = vadd.f32 %v3715, %v3734
          %v3755 = vadd.f32 %v3716, %v3734
          %v3756 = vadd.f32 %v3717, %v3734
          %v3757 = vadd.f32 %v3718, %v3734
          %v3758 = vadd.f32 %v3719, %v3734
          %v3759 = vadd.f32 %v3720, %v3734
          %v3760 = vadd.f32 %v3721, %v3734
          %v3761 = vadd.f32 %v3722, %v3734
          %v3762 = vadd.f32 %v3723, %v3734
          %v3763 = vadd.f32 %v3724, %v3734
          %v3764 = vadd.f32 %v3725, %v3734
          %v3765 = vadd.f32 %v3726, %v3734
          %v3766 = vadd.f32 %v3727, %v3734
          %v3767 = vadd.f32 %v3728, %v3734
          %3768 = vst [vmem:[%s463] sm:$0xff] %v3736
          %3769 = vst [vmem:[%s463 + $0x8] sm:$0xff] %v3737
          %3770 = vst [vmem:[%s463 + $0x10] sm:$0xff] %v3738
          %3771 = vst [vmem:[%s463 + $0x18] sm:$0xff] %v3739
          %3772 = vst [vmem:[%s463 + $0x20] sm:$0xff] %v3740
          %3773 = vst [vmem:[%s463 + $0x28] sm:$0xff] %v3741
          %3774 = vst [vmem:[%s463 + $0x30] sm:$0xff] %v3742
          %3775 = vst [vmem:[%s463 + $0x38] sm:$0xff] %v3743
          %3776 = vst [vmem:[%s463 + $0x40] sm:$0xff] %v3744
          %3777 = vst [vmem:[%s463 + $0x48] sm:$0xff] %v3745
          %3778 = vst [vmem:[%s463 + $0x50] sm:$0xff] %v3746
          %3779 = vst [vmem:[%s463 + $0x58] sm:$0xff] %v3747
          %3780 = vst [vmem:[%s463 + $0x60] sm:$0xff] %v3748
          %3781 = vst [vmem:[%s463 + $0x68] sm:$0xff] %v3749
          %3782 = vst [vmem:[%s463 + $0x70] sm:$0xff] %v3750
          %3783 = vst [vmem:[%s463 + $0x78] sm:$0xff] %v3751
          %3784 = vst [vmem:[%s463 + $0x80] sm:$0xff] %v3752
          %3785 = vst [vmem:[%s463 + $0x88] sm:$0xff] %v3753
          %3786 = vst [vmem:[%s463 + $0x90] sm:$0xff] %v3754
          %3787 = vst [vmem:[%s463 + $0x98] sm:$0xff] %v3755
          %3788 = vst [vmem:[%s463 + $0xa0] sm:$0xff] %v3756
          %3789 = vst [vmem:[%s463 + $0xa8] sm:$0xff] %v3757
          %3790 = vst [vmem:[%s463 + $0xb0] sm:$0xff] %v3758
          %3791 = vst [vmem:[%s463 + $0xb8] sm:$0xff] %v3759
          %3792 = vst [vmem:[%s463 + $0xc0] sm:$0xff] %v3760
          %3793 = vst [vmem:[%s463 + $0xc8] sm:$0xff] %v3761
          %3794 = vst [vmem:[%s463 + $0xd0] sm:$0xff] %v3762
          %3795 = vst [vmem:[%s463 + $0xd8] sm:$0xff] %v3763
          %3796 = vst [vmem:[%s463 + $0xe0] sm:$0xff] %v3764
          %3797 = vst [vmem:[%s463 + $0xe8] sm:$0xff] %v3765
          %3798 = vst [vmem:[%s463 + $0xf0] sm:$0xff] %v3766
          %3799 = vst [vmem:[%s463 + $0xf8] sm:$0xff] %v3767
        $region83: #{glu_forward.1} parent=70 // pred_fallthru
          _
        %s3800 = smul.u32 32, %s23
        %p3801 = scmp.lt.s32.totalorder %s3800, 63
        %s3802 = scalar_select %p3801, %s3800, 63
        %s3803 = smul.addr %s3802, 8
        %s3804 = scalar_lea.vmem %s8, %s3803
        // Predicated region
        $region84: #{glu_forward.1} parent=70 // pred_check
          %p3805 = pneg %p237
        $region85: #{glu_forward.1} parent=70 // pred_check_branch
          %3807 = sbr.rel (%p3805) target = $region87
        $region86: #{glu_forward.1} parent=70 // pred_region
          %s3808 = smul.u32 32, %s23
        $region87: #{glu_forward.1} parent=70 // pred_fallthru
          _
      $region71: #{glu_forward.1} parent=5 // pred_fallthru
        _
      %p3809 = scmp.le.s32.totalorder 2, %s14
      // Predicated region
      $region88: #{glu_forward.1} parent=5 // pred_check
        %p3810 = pneg %p3809
      $region89: #{glu_forward.1} parent=5 // pred_check_branch
        %3812 = sbr.rel (%p3810) target = $region91
      $region90: #{glu_forward.1} parent=5 // pred_region
        %s3813 = ssub.s32 %s14, 2
        // Predicated region
        $region92: #{glu_forward.1} parent=90 // pred_check
          %p3814 = pneg %p243
        $region93: #{glu_forward.1} parent=90 // pred_check_branch
          %3816 = sbr.rel (%p3814) target = $region95
        $region94: #{glu_forward.1} parent=90 // pred_region
          %s3817 = smul.u32 32, %s25
          %p3818 = scmp.lt.s32.totalorder %s3817, 63
          %s3819 = scalar_select %p3818, %s3817, 63
          %s3820 = smul.addr %s3819, 8
          %s3821 = scalar_lea.vmem %s8, %s3820
        $region95: #{glu_forward.1} parent=90 // pred_fallthru
          _
      $region91: #{glu_forward.1} parent=5 // pred_fallthru
        _
    $region6: #{glu_forward.1} parent=1 // loop_footer
      %s18 = sadd.s32 1, %s14
    $region7: #{glu_forward.1} parent=1 // loop_footer_branch
      %13 = sbr.rel target = $region3
    $region8: #{glu_forward.1} parent=1 // loop_exit
      _

</llo_original>
